<compile_context>
chip_gen: v6e
topology: v6e:2x2x1
jax: 0.10.0
libtpu: 0.0.40
codegen_flags: <defaults>
</compile_context>

<pallas_src>
import functools

import jax
import jax.numpy as jnp
from jax.experimental import pallas as pl
from jax.experimental.pallas import tpu as pltpu


# ---------------------------------------------------------------------------
# Fully fused GCN -> LSTM -> FC head kernel (single grid step)
# ---------------------------------------------------------------------------

def _fused_forward_kernel(a_ref, x_ref, *rest,
                          n_gcn, n_lstm, hdim, n_nodes, t_dim, s_dim):
    # rest = (gcn_w0, gcn_b0, ..., lstm_w0, lstm_b0, ..., fcw, fcb, out_ref)
    idx = 0
    gcn_wb = rest[idx:idx + 2 * n_gcn]; idx += 2 * n_gcn
    lstm_wb = rest[idx:idx + 2 * n_lstm]; idx += 2 * n_lstm
    fcw_ref = rest[idx]          # (2*hdim, lstm_out)
    fcb_ref = rest[idx + 1]      # (1, lstm_out)
    out_ref = rest[idx + 2]      # (N, lstm_out)

    bt = t_dim * s_dim           # batched (timestep, sequence) pairs
    b_rows = s_dim * n_nodes     # rows fed to the shared LSTM per timestep (2N)

    # ---------------- GCN stack (both sequences, all timesteps at once) ----
    a = a_ref[...].reshape(bt, n_nodes, n_nodes)           # (T*S, N, N)
    x = x_ref[...]                                          # (T, S, N, F_in)
    f_in = x.shape[-1]
    h = x.reshape(bt * n_nodes, f_in)                       # (T*S*N, F_in): M=256

    for li in range(n_gcn):
        w = gcn_wb[2 * li][...]                             # (F_in_li, F_out_li)
        b = gcn_wb[2 * li + 1][...]                         # (1, F_out_li)
        d_out = w.shape[1]
        # Feature transform once over all rows (M-batched matmul).
        support = jnp.dot(h, w, preferred_element_type=jnp.float32)
        support = support.reshape(bt, n_nodes, d_out)
        # Neighborhood aggregation: batched A @ support over the T*S axis.
        agg = jnp.einsum('bij,bjk->bik', a, support,
                         preferred_element_type=jnp.float32)
        h = agg.reshape(bt * n_nodes, d_out) + b
        if li < n_gcn - 1:                                  # ReLU on all but last layer
            h = jnp.maximum(h, 0.0)

    d_gcn = h.shape[-1]
    seq = h.reshape(t_dim, b_rows, d_gcn)                   # (T, 2N, gcn_out)

    # ---------------- LSTM stack (time loop unrolled in-body) --------------
    hs = [jnp.zeros((b_rows, hdim), jnp.float32) for _ in range(n_lstm)]
    cs = [jnp.zeros((b_rows, hdim), jnp.float32) for _ in range(n_lstm)]
    for t in range(t_dim):                                  # T is small & static
        inp = seq[t]                                        # (2N, in_dim)
        for li in range(n_lstm):
            w = lstm_wb[2 * li][...]                        # (in_dim + hdim, 4*hdim)
            b = lstm_wb[2 * li + 1][...]                    # (1, 4*hdim) = b_ih + b_hh
            in_dim = w.shape[0] - hdim
            gates = (jnp.dot(inp, w[:in_dim, :],
                             preferred_element_type=jnp.float32)
                     + jnp.dot(hs[li], w[in_dim:, :],
                               preferred_element_type=jnp.float32)
                     + b)                                   # (2N, 4*hdim)
            # Two full-width transcendental passes + lane-mask select instead of
            # four lane-sparse activations (PyTorch gate order: i, f, g, o).
            lane = jax.lax.broadcasted_iota(jnp.int32, gates.shape, 1)
            is_tanh = (lane >= 2 * hdim) & (lane < 3 * hdim)
            act = jnp.where(is_tanh, jnp.tanh(gates), jax.nn.sigmoid(gates))
            i_g = act[:, 0 * hdim:1 * hdim]
            f_g = act[:, 1 * hdim:2 * hdim]
            g_g = act[:, 2 * hdim:3 * hdim]
            o_g = act[:, 3 * hdim:4 * hdim]
            c_new = f_g * cs[li] + i_g * g_g
            h_new = o_g * jnp.tanh(c_new)
            cs[li] = c_new
            hs[li] = h_new
            inp = h_new                                     # feeds next stacked layer

    # ---------------- FC head: concat([h1, h2], -1) @ fc_w.T + fc_b --------
    h_top = hs[-1]                                          # (2N, hdim)
    h1 = h_top[:n_nodes, :]
    h2 = h_top[n_nodes:, :]
    fcw = fcw_ref[...]                                      # (2*hdim, lstm_out)
    out_ref[...] = (jnp.dot(h1, fcw[:hdim, :], preferred_element_type=jnp.float32)
                    + jnp.dot(h2, fcw[hdim:, :], preferred_element_type=jnp.float32)
                    + fcb_ref[...])


def _full_spec(arr):
    nd = arr.ndim
    return pl.BlockSpec(arr.shape, lambda i, _nd=nd: (0,) * _nd)


def fused_forward(params, a, x):
    """a: (T, 2, N, N), x: (T, 2, N, F_in) -> out: (N, lstm_out)."""
    t_dim, s_dim, n_nodes, _ = x.shape
    gcn_params = params["gcn"]
    lstm_params = params["lstm"]
    fcw_t = params["fc_w_t"]                 # (2*hdim, lstm_out), prefused at init
    fcb = params["fc_b2"]                    # (1, lstm_out)
    n_gcn = len(gcn_params)
    n_lstm = len(lstm_params)
    hdim = lstm_params[0][1].shape[1] // 4
    out_dim = fcw_t.shape[1]

    operands = [a, x]
    for (w, b) in gcn_params:
        operands += [w, b]
    for (w, b) in lstm_params:
        operands += [w, b]
    operands += [fcw_t, fcb]
    in_specs = [_full_spec(op) for op in operands]

    kernel = functools.partial(_fused_forward_kernel, n_gcn=n_gcn, n_lstm=n_lstm,
                               hdim=hdim, n_nodes=n_nodes,
                               t_dim=t_dim, s_dim=s_dim)
    return pl.pallas_call(
        kernel,
        out_shape=jax.ShapeDtypeStruct((n_nodes, out_dim), jnp.float32),
        grid=(1,),
        in_specs=in_specs,
        out_specs=pl.BlockSpec((n_nodes, out_dim), lambda i: (0, 0)),
        compiler_params=pltpu.CompilerParams(
            dimension_semantics=("arbitrary",)),
    )(*operands)


# ---------------------------------------------------------------------------
# Parameters (fused LSTM / FC layouts precomputed once, outside the jit)
# ---------------------------------------------------------------------------

def init_params(key, gcn_in, gcn_hid, gcn_out, gcn_layers,
                lstm_hid, lstm_out, lstm_layers):
    keys = iter(jax.random.split(key, 64))
    params = {}

    dims = [gcn_in] + [gcn_hid] * (gcn_layers - 1) + [gcn_out]
    params["gcn"] = []
    for li in range(gcn_layers):
        fin, fout = dims[li], dims[li + 1]
        w = jax.random.normal(next(keys), (fin, fout), jnp.float32) * 0.1
        b = jnp.zeros((1, fout), jnp.float32)
        params["gcn"].append((w, b))

    params["lstm"] = []
    for li in range(lstm_layers):
        in_dim = gcn_out if li == 0 else lstm_hid
        wih = jax.random.normal(next(keys), (4 * lstm_hid, in_dim), jnp.float32) * 0.1
        whh = jax.random.normal(next(keys), (4 * lstm_hid, lstm_hid), jnp.float32) * 0.1
        bih = jnp.zeros((4 * lstm_hid,), jnp.float32)
        bhh = jnp.zeros((4 * lstm_hid,), jnp.float32)
        # Prefuse: single resident weight [W_ih^T; W_hh^T] and combined bias.
        wcat = jnp.concatenate([wih.T, whh.T], axis=0)      # (in_dim + hdim, 4*hdim)
        bias = (bih + bhh).reshape(1, -1)                   # (1, 4*hdim)
        params["lstm"].append((wcat, bias))

    fc_w = jax.random.normal(next(keys), (lstm_out, 2 * lstm_hid), jnp.float32) * 0.1
    params["fc_w_t"] = fc_w.T                               # (2*hdim, lstm_out)
    params["fc_b2"] = jnp.zeros((1, lstm_out), jnp.float32)
    return params


# ---------------------------------------------------------------------------
# Model wrapper
# ---------------------------------------------------------------------------

@functools.partial(jax.jit, static_argnums=(5,))
def lstm_baseline_forward(params, g1, features1, g2, features2, time_split):
    # TODO(synk): GraphModel / LSTMModel were not provided; standard GCN
    # (A @ X @ W + b, ReLU on all but last layer) and a shared LSTM over both
    # sequences with concat([h1, h2]) -> Linear head are used.
    assert g1.shape[0] == time_split
    a = jnp.stack([g1, g2], axis=1)                         # (T, 2, N, N)
    x = jnp.stack([features1, features2], axis=1)           # (T, 2, N, F_in)
    out = fused_forward(params, a, x)                       # (N, lstm_out)
    # Dropout in eval mode is the identity (inference forward pass).
    return out


# ---------------------------------------------------------------------------
# Main
# ---------------------------------------------------------------------------

if __name__ == "__main__":
    T = 8           # time_split
    N = 16          # number of graph nodes (LSTM "batch")
    GCN_IN = 4
    GCN_HID = 32
    GCN_OUT = 16
    GCN_LAYERS = 2
    LSTM_HID = 32
    LSTM_OUT = 8
    LSTM_LAYERS = 1

    key = jax.random.PRNGKey(0)
    k_p, k_g1, k_f1, k_g2, k_f2 = jax.random.split(key, 5)

    params = init_params(k_p, GCN_IN, GCN_HID, GCN_OUT, GCN_LAYERS,
                         LSTM_HID, LSTM_OUT, LSTM_LAYERS)

    def make_adj(k):
        # Symmetric normalized adjacency with self-loops, per timestep.
        adj = (jax.random.uniform(k, (T, N, N)) > 0.7).astype(jnp.float32)
        adj = jnp.maximum(adj, jnp.transpose(adj, (0, 2, 1)))
        adj = adj + jnp.eye(N, dtype=jnp.float32)[None]
        deg = jnp.sum(adj, axis=-1, keepdims=True)
        return adj / deg

    g1 = make_adj(k_g1)
    features1 = jax.random.normal(k_f1, (T, N, GCN_IN), jnp.float32)
    g2 = make_adj(k_g2)
    features2 = jax.random.normal(k_f2, (T, N, GCN_IN), jnp.float32)

    out = lstm_baseline_forward(params, g1, features1, g2, features2, T)
    jax.block_until_ready(out)
    assert out.shape == (N, LSTM_OUT), out.shape
    assert jnp.all(jnp.isfinite(out))
    print("KERNEL_OK")
</pallas_src>

<mosaic_0001>
module attributes {stable_mosaic.version = 11 : i64} {
  func.func @_fused_forward_kernel(%arg0: i32, %arg1: memref<8x2x16x16xf32, #tpu.memory_space<vmem>>, %arg2: memref<8x2x16x4xf32, #tpu.memory_space<vmem>>, %arg3: memref<4x32xf32, #tpu.memory_space<vmem>>, %arg4: memref<1x32xf32, #tpu.memory_space<vmem>>, %arg5: memref<32x16xf32, #tpu.memory_space<vmem>>, %arg6: memref<1x16xf32, #tpu.memory_space<vmem>>, %arg7: memref<48x128xf32, #tpu.memory_space<vmem>>, %arg8: memref<1x128xf32, #tpu.memory_space<vmem>>, %arg9: memref<64x8xf32, #tpu.memory_space<vmem>>, %arg10: memref<1x8xf32, #tpu.memory_space<vmem>>, %arg11: memref<16x8xf32, #tpu.memory_space<vmem>>) attributes {dimension_semantics = [#tpu.dimension_semantics<arbitrary>], iteration_bounds = array<i64: 1>, scalar_prefetch = 0 : i64, scratch_operands = 0 : i64, tpu.core_type = #tpu.core_type<tc>, window_params = [{pipeline_mode = #tpu.pipeline_mode<synchronous>, transform_indices = @transform_0, window_bounds = array<i64: 8, 2, 16, 16>}, {pipeline_mode = #tpu.pipeline_mode<synchronous>, transform_indices = @transform_1, window_bounds = array<i64: 8, 2, 16, 4>}, {pipeline_mode = #tpu.pipeline_mode<synchronous>, transform_indices = @transform_2, window_bounds = array<i64: 4, 32>}, {pipeline_mode = #tpu.pipeline_mode<synchronous>, transform_indices = @transform_3, window_bounds = array<i64: 1, 32>}, {pipeline_mode = #tpu.pipeline_mode<synchronous>, transform_indices = @transform_4, window_bounds = array<i64: 32, 16>}, {pipeline_mode = #tpu.pipeline_mode<synchronous>, transform_indices = @transform_5, window_bounds = array<i64: 1, 16>}, {pipeline_mode = #tpu.pipeline_mode<synchronous>, transform_indices = @transform_6, window_bounds = array<i64: 48, 128>}, {pipeline_mode = #tpu.pipeline_mode<synchronous>, transform_indices = @transform_7, window_bounds = array<i64: 1, 128>}, {pipeline_mode = #tpu.pipeline_mode<synchronous>, transform_indices = @transform_8, window_bounds = array<i64: 64, 8>}, {pipeline_mode = #tpu.pipeline_mode<synchronous>, transform_indices = @transform_9, window_bounds = array<i64: 1, 8>}, {pipeline_mode = #tpu.pipeline_mode<synchronous>, transform_indices = @transform_10, window_bounds = array<i64: 16, 8>}]} {
    %c0 = arith.constant 0 : index
    %c0_0 = arith.constant 0 : index
    %c0_1 = arith.constant 0 : index
    %c0_2 = arith.constant 0 : index
    %0 = vector.load %arg1[%c0, %c0_0, %c0_1, %c0_2] : memref<8x2x16x16xf32, #tpu.memory_space<vmem>>, vector<8x2x16x16xf32>
    %1 = vector.shape_cast %0 : vector<8x2x16x16xf32> to vector<16x16x16xf32>
    %c0_3 = arith.constant 0 : index
    %c0_4 = arith.constant 0 : index
    %c0_5 = arith.constant 0 : index
    %c0_6 = arith.constant 0 : index
    %2 = vector.load %arg2[%c0_3, %c0_4, %c0_5, %c0_6] : memref<8x2x16x4xf32, #tpu.memory_space<vmem>>, vector<8x2x16x4xf32>
    %3 = vector.shape_cast %2 : vector<8x2x16x4xf32> to vector<256x4xf32>
    %c0_7 = arith.constant 0 : index
    %c0_8 = arith.constant 0 : index
    %4 = vector.load %arg3[%c0_7, %c0_8] : memref<4x32xf32, #tpu.memory_space<vmem>>, vector<4x32xf32>
    %c0_9 = arith.constant 0 : index
    %c0_10 = arith.constant 0 : index
    %5 = vector.load %arg4[%c0_9, %c0_10] : memref<1x32xf32, #tpu.memory_space<vmem>>, vector<1x32xf32>
    %cst = arith.constant dense<0.000000e+00> : vector<256x32xf32>
    %6 = tpu.matmul %3, %4, %cst {dimension_numbers = #tpu.dot_dimension_numbers<[1], [0], [0], [1], [0, 0, 1, 1], [], []>} : vector<256x4xf32>, vector<4x32xf32>, vector<256x32xf32> -> vector<256x32xf32>
    %7 = vector.shape_cast %6 : vector<256x32xf32> to vector<16x16x32xf32>
    "tpu.trace_start"() <{level = 10 : i32, message = "bij,bjk->bik"}> : () -> ()
    %cst_11 = arith.constant dense<0.000000e+00> : vector<16x16x32xf32>
    %8 = tpu.matmul %1, %7, %cst_11 {dimension_numbers = #tpu.dot_dimension_numbers<[2], [1], [1], [2], [0, 0, 0, 1, 1, 2], [0], [0]>} : vector<16x16x16xf32>, vector<16x16x32xf32>, vector<16x16x32xf32> -> vector<16x16x32xf32>
    "tpu.trace_stop"() : () -> ()
    %9 = vector.shape_cast %8 : vector<16x16x32xf32> to vector<256x32xf32>
    %10 = vector.broadcast %5 : vector<1x32xf32> to vector<256x32xf32>
    %11 = arith.addf %9, %10 : vector<256x32xf32>
    %cst_12 = arith.constant 0.000000e+00 : f32
    %12 = vector.broadcast %cst_12 : f32 to vector<256x32xf32>
    %13 = arith.maximumf %11, %12 : vector<256x32xf32>
    %c0_13 = arith.constant 0 : index
    %c0_14 = arith.constant 0 : index
    %14 = vector.load %arg5[%c0_13, %c0_14] : memref<32x16xf32, #tpu.memory_space<vmem>>, vector<32x16xf32>
    %c0_15 = arith.constant 0 : index
    %c0_16 = arith.constant 0 : index
    %15 = vector.load %arg6[%c0_15, %c0_16] : memref<1x16xf32, #tpu.memory_space<vmem>>, vector<1x16xf32>
    %cst_17 = arith.constant dense<0.000000e+00> : vector<256x16xf32>
    %16 = tpu.matmul %13, %14, %cst_17 {dimension_numbers = #tpu.dot_dimension_numbers<[1], [0], [0], [1], [0, 0, 1, 1], [], []>} : vector<256x32xf32>, vector<32x16xf32>, vector<256x16xf32> -> vector<256x16xf32>
    %17 = vector.shape_cast %16 : vector<256x16xf32> to vector<16x16x16xf32>
    "tpu.trace_start"() <{level = 10 : i32, message = "bij,bjk->bik"}> : () -> ()
    %cst_18 = arith.constant dense<0.000000e+00> : vector<16x16x16xf32>
    %18 = tpu.matmul %1, %17, %cst_18 {dimension_numbers = #tpu.dot_dimension_numbers<[2], [1], [1], [2], [0, 0, 0, 1, 1, 2], [0], [0]>} : vector<16x16x16xf32>, vector<16x16x16xf32>, vector<16x16x16xf32> -> vector<16x16x16xf32>
    "tpu.trace_stop"() : () -> ()
    %19 = vector.shape_cast %18 : vector<16x16x16xf32> to vector<256x16xf32>
    %20 = vector.broadcast %15 : vector<1x16xf32> to vector<256x16xf32>
    %21 = arith.addf %19, %20 : vector<256x16xf32>
    %22 = vector.shape_cast %21 : vector<256x16xf32> to vector<8x32x16xf32>
    %cst_19 = arith.constant 0.000000e+00 : f32
    %23 = vector.broadcast %cst_19 : f32 to vector<32x32xf32>
    %cst_20 = arith.constant 0.000000e+00 : f32
    %24 = vector.broadcast %cst_20 : f32 to vector<32x32xf32>
    %25 = vector.extract_strided_slice %22 {offsets = [0, 0, 0], sizes = [1, 32, 16], strides = [1, 1, 1]} : vector<8x32x16xf32> to vector<1x32x16xf32>
    %26 = vector.shape_cast %25 : vector<1x32x16xf32> to vector<32x16xf32>
    %c0_21 = arith.constant 0 : index
    %c0_22 = arith.constant 0 : index
    %27 = vector.load %arg7[%c0_21, %c0_22] : memref<48x128xf32, #tpu.memory_space<vmem>>, vector<48x128xf32>
    %c0_23 = arith.constant 0 : index
    %c0_24 = arith.constant 0 : index
    %28 = vector.load %arg8[%c0_23, %c0_24] : memref<1x128xf32, #tpu.memory_space<vmem>>, vector<1x128xf32>
    %29 = vector.extract_strided_slice %27 {offsets = [0, 0], sizes = [16, 128], strides = [1, 1]} : vector<48x128xf32> to vector<16x128xf32>
    %cst_25 = arith.constant dense<0.000000e+00> : vector<32x128xf32>
    %30 = tpu.matmul %26, %29, %cst_25 {dimension_numbers = #tpu.dot_dimension_numbers<[1], [0], [0], [1], [0, 0, 1, 1], [], []>} : vector<32x16xf32>, vector<16x128xf32>, vector<32x128xf32> -> vector<32x128xf32>
    %31 = vector.extract_strided_slice %27 {offsets = [16, 0], sizes = [32, 128], strides = [1, 1]} : vector<48x128xf32> to vector<32x128xf32>
    %cst_26 = arith.constant dense<0.000000e+00> : vector<32x128xf32>
    %32 = tpu.matmul %23, %31, %cst_26 {dimension_numbers = #tpu.dot_dimension_numbers<[1], [0], [0], [1], [0, 0, 1, 1], [], []>} : vector<32x32xf32>, vector<32x128xf32>, vector<32x128xf32> -> vector<32x128xf32>
    %33 = arith.addf %30, %32 : vector<32x128xf32>
    %34 = vector.broadcast %28 : vector<1x128xf32> to vector<32x128xf32>
    %35 = arith.addf %33, %34 : vector<32x128xf32>
    %36 = tpu.iota {dimensions = array<i32: 1>} : vector<32x128xi32>
    %c64_i32 = arith.constant 64 : i32
    %37 = vector.broadcast %c64_i32 : i32 to vector<32x128xi32>
    %38 = arith.cmpi sge, %36, %37 : vector<32x128xi32>
    %c96_i32 = arith.constant 96 : i32
    %39 = vector.broadcast %c96_i32 : i32 to vector<32x128xi32>
    %40 = arith.cmpi slt, %36, %39 : vector<32x128xi32>
    %41 = arith.andi %38, %40 : vector<32x128xi1>
    %42 = math.tanh %35 : vector<32x128xf32>
    %43 = arith.negf %35 : vector<32x128xf32>
    %44 = math.exp %43 : vector<32x128xf32>
    %cst_27 = arith.constant 1.000000e+00 : f32
    %45 = vector.broadcast %cst_27 : f32 to vector<32x128xf32>
    %46 = arith.addf %45, %44 : vector<32x128xf32>
    %47 = arith.divf %45, %46 : vector<32x128xf32>
    %48 = arith.select %41, %42, %47 : vector<32x128xi1>, vector<32x128xf32>
    %49 = vector.extract_strided_slice %48 {offsets = [0, 0], sizes = [32, 32], strides = [1, 1]} : vector<32x128xf32> to vector<32x32xf32>
    %50 = vector.extract_strided_slice %48 {offsets = [0, 32], sizes = [32, 32], strides = [1, 1]} : vector<32x128xf32> to vector<32x32xf32>
    %51 = vector.extract_strided_slice %48 {offsets = [0, 64], sizes = [32, 32], strides = [1, 1]} : vector<32x128xf32> to vector<32x32xf32>
    %52 = vector.extract_strided_slice %48 {offsets = [0, 96], sizes = [32, 32], strides = [1, 1]} : vector<32x128xf32> to vector<32x32xf32>
    %53 = arith.mulf %50, %24 : vector<32x32xf32>
    %54 = arith.mulf %49, %51 : vector<32x32xf32>
    %55 = arith.addf %53, %54 : vector<32x32xf32>
    %56 = math.tanh %55 : vector<32x32xf32>
    %57 = arith.mulf %52, %56 : vector<32x32xf32>
    %58 = vector.extract_strided_slice %22 {offsets = [1, 0, 0], sizes = [1, 32, 16], strides = [1, 1, 1]} : vector<8x32x16xf32> to vector<1x32x16xf32>
    %59 = vector.shape_cast %58 : vector<1x32x16xf32> to vector<32x16xf32>
    %c0_28 = arith.constant 0 : index
    %c0_29 = arith.constant 0 : index
    %60 = vector.load %arg7[%c0_28, %c0_29] : memref<48x128xf32, #tpu.memory_space<vmem>>, vector<48x128xf32>
    %c0_30 = arith.constant 0 : index
    %c0_31 = arith.constant 0 : index
    %61 = vector.load %arg8[%c0_30, %c0_31] : memref<1x128xf32, #tpu.memory_space<vmem>>, vector<1x128xf32>
    %62 = vector.extract_strided_slice %60 {offsets = [0, 0], sizes = [16, 128], strides = [1, 1]} : vector<48x128xf32> to vector<16x128xf32>
    %cst_32 = arith.constant dense<0.000000e+00> : vector<32x128xf32>
    %63 = tpu.matmul %59, %62, %cst_32 {dimension_numbers = #tpu.dot_dimension_numbers<[1], [0], [0], [1], [0, 0, 1, 1], [], []>} : vector<32x16xf32>, vector<16x128xf32>, vector<32x128xf32> -> vector<32x128xf32>
    %64 = vector.extract_strided_slice %60 {offsets = [16, 0], sizes = [32, 128], strides = [1, 1]} : vector<48x128xf32> to vector<32x128xf32>
    %cst_33 = arith.constant dense<0.000000e+00> : vector<32x128xf32>
    %65 = tpu.matmul %57, %64, %cst_33 {dimension_numbers = #tpu.dot_dimension_numbers<[1], [0], [0], [1], [0, 0, 1, 1], [], []>} : vector<32x32xf32>, vector<32x128xf32>, vector<32x128xf32> -> vector<32x128xf32>
    %66 = arith.addf %63, %65 : vector<32x128xf32>
    %67 = vector.broadcast %61 : vector<1x128xf32> to vector<32x128xf32>
    %68 = arith.addf %66, %67 : vector<32x128xf32>
    %69 = tpu.iota {dimensions = array<i32: 1>} : vector<32x128xi32>
    %c64_i32_34 = arith.constant 64 : i32
    %70 = vector.broadcast %c64_i32_34 : i32 to vector<32x128xi32>
    %71 = arith.cmpi sge, %69, %70 : vector<32x128xi32>
    %c96_i32_35 = arith.constant 96 : i32
    %72 = vector.broadcast %c96_i32_35 : i32 to vector<32x128xi32>
    %73 = arith.cmpi slt, %69, %72 : vector<32x128xi32>
    %74 = arith.andi %71, %73 : vector<32x128xi1>
    %75 = math.tanh %68 : vector<32x128xf32>
    %76 = arith.negf %68 : vector<32x128xf32>
    %77 = math.exp %76 : vector<32x128xf32>
    %cst_36 = arith.constant 1.000000e+00 : f32
    %78 = vector.broadcast %cst_36 : f32 to vector<32x128xf32>
    %79 = arith.addf %78, %77 : vector<32x128xf32>
    %80 = arith.divf %78, %79 : vector<32x128xf32>
    %81 = arith.select %74, %75, %80 : vector<32x128xi1>, vector<32x128xf32>
    %82 = vector.extract_strided_slice %81 {offsets = [0, 0], sizes = [32, 32], strides = [1, 1]} : vector<32x128xf32> to vector<32x32xf32>
    %83 = vector.extract_strided_slice %81 {offsets = [0, 32], sizes = [32, 32], strides = [1, 1]} : vector<32x128xf32> to vector<32x32xf32>
    %84 = vector.extract_strided_slice %81 {offsets = [0, 64], sizes = [32, 32], strides = [1, 1]} : vector<32x128xf32> to vector<32x32xf32>
    %85 = vector.extract_strided_slice %81 {offsets = [0, 96], sizes = [32, 32], strides = [1, 1]} : vector<32x128xf32> to vector<32x32xf32>
    %86 = arith.mulf %83, %55 : vector<32x32xf32>
    %87 = arith.mulf %82, %84 : vector<32x32xf32>
    %88 = arith.addf %86, %87 : vector<32x32xf32>
    %89 = math.tanh %88 : vector<32x32xf32>
    %90 = arith.mulf %85, %89 : vector<32x32xf32>
    %91 = vector.extract_strided_slice %22 {offsets = [2, 0, 0], sizes = [1, 32, 16], strides = [1, 1, 1]} : vector<8x32x16xf32> to vector<1x32x16xf32>
    %92 = vector.shape_cast %91 : vector<1x32x16xf32> to vector<32x16xf32>
    %c0_37 = arith.constant 0 : index
    %c0_38 = arith.constant 0 : index
    %93 = vector.load %arg7[%c0_37, %c0_38] : memref<48x128xf32, #tpu.memory_space<vmem>>, vector<48x128xf32>
    %c0_39 = arith.constant 0 : index
    %c0_40 = arith.constant 0 : index
    %94 = vector.load %arg8[%c0_39, %c0_40] : memref<1x128xf32, #tpu.memory_space<vmem>>, vector<1x128xf32>
    %95 = vector.extract_strided_slice %93 {offsets = [0, 0], sizes = [16, 128], strides = [1, 1]} : vector<48x128xf32> to vector<16x128xf32>
    %cst_41 = arith.constant dense<0.000000e+00> : vector<32x128xf32>
    %96 = tpu.matmul %92, %95, %cst_41 {dimension_numbers = #tpu.dot_dimension_numbers<[1], [0], [0], [1], [0, 0, 1, 1], [], []>} : vector<32x16xf32>, vector<16x128xf32>, vector<32x128xf32> -> vector<32x128xf32>
    %97 = vector.extract_strided_slice %93 {offsets = [16, 0], sizes = [32, 128], strides = [1, 1]} : vector<48x128xf32> to vector<32x128xf32>
    %cst_42 = arith.constant dense<0.000000e+00> : vector<32x128xf32>
    %98 = tpu.matmul %90, %97, %cst_42 {dimension_numbers = #tpu.dot_dimension_numbers<[1], [0], [0], [1], [0, 0, 1, 1], [], []>} : vector<32x32xf32>, vector<32x128xf32>, vector<32x128xf32> -> vector<32x128xf32>
    %99 = arith.addf %96, %98 : vector<32x128xf32>
    %100 = vector.broadcast %94 : vector<1x128xf32> to vector<32x128xf32>
    %101 = arith.addf %99, %100 : vector<32x128xf32>
    %102 = tpu.iota {dimensions = array<i32: 1>} : vector<32x128xi32>
    %c64_i32_43 = arith.constant 64 : i32
    %103 = vector.broadcast %c64_i32_43 : i32 to vector<32x128xi32>
    %104 = arith.cmpi sge, %102, %103 : vector<32x128xi32>
    %c96_i32_44 = arith.constant 96 : i32
    %105 = vector.broadcast %c96_i32_44 : i32 to vector<32x128xi32>
    %106 = arith.cmpi slt, %102, %105 : vector<32x128xi32>
    %107 = arith.andi %104, %106 : vector<32x128xi1>
    %108 = math.tanh %101 : vector<32x128xf32>
    %109 = arith.negf %101 : vector<32x128xf32>
    %110 = math.exp %109 : vector<32x128xf32>
    %cst_45 = arith.constant 1.000000e+00 : f32
    %111 = vector.broadcast %cst_45 : f32 to vector<32x128xf32>
    %112 = arith.addf %111, %110 : vector<32x128xf32>
    %113 = arith.divf %111, %112 : vector<32x128xf32>
    %114 = arith.select %107, %108, %113 : vector<32x128xi1>, vector<32x128xf32>
    %115 = vector.extract_strided_slice %114 {offsets = [0, 0], sizes = [32, 32], strides = [1, 1]} : vector<32x128xf32> to vector<32x32xf32>
    %116 = vector.extract_strided_slice %114 {offsets = [0, 32], sizes = [32, 32], strides = [1, 1]} : vector<32x128xf32> to vector<32x32xf32>
    %117 = vector.extract_strided_slice %114 {offsets = [0, 64], sizes = [32, 32], strides = [1, 1]} : vector<32x128xf32> to vector<32x32xf32>
    %118 = vector.extract_strided_slice %114 {offsets = [0, 96], sizes = [32, 32], strides = [1, 1]} : vector<32x128xf32> to vector<32x32xf32>
    %119 = arith.mulf %116, %88 : vector<32x32xf32>
    %120 = arith.mulf %115, %117 : vector<32x32xf32>
    %121 = arith.addf %119, %120 : vector<32x32xf32>
    %122 = math.tanh %121 : vector<32x32xf32>
    %123 = arith.mulf %118, %122 : vector<32x32xf32>
    %124 = vector.extract_strided_slice %22 {offsets = [3, 0, 0], sizes = [1, 32, 16], strides = [1, 1, 1]} : vector<8x32x16xf32> to vector<1x32x16xf32>
    %125 = vector.shape_cast %124 : vector<1x32x16xf32> to vector<32x16xf32>
    %c0_46 = arith.constant 0 : index
    %c0_47 = arith.constant 0 : index
    %126 = vector.load %arg7[%c0_46, %c0_47] : memref<48x128xf32, #tpu.memory_space<vmem>>, vector<48x128xf32>
    %c0_48 = arith.constant 0 : index
    %c0_49 = arith.constant 0 : index
    %127 = vector.load %arg8[%c0_48, %c0_49] : memref<1x128xf32, #tpu.memory_space<vmem>>, vector<1x128xf32>
    %128 = vector.extract_strided_slice %126 {offsets = [0, 0], sizes = [16, 128], strides = [1, 1]} : vector<48x128xf32> to vector<16x128xf32>
    %cst_50 = arith.constant dense<0.000000e+00> : vector<32x128xf32>
    %129 = tpu.matmul %125, %128, %cst_50 {dimension_numbers = #tpu.dot_dimension_numbers<[1], [0], [0], [1], [0, 0, 1, 1], [], []>} : vector<32x16xf32>, vector<16x128xf32>, vector<32x128xf32> -> vector<32x128xf32>
    %130 = vector.extract_strided_slice %126 {offsets = [16, 0], sizes = [32, 128], strides = [1, 1]} : vector<48x128xf32> to vector<32x128xf32>
    %cst_51 = arith.constant dense<0.000000e+00> : vector<32x128xf32>
    %131 = tpu.matmul %123, %130, %cst_51 {dimension_numbers = #tpu.dot_dimension_numbers<[1], [0], [0], [1], [0, 0, 1, 1], [], []>} : vector<32x32xf32>, vector<32x128xf32>, vector<32x128xf32> -> vector<32x128xf32>
    %132 = arith.addf %129, %131 : vector<32x128xf32>
    %133 = vector.broadcast %127 : vector<1x128xf32> to vector<32x128xf32>
    %134 = arith.addf %132, %133 : vector<32x128xf32>
    %135 = tpu.iota {dimensions = array<i32: 1>} : vector<32x128xi32>
    %c64_i32_52 = arith.constant 64 : i32
    %136 = vector.broadcast %c64_i32_52 : i32 to vector<32x128xi32>
    %137 = arith.cmpi sge, %135, %136 : vector<32x128xi32>
    %c96_i32_53 = arith.constant 96 : i32
    %138 = vector.broadcast %c96_i32_53 : i32 to vector<32x128xi32>
    %139 = arith.cmpi slt, %135, %138 : vector<32x128xi32>
    %140 = arith.andi %137, %139 : vector<32x128xi1>
    %141 = math.tanh %134 : vector<32x128xf32>
    %142 = arith.negf %134 : vector<32x128xf32>
    %143 = math.exp %142 : vector<32x128xf32>
    %cst_54 = arith.constant 1.000000e+00 : f32
    %144 = vector.broadcast %cst_54 : f32 to vector<32x128xf32>
    %145 = arith.addf %144, %143 : vector<32x128xf32>
    %146 = arith.divf %144, %145 : vector<32x128xf32>
    %147 = arith.select %140, %141, %146 : vector<32x128xi1>, vector<32x128xf32>
    %148 = vector.extract_strided_slice %147 {offsets = [0, 0], sizes = [32, 32], strides = [1, 1]} : vector<32x128xf32> to vector<32x32xf32>
    %149 = vector.extract_strided_slice %147 {offsets = [0, 32], sizes = [32, 32], strides = [1, 1]} : vector<32x128xf32> to vector<32x32xf32>
    %150 = vector.extract_strided_slice %147 {offsets = [0, 64], sizes = [32, 32], strides = [1, 1]} : vector<32x128xf32> to vector<32x32xf32>
    %151 = vector.extract_strided_slice %147 {offsets = [0, 96], sizes = [32, 32], strides = [1, 1]} : vector<32x128xf32> to vector<32x32xf32>
    %152 = arith.mulf %149, %121 : vector<32x32xf32>
    %153 = arith.mulf %148, %150 : vector<32x32xf32>
    %154 = arith.addf %152, %153 : vector<32x32xf32>
    %155 = math.tanh %154 : vector<32x32xf32>
    %156 = arith.mulf %151, %155 : vector<32x32xf32>
    %157 = vector.extract_strided_slice %22 {offsets = [4, 0, 0], sizes = [1, 32, 16], strides = [1, 1, 1]} : vector<8x32x16xf32> to vector<1x32x16xf32>
    %158 = vector.shape_cast %157 : vector<1x32x16xf32> to vector<32x16xf32>
    %c0_55 = arith.constant 0 : index
    %c0_56 = arith.constant 0 : index
    %159 = vector.load %arg7[%c0_55, %c0_56] : memref<48x128xf32, #tpu.memory_space<vmem>>, vector<48x128xf32>
    %c0_57 = arith.constant 0 : index
    %c0_58 = arith.constant 0 : index
    %160 = vector.load %arg8[%c0_57, %c0_58] : memref<1x128xf32, #tpu.memory_space<vmem>>, vector<1x128xf32>
    %161 = vector.extract_strided_slice %159 {offsets = [0, 0], sizes = [16, 128], strides = [1, 1]} : vector<48x128xf32> to vector<16x128xf32>
    %cst_59 = arith.constant dense<0.000000e+00> : vector<32x128xf32>
    %162 = tpu.matmul %158, %161, %cst_59 {dimension_numbers = #tpu.dot_dimension_numbers<[1], [0], [0], [1], [0, 0, 1, 1], [], []>} : vector<32x16xf32>, vector<16x128xf32>, vector<32x128xf32> -> vector<32x128xf32>
    %163 = vector.extract_strided_slice %159 {offsets = [16, 0], sizes = [32, 128], strides = [1, 1]} : vector<48x128xf32> to vector<32x128xf32>
    %cst_60 = arith.constant dense<0.000000e+00> : vector<32x128xf32>
    %164 = tpu.matmul %156, %163, %cst_60 {dimension_numbers = #tpu.dot_dimension_numbers<[1], [0], [0], [1], [0, 0, 1, 1], [], []>} : vector<32x32xf32>, vector<32x128xf32>, vector<32x128xf32> -> vector<32x128xf32>
    %165 = arith.addf %162, %164 : vector<32x128xf32>
    %166 = vector.broadcast %160 : vector<1x128xf32> to vector<32x128xf32>
    %167 = arith.addf %165, %166 : vector<32x128xf32>
    %168 = tpu.iota {dimensions = array<i32: 1>} : vector<32x128xi32>
    %c64_i32_61 = arith.constant 64 : i32
    %169 = vector.broadcast %c64_i32_61 : i32 to vector<32x128xi32>
    %170 = arith.cmpi sge, %168, %169 : vector<32x128xi32>
    %c96_i32_62 = arith.constant 96 : i32
    %171 = vector.broadcast %c96_i32_62 : i32 to vector<32x128xi32>
    %172 = arith.cmpi slt, %168, %171 : vector<32x128xi32>
    %173 = arith.andi %170, %172 : vector<32x128xi1>
    %174 = math.tanh %167 : vector<32x128xf32>
    %175 = arith.negf %167 : vector<32x128xf32>
    %176 = math.exp %175 : vector<32x128xf32>
    %cst_63 = arith.constant 1.000000e+00 : f32
    %177 = vector.broadcast %cst_63 : f32 to vector<32x128xf32>
    %178 = arith.addf %177, %176 : vector<32x128xf32>
    %179 = arith.divf %177, %178 : vector<32x128xf32>
    %180 = arith.select %173, %174, %179 : vector<32x128xi1>, vector<32x128xf32>
    %181 = vector.extract_strided_slice %180 {offsets = [0, 0], sizes = [32, 32], strides = [1, 1]} : vector<32x128xf32> to vector<32x32xf32>
    %182 = vector.extract_strided_slice %180 {offsets = [0, 32], sizes = [32, 32], strides = [1, 1]} : vector<32x128xf32> to vector<32x32xf32>
    %183 = vector.extract_strided_slice %180 {offsets = [0, 64], sizes = [32, 32], strides = [1, 1]} : vector<32x128xf32> to vector<32x32xf32>
    %184 = vector.extract_strided_slice %180 {offsets = [0, 96], sizes = [32, 32], strides = [1, 1]} : vector<32x128xf32> to vector<32x32xf32>
    %185 = arith.mulf %182, %154 : vector<32x32xf32>
    %186 = arith.mulf %181, %183 : vector<32x32xf32>
    %187 = arith.addf %185, %186 : vector<32x32xf32>
    %188 = math.tanh %187 : vector<32x32xf32>
    %189 = arith.mulf %184, %188 : vector<32x32xf32>
    %190 = vector.extract_strided_slice %22 {offsets = [5, 0, 0], sizes = [1, 32, 16], strides = [1, 1, 1]} : vector<8x32x16xf32> to vector<1x32x16xf32>
    %191 = vector.shape_cast %190 : vector<1x32x16xf32> to vector<32x16xf32>
    %c0_64 = arith.constant 0 : index
    %c0_65 = arith.constant 0 : index
    %192 = vector.load %arg7[%c0_64, %c0_65] : memref<48x128xf32, #tpu.memory_space<vmem>>, vector<48x128xf32>
    %c0_66 = arith.constant 0 : index
    %c0_67 = arith.constant 0 : index
    %193 = vector.load %arg8[%c0_66, %c0_67] : memref<1x128xf32, #tpu.memory_space<vmem>>, vector<1x128xf32>
    %194 = vector.extract_strided_slice %192 {offsets = [0, 0], sizes = [16, 128], strides = [1, 1]} : vector<48x128xf32> to vector<16x128xf32>
    %cst_68 = arith.constant dense<0.000000e+00> : vector<32x128xf32>
    %195 = tpu.matmul %191, %194, %cst_68 {dimension_numbers = #tpu.dot_dimension_numbers<[1], [0], [0], [1], [0, 0, 1, 1], [], []>} : vector<32x16xf32>, vector<16x128xf32>, vector<32x128xf32> -> vector<32x128xf32>
    %196 = vector.extract_strided_slice %192 {offsets = [16, 0], sizes = [32, 128], strides = [1, 1]} : vector<48x128xf32> to vector<32x128xf32>
    %cst_69 = arith.constant dense<0.000000e+00> : vector<32x128xf32>
    %197 = tpu.matmul %189, %196, %cst_69 {dimension_numbers = #tpu.dot_dimension_numbers<[1], [0], [0], [1], [0, 0, 1, 1], [], []>} : vector<32x32xf32>, vector<32x128xf32>, vector<32x128xf32> -> vector<32x128xf32>
    %198 = arith.addf %195, %197 : vector<32x128xf32>
    %199 = vector.broadcast %193 : vector<1x128xf32> to vector<32x128xf32>
    %200 = arith.addf %198, %199 : vector<32x128xf32>
    %201 = tpu.iota {dimensions = array<i32: 1>} : vector<32x128xi32>
    %c64_i32_70 = arith.constant 64 : i32
    %202 = vector.broadcast %c64_i32_70 : i32 to vector<32x128xi32>
    %203 = arith.cmpi sge, %201, %202 : vector<32x128xi32>
    %c96_i32_71 = arith.constant 96 : i32
    %204 = vector.broadcast %c96_i32_71 : i32 to vector<32x128xi32>
    %205 = arith.cmpi slt, %201, %204 : vector<32x128xi32>
    %206 = arith.andi %203, %205 : vector<32x128xi1>
    %207 = math.tanh %200 : vector<32x128xf32>
    %208 = arith.negf %200 : vector<32x128xf32>
    %209 = math.exp %208 : vector<32x128xf32>
    %cst_72 = arith.constant 1.000000e+00 : f32
    %210 = vector.broadcast %cst_72 : f32 to vector<32x128xf32>
    %211 = arith.addf %210, %209 : vector<32x128xf32>
    %212 = arith.divf %210, %211 : vector<32x128xf32>
    %213 = arith.select %206, %207, %212 : vector<32x128xi1>, vector<32x128xf32>
    %214 = vector.extract_strided_slice %213 {offsets = [0, 0], sizes = [32, 32], strides = [1, 1]} : vector<32x128xf32> to vector<32x32xf32>
    %215 = vector.extract_strided_slice %213 {offsets = [0, 32], sizes = [32, 32], strides = [1, 1]} : vector<32x128xf32> to vector<32x32xf32>
    %216 = vector.extract_strided_slice %213 {offsets = [0, 64], sizes = [32, 32], strides = [1, 1]} : vector<32x128xf32> to vector<32x32xf32>
    %217 = vector.extract_strided_slice %213 {offsets = [0, 96], sizes = [32, 32], strides = [1, 1]} : vector<32x128xf32> to vector<32x32xf32>
    %218 = arith.mulf %215, %187 : vector<32x32xf32>
    %219 = arith.mulf %214, %216 : vector<32x32xf32>
    %220 = arith.addf %218, %219 : vector<32x32xf32>
    %221 = math.tanh %220 : vector<32x32xf32>
    %222 = arith.mulf %217, %221 : vector<32x32xf32>
    %223 = vector.extract_strided_slice %22 {offsets = [6, 0, 0], sizes = [1, 32, 16], strides = [1, 1, 1]} : vector<8x32x16xf32> to vector<1x32x16xf32>
    %224 = vector.shape_cast %223 : vector<1x32x16xf32> to vector<32x16xf32>
    %c0_73 = arith.constant 0 : index
    %c0_74 = arith.constant 0 : index
    %225 = vector.load %arg7[%c0_73, %c0_74] : memref<48x128xf32, #tpu.memory_space<vmem>>, vector<48x128xf32>
    %c0_75 = arith.constant 0 : index
    %c0_76 = arith.constant 0 : index
    %226 = vector.load %arg8[%c0_75, %c0_76] : memref<1x128xf32, #tpu.memory_space<vmem>>, vector<1x128xf32>
    %227 = vector.extract_strided_slice %225 {offsets = [0, 0], sizes = [16, 128], strides = [1, 1]} : vector<48x128xf32> to vector<16x128xf32>
    %cst_77 = arith.constant dense<0.000000e+00> : vector<32x128xf32>
    %228 = tpu.matmul %224, %227, %cst_77 {dimension_numbers = #tpu.dot_dimension_numbers<[1], [0], [0], [1], [0, 0, 1, 1], [], []>} : vector<32x16xf32>, vector<16x128xf32>, vector<32x128xf32> -> vector<32x128xf32>
    %229 = vector.extract_strided_slice %225 {offsets = [16, 0], sizes = [32, 128], strides = [1, 1]} : vector<48x128xf32> to vector<32x128xf32>
    %cst_78 = arith.constant dense<0.000000e+00> : vector<32x128xf32>
    %230 = tpu.matmul %222, %229, %cst_78 {dimension_numbers = #tpu.dot_dimension_numbers<[1], [0], [0], [1], [0, 0, 1, 1], [], []>} : vector<32x32xf32>, vector<32x128xf32>, vector<32x128xf32> -> vector<32x128xf32>
    %231 = arith.addf %228, %230 : vector<32x128xf32>
    %232 = vector.broadcast %226 : vector<1x128xf32> to vector<32x128xf32>
    %233 = arith.addf %231, %232 : vector<32x128xf32>
    %234 = tpu.iota {dimensions = array<i32: 1>} : vector<32x128xi32>
    %c64_i32_79 = arith.constant 64 : i32
    %235 = vector.broadcast %c64_i32_79 : i32 to vector<32x128xi32>
    %236 = arith.cmpi sge, %234, %235 : vector<32x128xi32>
    %c96_i32_80 = arith.constant 96 : i32
    %237 = vector.broadcast %c96_i32_80 : i32 to vector<32x128xi32>
    %238 = arith.cmpi slt, %234, %237 : vector<32x128xi32>
    %239 = arith.andi %236, %238 : vector<32x128xi1>
    %240 = math.tanh %233 : vector<32x128xf32>
    %241 = arith.negf %233 : vector<32x128xf32>
    %242 = math.exp %241 : vector<32x128xf32>
    %cst_81 = arith.constant 1.000000e+00 : f32
    %243 = vector.broadcast %cst_81 : f32 to vector<32x128xf32>
    %244 = arith.addf %243, %242 : vector<32x128xf32>
    %245 = arith.divf %243, %244 : vector<32x128xf32>
    %246 = arith.select %239, %240, %245 : vector<32x128xi1>, vector<32x128xf32>
    %247 = vector.extract_strided_slice %246 {offsets = [0, 0], sizes = [32, 32], strides = [1, 1]} : vector<32x128xf32> to vector<32x32xf32>
    %248 = vector.extract_strided_slice %246 {offsets = [0, 32], sizes = [32, 32], strides = [1, 1]} : vector<32x128xf32> to vector<32x32xf32>
    %249 = vector.extract_strided_slice %246 {offsets = [0, 64], sizes = [32, 32], strides = [1, 1]} : vector<32x128xf32> to vector<32x32xf32>
    %250 = vector.extract_strided_slice %246 {offsets = [0, 96], sizes = [32, 32], strides = [1, 1]} : vector<32x128xf32> to vector<32x32xf32>
    %251 = arith.mulf %248, %220 : vector<32x32xf32>
    %252 = arith.mulf %247, %249 : vector<32x32xf32>
    %253 = arith.addf %251, %252 : vector<32x32xf32>
    %254 = math.tanh %253 : vector<32x32xf32>
    %255 = arith.mulf %250, %254 : vector<32x32xf32>
    %256 = vector.extract_strided_slice %22 {offsets = [7, 0, 0], sizes = [1, 32, 16], strides = [1, 1, 1]} : vector<8x32x16xf32> to vector<1x32x16xf32>
    %257 = vector.shape_cast %256 : vector<1x32x16xf32> to vector<32x16xf32>
    %c0_82 = arith.constant 0 : index
    %c0_83 = arith.constant 0 : index
    %258 = vector.load %arg7[%c0_82, %c0_83] : memref<48x128xf32, #tpu.memory_space<vmem>>, vector<48x128xf32>
    %c0_84 = arith.constant 0 : index
    %c0_85 = arith.constant 0 : index
    %259 = vector.load %arg8[%c0_84, %c0_85] : memref<1x128xf32, #tpu.memory_space<vmem>>, vector<1x128xf32>
    %260 = vector.extract_strided_slice %258 {offsets = [0, 0], sizes = [16, 128], strides = [1, 1]} : vector<48x128xf32> to vector<16x128xf32>
    %cst_86 = arith.constant dense<0.000000e+00> : vector<32x128xf32>
    %261 = tpu.matmul %257, %260, %cst_86 {dimension_numbers = #tpu.dot_dimension_numbers<[1], [0], [0], [1], [0, 0, 1, 1], [], []>} : vector<32x16xf32>, vector<16x128xf32>, vector<32x128xf32> -> vector<32x128xf32>
    %262 = vector.extract_strided_slice %258 {offsets = [16, 0], sizes = [32, 128], strides = [1, 1]} : vector<48x128xf32> to vector<32x128xf32>
    %cst_87 = arith.constant dense<0.000000e+00> : vector<32x128xf32>
    %263 = tpu.matmul %255, %262, %cst_87 {dimension_numbers = #tpu.dot_dimension_numbers<[1], [0], [0], [1], [0, 0, 1, 1], [], []>} : vector<32x32xf32>, vector<32x128xf32>, vector<32x128xf32> -> vector<32x128xf32>
    %264 = arith.addf %261, %263 : vector<32x128xf32>
    %265 = vector.broadcast %259 : vector<1x128xf32> to vector<32x128xf32>
    %266 = arith.addf %264, %265 : vector<32x128xf32>
    %267 = tpu.iota {dimensions = array<i32: 1>} : vector<32x128xi32>
    %c64_i32_88 = arith.constant 64 : i32
    %268 = vector.broadcast %c64_i32_88 : i32 to vector<32x128xi32>
    %269 = arith.cmpi sge, %267, %268 : vector<32x128xi32>
    %c96_i32_89 = arith.constant 96 : i32
    %270 = vector.broadcast %c96_i32_89 : i32 to vector<32x128xi32>
    %271 = arith.cmpi slt, %267, %270 : vector<32x128xi32>
    %272 = arith.andi %269, %271 : vector<32x128xi1>
    %273 = math.tanh %266 : vector<32x128xf32>
    %274 = arith.negf %266 : vector<32x128xf32>
    %275 = math.exp %274 : vector<32x128xf32>
    %cst_90 = arith.constant 1.000000e+00 : f32
    %276 = vector.broadcast %cst_90 : f32 to vector<32x128xf32>
    %277 = arith.addf %276, %275 : vector<32x128xf32>
    %278 = arith.divf %276, %277 : vector<32x128xf32>
    %279 = arith.select %272, %273, %278 : vector<32x128xi1>, vector<32x128xf32>
    %280 = vector.extract_strided_slice %279 {offsets = [0, 0], sizes = [32, 32], strides = [1, 1]} : vector<32x128xf32> to vector<32x32xf32>
    %281 = vector.extract_strided_slice %279 {offsets = [0, 32], sizes = [32, 32], strides = [1, 1]} : vector<32x128xf32> to vector<32x32xf32>
    %282 = vector.extract_strided_slice %279 {offsets = [0, 64], sizes = [32, 32], strides = [1, 1]} : vector<32x128xf32> to vector<32x32xf32>
    %283 = vector.extract_strided_slice %279 {offsets = [0, 96], sizes = [32, 32], strides = [1, 1]} : vector<32x128xf32> to vector<32x32xf32>
    %284 = arith.mulf %281, %253 : vector<32x32xf32>
    %285 = arith.mulf %280, %282 : vector<32x32xf32>
    %286 = arith.addf %284, %285 : vector<32x32xf32>
    %287 = math.tanh %286 : vector<32x32xf32>
    %288 = arith.mulf %283, %287 : vector<32x32xf32>
    %289 = vector.extract_strided_slice %288 {offsets = [0, 0], sizes = [16, 32], strides = [1, 1]} : vector<32x32xf32> to vector<16x32xf32>
    %290 = vector.extract_strided_slice %288 {offsets = [16, 0], sizes = [16, 32], strides = [1, 1]} : vector<32x32xf32> to vector<16x32xf32>
    %c0_91 = arith.constant 0 : index
    %c0_92 = arith.constant 0 : index
    %291 = vector.load %arg9[%c0_91, %c0_92] : memref<64x8xf32, #tpu.memory_space<vmem>>, vector<64x8xf32>
    %292 = vector.extract_strided_slice %291 {offsets = [0, 0], sizes = [32, 8], strides = [1, 1]} : vector<64x8xf32> to vector<32x8xf32>
    %cst_93 = arith.constant dense<0.000000e+00> : vector<16x8xf32>
    %293 = tpu.matmul %289, %292, %cst_93 {dimension_numbers = #tpu.dot_dimension_numbers<[1], [0], [0], [1], [0, 0, 1, 1], [], []>} : vector<16x32xf32>, vector<32x8xf32>, vector<16x8xf32> -> vector<16x8xf32>
    %294 = vector.extract_strided_slice %291 {offsets = [32, 0], sizes = [32, 8], strides = [1, 1]} : vector<64x8xf32> to vector<32x8xf32>
    %cst_94 = arith.constant dense<0.000000e+00> : vector<16x8xf32>
    %295 = tpu.matmul %290, %294, %cst_94 {dimension_numbers = #tpu.dot_dimension_numbers<[1], [0], [0], [1], [0, 0, 1, 1], [], []>} : vector<16x32xf32>, vector<32x8xf32>, vector<16x8xf32> -> vector<16x8xf32>
    %296 = arith.addf %293, %295 : vector<16x8xf32>
    %c0_95 = arith.constant 0 : index
    %c0_96 = arith.constant 0 : index
    %297 = vector.load %arg10[%c0_95, %c0_96] : memref<1x8xf32, #tpu.memory_space<vmem>>, vector<1x8xf32>
    %298 = vector.broadcast %297 : vector<1x8xf32> to vector<16x8xf32>
    %299 = arith.addf %296, %298 : vector<16x8xf32>
    %c0_97 = arith.constant 0 : index
    %c0_98 = arith.constant 0 : index
    %300 = vector.load %arg11[%c0_97, %c0_98] : memref<16x8xf32, #tpu.memory_space<vmem>>, vector<16x8xf32>
    tpu.vector_store %arg11[%c0_97, %c0_98], %299 {strides = array<i32>} : memref<16x8xf32, #tpu.memory_space<vmem>>, vector<16x8xf32>,
    return
  }
  func.func @transform_0(%arg0: i32) -> (i32, i32, i32, i32) {
    %c0_i32 = arith.constant 0 : i32
    %c0_i32_0 = arith.constant 0 : i32
    %c0_i32_1 = arith.constant 0 : i32
    %c0_i32_2 = arith.constant 0 : i32
    %c0_i32_3 = arith.constant 0 : i32
    return %c0_i32, %c0_i32_0, %c0_i32_1, %c0_i32_2 : i32, i32, i32, i32
  }
  func.func @transform_1(%arg0: i32) -> (i32, i32, i32, i32) {
    %c0_i32 = arith.constant 0 : i32
    %c0_i32_0 = arith.constant 0 : i32
    %c0_i32_1 = arith.constant 0 : i32
    %c0_i32_2 = arith.constant 0 : i32
    %c0_i32_3 = arith.constant 0 : i32
    return %c0_i32, %c0_i32_0, %c0_i32_1, %c0_i32_2 : i32, i32, i32, i32
  }
  func.func @transform_2(%arg0: i32) -> (i32, i32) {
    %c0_i32 = arith.constant 0 : i32
    %c0_i32_0 = arith.constant 0 : i32
    %c0_i32_1 = arith.constant 0 : i32
    return %c0_i32, %c0_i32_0 : i32, i32
  }
  func.func @transform_3(%arg0: i32) -> (i32, i32) {
    %c0_i32 = arith.constant 0 : i32
    %c0_i32_0 = arith.constant 0 : i32
    %c0_i32_1 = arith.constant 0 : i32
    return %c0_i32, %c0_i32_0 : i32, i32
  }
  func.func @transform_4(%arg0: i32) -> (i32, i32) {
    %c0_i32 = arith.constant 0 : i32
    %c0_i32_0 = arith.constant 0 : i32
    %c0_i32_1 = arith.constant 0 : i32
    return %c0_i32, %c0_i32_0 : i32, i32
  }
  func.func @transform_5(%arg0: i32) -> (i32, i32) {
    %c0_i32 = arith.constant 0 : i32
    %c0_i32_0 = arith.constant 0 : i32
    %c0_i32_1 = arith.constant 0 : i32
    return %c0_i32, %c0_i32_0 : i32, i32
  }
  func.func @transform_6(%arg0: i32) -> (i32, i32) {
    %c0_i32 = arith.constant 0 : i32
    %c0_i32_0 = arith.constant 0 : i32
    %c0_i32_1 = arith.constant 0 : i32
    return %c0_i32, %c0_i32_0 : i32, i32
  }
  func.func @transform_7(%arg0: i32) -> (i32, i32) {
    %c0_i32 = arith.constant 0 : i32
    %c0_i32_0 = arith.constant 0 : i32
    %c0_i32_1 = arith.constant 0 : i32
    return %c0_i32, %c0_i32_0 : i32, i32
  }
  func.func @transform_8(%arg0: i32) -> (i32, i32) {
    %c0_i32 = arith.constant 0 : i32
    %c0_i32_0 = arith.constant 0 : i32
    %c0_i32_1 = arith.constant 0 : i32
    return %c0_i32, %c0_i32_0 : i32, i32
  }
  func.func @transform_9(%arg0: i32) -> (i32, i32) {
    %c0_i32 = arith.constant 0 : i32
    %c0_i32_0 = arith.constant 0 : i32
    %c0_i32_1 = arith.constant 0 : i32
    return %c0_i32, %c0_i32_0 : i32, i32
  }
  func.func @transform_10(%arg0: i32) -> (i32, i32) {
    %c0_i32 = arith.constant 0 : i32
    %c0_i32_0 = arith.constant 0 : i32
    %c0_i32_1 = arith.constant 0 : i32
    return %c0_i32, %c0_i32_0 : i32, i32
  }
}

</mosaic_0001>

<llo_original>
// kernel: lstm_baseline_forward.1
$region0: #{lstm_baseline_forward.1}
  #allocation0 [shape = 'u32[]', space=smem, size = 0x4, offset = 0x4, fixed_abs, tag = 'smem constant byte address 0x4 - core index']
  #allocation1 [shape = 'u32[144,128]{1,0:T(1,128)}', space=vmem, size = 0x12000, scoped, tag = 'internal scratch']
  %s0 = inlined_call_operand.vmem [shape: f32[8,2,16,16], index: 0, kind: input, shape index: {}]
  %s1 = inlined_call_operand.vmem [shape: f32[8,2,16,4], index: 1, kind: input, shape index: {}]
  %s2 = inlined_call_operand.vmem [shape: f32[4,32], index: 2, kind: input, shape index: {}]
  %s3 = inlined_call_operand.vmem [shape: f32[1,32], index: 3, kind: input, shape index: {}]
  %s4 = inlined_call_operand.vmem [shape: f32[32,16], index: 4, kind: input, shape index: {}]
  %s5 = inlined_call_operand.vmem [shape: f32[1,16], index: 5, kind: input, shape index: {}]
  %s6 = inlined_call_operand.vmem [shape: f32[48,128], index: 6, kind: input, shape index: {}]
  %s7 = inlined_call_operand.vmem [shape: f32[1,128], index: 7, kind: input, shape index: {}]
  %s8 = inlined_call_operand.vmem [shape: f32[64,8], index: 8, kind: input, shape index: {}]
  %s9 = inlined_call_operand.vmem [shape: f32[1,8], index: 9, kind: input, shape index: {}]
  %s10 = inlined_call_operand.vmem [shape: f32[16,8], index: 10, kind: output, shape index: {}]
  %s11 = sld [smem:[#allocation0]]
  $region50: #{lstm_baseline_forward.1} parent=0
    _
  %s13 = ssub.s32 1, %s11
  %s14 = scalar_select 0, %s13, %s11
  // Predicated region
  $region2: #{lstm_baseline_forward.1} parent=0 // pred_check
    _
  $region3: #{lstm_baseline_forward.1} parent=0 // pred_check_branch
    %16 = sbr.rel (0) target = $region5
  $region4: #{lstm_baseline_forward.1} parent=0 // pred_region
    _
  $region5: #{lstm_baseline_forward.1} parent=0 // pred_fallthru
    _
  // Predicated region
  $region6: #{lstm_baseline_forward.1} parent=0 // pred_check
    _
  $region7: #{lstm_baseline_forward.1} parent=0 // pred_check_branch
    %18 = sbr.rel (0) target = $region9
  $region8: #{lstm_baseline_forward.1} parent=0 // pred_region
    _
  $region9: #{lstm_baseline_forward.1} parent=0 // pred_fallthru
    _
  // Predicated region
  $region10: #{lstm_baseline_forward.1} parent=0 // pred_check
    _
  $region11: #{lstm_baseline_forward.1} parent=0 // pred_check_branch
    %20 = sbr.rel (0) target = $region13
  $region12: #{lstm_baseline_forward.1} parent=0 // pred_region
    _
  $region13: #{lstm_baseline_forward.1} parent=0 // pred_fallthru
    _
  // Predicated region
  $region14: #{lstm_baseline_forward.1} parent=0 // pred_check
    _
  $region15: #{lstm_baseline_forward.1} parent=0 // pred_check_branch
    %22 = sbr.rel (0) target = $region17
  $region16: #{lstm_baseline_forward.1} parent=0 // pred_region
    _
  $region17: #{lstm_baseline_forward.1} parent=0 // pred_fallthru
    _
  // Predicated region
  $region18: #{lstm_baseline_forward.1} parent=0 // pred_check
    _
  $region19: #{lstm_baseline_forward.1} parent=0 // pred_check_branch
    %24 = sbr.rel (0) target = $region21
  $region20: #{lstm_baseline_forward.1} parent=0 // pred_region
    _
  $region21: #{lstm_baseline_forward.1} parent=0 // pred_fallthru
    _
  // Predicated region
  $region22: #{lstm_baseline_forward.1} parent=0 // pred_check
    _
  $region23: #{lstm_baseline_forward.1} parent=0 // pred_check_branch
    %26 = sbr.rel (0) target = $region25
  $region24: #{lstm_baseline_forward.1} parent=0 // pred_region
    _
  $region25: #{lstm_baseline_forward.1} parent=0 // pred_fallthru
    _
  // Predicated region
  $region26: #{lstm_baseline_forward.1} parent=0 // pred_check
    _
  $region27: #{lstm_baseline_forward.1} parent=0 // pred_check_branch
    %28 = sbr.rel (0) target = $region29
  $region28: #{lstm_baseline_forward.1} parent=0 // pred_region
    _
  $region29: #{lstm_baseline_forward.1} parent=0 // pred_fallthru
    _
  // Predicated region
  $region30: #{lstm_baseline_forward.1} parent=0 // pred_check
    _
  $region31: #{lstm_baseline_forward.1} parent=0 // pred_check_branch
    %30 = sbr.rel (0) target = $region33
  $region32: #{lstm_baseline_forward.1} parent=0 // pred_region
    _
  $region33: #{lstm_baseline_forward.1} parent=0 // pred_fallthru
    _
  // Predicated region
  $region34: #{lstm_baseline_forward.1} parent=0 // pred_check
    _
  $region35: #{lstm_baseline_forward.1} parent=0 // pred_check_branch
    %32 = sbr.rel (0) target = $region37
  $region36: #{lstm_baseline_forward.1} parent=0 // pred_region
    _
  $region37: #{lstm_baseline_forward.1} parent=0 // pred_fallthru
    _
  // Predicated region
  $region38: #{lstm_baseline_forward.1} parent=0 // pred_check
    _
  $region39: #{lstm_baseline_forward.1} parent=0 // pred_check_branch
    %34 = sbr.rel (0) target = $region41
  $region40: #{lstm_baseline_forward.1} parent=0 // pred_region
    _
  $region41: #{lstm_baseline_forward.1} parent=0 // pred_fallthru
    _
  %v35 = vld [vmem:[%s0] sm:$0xff]
  %v36 = vld [vmem:[%s0 + $0x8] sm:$0xff]
  %v37 = vld [vmem:[%s0 + $0x10] sm:$0xff]
  %v38 = vld [vmem:[%s0 + $0x18] sm:$0xff]
  %v39 = vld [vmem:[%s0 + $0x20] sm:$0xff]
  %v40 = vld [vmem:[%s0 + $0x28] sm:$0xff]
  %v41 = vld [vmem:[%s0 + $0x30] sm:$0xff]
  %v42 = vld [vmem:[%s0 + $0x38] sm:$0xff]
  %v43 = vld [vmem:[%s0 + $0x40] sm:$0xff]
  %v44 = vld [vmem:[%s0 + $0x48] sm:$0xff]
  %v45 = vld [vmem:[%s0 + $0x50] sm:$0xff]
  %v46 = vld [vmem:[%s0 + $0x58] sm:$0xff]
  %v47 = vld [vmem:[%s0 + $0x60] sm:$0xff]
  %v48 = vld [vmem:[%s0 + $0x68] sm:$0xff]
  %v49 = vld [vmem:[%s0 + $0x70] sm:$0xff]
  %v50 = vld [vmem:[%s0 + $0x78] sm:$0xff]
  %v51 = vld [vmem:[%s0 + $0x80] sm:$0xff]
  %v52 = vld [vmem:[%s0 + $0x88] sm:$0xff]
  %v53 = vld [vmem:[%s0 + $0x90] sm:$0xff]
  %v54 = vld [vmem:[%s0 + $0x98] sm:$0xff]
  %v55 = vld [vmem:[%s0 + $0xa0] sm:$0xff]
  %v56 = vld [vmem:[%s0 + $0xa8] sm:$0xff]
  %v57 = vld [vmem:[%s0 + $0xb0] sm:$0xff]
  %v58 = vld [vmem:[%s0 + $0xb8] sm:$0xff]
  %v59 = vld [vmem:[%s0 + $0xc0] sm:$0xff]
  %v60 = vld [vmem:[%s0 + $0xc8] sm:$0xff]
  %v61 = vld [vmem:[%s0 + $0xd0] sm:$0xff]
  %v62 = vld [vmem:[%s0 + $0xd8] sm:$0xff]
  %v63 = vld [vmem:[%s0 + $0xe0] sm:$0xff]
  %v64 = vld [vmem:[%s0 + $0xe8] sm:$0xff]
  %v65 = vld [vmem:[%s0 + $0xf0] sm:$0xff]
  %v66 = vld [vmem:[%s0 + $0xf8] sm:$0xff]
  %v67 = vld [vmem:[%s1] sm:$0xff]
  %v68 = vld [vmem:[%s1 + $0x8] sm:$0xff]
  %v69 = vld [vmem:[%s1 + $0x10] sm:$0xff]
  %v70 = vld [vmem:[%s1 + $0x18] sm:$0xff]
  %v71 = vld [vmem:[%s1 + $0x20] sm:$0xff]
  %v72 = vld [vmem:[%s1 + $0x28] sm:$0xff]
  %v73 = vld [vmem:[%s1 + $0x30] sm:$0xff]
  %v74 = vld [vmem:[%s1 + $0x38] sm:$0xff]
  %v75 = vld [vmem:[%s1 + $0x40] sm:$0xff]
  %v76 = vld [vmem:[%s1 + $0x48] sm:$0xff]
  %v77 = vld [vmem:[%s1 + $0x50] sm:$0xff]
  %v78 = vld [vmem:[%s1 + $0x58] sm:$0xff]
  %v79 = vld [vmem:[%s1 + $0x60] sm:$0xff]
  %v80 = vld [vmem:[%s1 + $0x68] sm:$0xff]
  %v81 = vld [vmem:[%s1 + $0x70] sm:$0xff]
  %v82 = vld [vmem:[%s1 + $0x78] sm:$0xff]
  %v83 = vld [vmem:[%s1 + $0x80] sm:$0xff]
  %v84 = vld [vmem:[%s1 + $0x88] sm:$0xff]
  %v85 = vld [vmem:[%s1 + $0x90] sm:$0xff]
  %v86 = vld [vmem:[%s1 + $0x98] sm:$0xff]
  %v87 = vld [vmem:[%s1 + $0xa0] sm:$0xff]
  %v88 = vld [vmem:[%s1 + $0xa8] sm:$0xff]
  %v89 = vld [vmem:[%s1 + $0xb0] sm:$0xff]
  %v90 = vld [vmem:[%s1 + $0xb8] sm:$0xff]
  %v91 = vld [vmem:[%s1 + $0xc0] sm:$0xff]
  %v92 = vld [vmem:[%s1 + $0xc8] sm:$0xff]
  %v93 = vld [vmem:[%s1 + $0xd0] sm:$0xff]
  %v94 = vld [vmem:[%s1 + $0xd8] sm:$0xff]
  %v95 = vld [vmem:[%s1 + $0xe0] sm:$0xff]
  %v96 = vld [vmem:[%s1 + $0xe8] sm:$0xff]
  %v97 = vld [vmem:[%s1 + $0xf0] sm:$0xff]
  %v98 = vld [vmem:[%s1 + $0xf8] sm:$0xff]
  %v99 = vld [vmem:[%s2] sm:$0xf]
  %v100 = vld [vmem:[%s3] sm:$0x1]
  %vm101 = vcmask 31744
  %v103 = vsel %vm101, %v67, 0
  %v106 = vsel %vm101, %v68, 0
  %v109 = vsel %vm101, %v69, 0
  %v112 = vsel %vm101, %v70, 0
  %v115 = vsel %vm101, %v71, 0
  %v118 = vsel %vm101, %v72, 0
  %v121 = vsel %vm101, %v73, 0
  %v124 = vsel %vm101, %v74, 0
  %v127 = vsel %vm101, %v75, 0
  %v130 = vsel %vm101, %v76, 0
  %v133 = vsel %vm101, %v77, 0
  %v136 = vsel %vm101, %v78, 0
  %v139 = vsel %vm101, %v79, 0
  %v142 = vsel %vm101, %v80, 0
  %v145 = vsel %vm101, %v81, 0
  %v148 = vsel %vm101, %v82, 0
  %v151 = vsel %vm101, %v83, 0
  %v154 = vsel %vm101, %v84, 0
  %v157 = vsel %vm101, %v85, 0
  %v160 = vsel %vm101, %v86, 0
  %v163 = vsel %vm101, %v87, 0
  %v166 = vsel %vm101, %v88, 0
  %v169 = vsel %vm101, %v89, 0
  %v172 = vsel %vm101, %v90, 0
  %v175 = vsel %vm101, %v91, 0
  %v178 = vsel %vm101, %v92, 0
  %v181 = vsel %vm101, %v93, 0
  %v184 = vsel %vm101, %v94, 0
  %v187 = vsel %vm101, %v95, 0
  %v190 = vsel %vm101, %v96, 0
  %v193 = vsel %vm101, %v97, 0
  %v196 = vsel %vm101, %v98, 0
  %vm198 = vcmask 1043456
  %v200 = vsel %vm198, %v99, 0
  %202 = vmatprep.subr.mxu0 0.0
  %203 = vmatpush1.msra.mxu0 0.0
  %204 = vmatprep.subr.mxu0 0.0
  %205 = vmatpush1.msra.mxu0 0.0
  %206 = vmatprep.subr.mxu0 0.0
  %207 = vmatpush1.msra.mxu0 0.0
  %208 = vmatprep.subr.mxu0 0.0
  %209 = vmatpush1.msra.mxu0 0.0
  %210 = vmatprep.subr.mxu0 0.0
  %211 = vmatpush1.msra.mxu0 0.0
  %212 = vmatprep.subr.mxu0 0.0
  %213 = vmatpush1.msra.mxu0 0.0
  %214 = vmatprep.subr.mxu0 0.0
  %215 = vmatpush1.msra.mxu0 0.0
  %216 = vmatprep.subr.mxu0 0.0
  %217 = vmatpush1.msra.mxu0 0.0
  %218 = vmatprep.subr.mxu0 0.0
  %219 = vmatpush1.msra.mxu0 0.0
  %220 = vmatprep.subr.mxu0 0.0
  %221 = vmatpush1.msra.mxu0 0.0
  %222 = vmatprep.subr.mxu0 0.0
  %223 = vmatpush1.msra.mxu0 0.0
  %224 = vmatprep.subr.mxu0 0.0
  %225 = vmatpush1.msra.mxu0 0.0
  %226 = vmatprep.subr.mxu0 0.0
  %227 = vmatpush1.msra.mxu0 0.0
  %228 = vmatprep.subr.mxu0 0.0
  %229 = vmatpush1.msra.mxu0 0.0
  %230 = vmatprep.subr.mxu0 0.0
  %231 = vmatpush1.msra.mxu0 0.0
  %232 = vmatprep.subr.mxu0 0.0
  %233 = vmatpush1.msra.mxu0 %v200
  %234 = vmatprep.subr.mxu0 0.0
  %235 = vmatpush2.msra.mxu0 0.0
  %236 = vmatprep.subr.mxu0 0.0
  %237 = vmatpush2.msra.mxu0 0.0
  %238 = vmatprep.subr.mxu0 0.0
  %239 = vmatpush2.msra.mxu0 0.0
  %240 = vmatprep.subr.mxu0 0.0
  %241 = vmatpush2.msra.mxu0 0.0
  %242 = vmatprep.subr.mxu0 0.0
  %243 = vmatpush2.msra.mxu0 0.0
  %244 = vmatprep.subr.mxu0 0.0
  %245 = vmatpush2.msra.mxu0 0.0
  %246 = vmatprep.subr.mxu0 0.0
  %247 = vmatpush2.msra.mxu0 0.0
  %248 = vmatprep.subr.mxu0 0.0
  %249 = vmatpush2.msra.mxu0 0.0
  %250 = vmatprep.subr.mxu0 0.0
  %251 = vmatpush2.msra.mxu0 0.0
  %252 = vmatprep.subr.mxu0 0.0
  %253 = vmatpush2.msra.mxu0 0.0
  %254 = vmatprep.subr.mxu0 0.0
  %255 = vmatpush2.msra.mxu0 0.0
  %256 = vmatprep.subr.mxu0 0.0
  %257 = vmatpush2.msra.mxu0 0.0
  %258 = vmatprep.subr.mxu0 0.0
  %259 = vmatpush2.msra.mxu0 0.0
  %260 = vmatprep.subr.mxu0 0.0
  %261 = vmatpush2.msra.mxu0 0.0
  %262 = vmatprep.subr.mxu0 0.0
  %263 = vmatpush2.msra.mxu0 0.0
  %264 = vmatprep.subr.mxu0 0.0
  %265 = vmatpush2.msra.mxu0 0.0
  %266 = vmatprep.mubr.f32.mxu0 0.0
  %267 = vmatmul.mubr.f32.gmra.mxu0 %v103
  %v268 = vpop.f32.mrf.mxu0
  %v269 = vadd.f32 0.0, %v268
  %v270 = vpop.f32.mrf.mxu0
  %271 = vmatprep.mubr.f32.mxu0 0.0
  %272 = vmatmul.mubr.f32.gmra.mxu0 %v106
  %v273 = vpop.f32.mrf.mxu0
  %v274 = vadd.f32 0.0, %v273
  %v275 = vpop.f32.mrf.mxu0
  %276 = vmatprep.mubr.f32.mxu0 0.0
  %277 = vmatmul.mubr.f32.gmra.mxu0 %v109
  %v278 = vpop.f32.mrf.mxu0
  %v279 = vadd.f32 0.0, %v278
  %v280 = vpop.f32.mrf.mxu0
  %281 = vmatprep.mubr.f32.mxu0 0.0
  %282 = vmatmul.mubr.f32.gmra.mxu0 %v112
  %v283 = vpop.f32.mrf.mxu0
  %v284 = vadd.f32 0.0, %v283
  %v285 = vpop.f32.mrf.mxu0
  %286 = vmatprep.mubr.f32.mxu0 0.0
  %287 = vmatmul.mubr.f32.gmra.mxu0 %v115
  %v288 = vpop.f32.mrf.mxu0
  %v289 = vadd.f32 0.0, %v288
  %v290 = vpop.f32.mrf.mxu0
  %291 = vmatprep.mubr.f32.mxu0 0.0
  %292 = vmatmul.mubr.f32.gmra.mxu0 %v118
  %v293 = vpop.f32.mrf.mxu0
  %v294 = vadd.f32 0.0, %v293
  %v295 = vpop.f32.mrf.mxu0
  %296 = vmatprep.mubr.f32.mxu0 0.0
  %297 = vmatmul.mubr.f32.gmra.mxu0 %v121
  %v298 = vpop.f32.mrf.mxu0
  %v299 = vadd.f32 0.0, %v298
  %v300 = vpop.f32.mrf.mxu0
  %301 = vmatprep.mubr.f32.mxu0 0.0
  %302 = vmatmul.mubr.f32.gmra.mxu0 %v124
  %v303 = vpop.f32.mrf.mxu0
  %v304 = vadd.f32 0.0, %v303
  %v305 = vpop.f32.mrf.mxu0
  %306 = vmatprep.mubr.f32.mxu0 0.0
  %307 = vmatmul.mubr.f32.gmra.mxu0 %v127
  %v308 = vpop.f32.mrf.mxu0
  %v309 = vadd.f32 0.0, %v308
  %v310 = vpop.f32.mrf.mxu0
  %311 = vmatprep.mubr.f32.mxu0 0.0
  %312 = vmatmul.mubr.f32.gmra.mxu0 %v130
  %v313 = vpop.f32.mrf.mxu0
  %v314 = vadd.f32 0.0, %v313
  %v315 = vpop.f32.mrf.mxu0
  %316 = vmatprep.mubr.f32.mxu0 0.0
  %317 = vmatmul.mubr.f32.gmra.mxu0 %v133
  %v318 = vpop.f32.mrf.mxu0
  %v319 = vadd.f32 0.0, %v318
  %v320 = vpop.f32.mrf.mxu0
  %321 = vmatprep.mubr.f32.mxu0 0.0
  %322 = vmatmul.mubr.f32.gmra.mxu0 %v136
  %v323 = vpop.f32.mrf.mxu0
  %v324 = vadd.f32 0.0, %v323
  %v325 = vpop.f32.mrf.mxu0
  %326 = vmatprep.mubr.f32.mxu0 0.0
  %327 = vmatmul.mubr.f32.gmra.mxu0 %v139
  %v328 = vpop.f32.mrf.mxu0
  %v329 = vadd.f32 0.0, %v328
  %v330 = vpop.f32.mrf.mxu0
  %331 = vmatprep.mubr.f32.mxu0 0.0
  %332 = vmatmul.mubr.f32.gmra.mxu0 %v142
  %v333 = vpop.f32.mrf.mxu0
  %v334 = vadd.f32 0.0, %v333
  %v335 = vpop.f32.mrf.mxu0
  %336 = vmatprep.mubr.f32.mxu0 0.0
  %337 = vmatmul.mubr.f32.gmra.mxu0 %v145
  %v338 = vpop.f32.mrf.mxu0
  %v339 = vadd.f32 0.0, %v338
  %v340 = vpop.f32.mrf.mxu0
  %341 = vmatprep.mubr.f32.mxu0 0.0
  %342 = vmatmul.mubr.f32.gmra.mxu0 %v148
  %v343 = vpop.f32.mrf.mxu0
  %v344 = vadd.f32 0.0, %v343
  %v345 = vpop.f32.mrf.mxu0
  %346 = vmatprep.mubr.f32.mxu0 0.0
  %347 = vmatmul.mubr.f32.gmra.mxu0 %v151
  %v348 = vpop.f32.mrf.mxu0
  %v349 = vadd.f32 0.0, %v348
  %v350 = vpop.f32.mrf.mxu0
  %351 = vmatprep.mubr.f32.mxu0 0.0
  %352 = vmatmul.mubr.f32.gmra.mxu0 %v154
  %v353 = vpop.f32.mrf.mxu0
  %v354 = vadd.f32 0.0, %v353
  %v355 = vpop.f32.mrf.mxu0
  %356 = vmatprep.mubr.f32.mxu0 0.0
  %357 = vmatmul.mubr.f32.gmra.mxu0 %v157
  %v358 = vpop.f32.mrf.mxu0
  %v359 = vadd.f32 0.0, %v358
  %v360 = vpop.f32.mrf.mxu0
  %361 = vmatprep.mubr.f32.mxu0 0.0
  %362 = vmatmul.mubr.f32.gmra.mxu0 %v160
  %v363 = vpop.f32.mrf.mxu0
  %v364 = vadd.f32 0.0, %v363
  %v365 = vpop.f32.mrf.mxu0
  %366 = vmatprep.mubr.f32.mxu0 0.0
  %367 = vmatmul.mubr.f32.gmra.mxu0 %v163
  %v368 = vpop.f32.mrf.mxu0
  %v369 = vadd.f32 0.0, %v368
  %v370 = vpop.f32.mrf.mxu0
  %371 = vmatprep.mubr.f32.mxu0 0.0
  %372 = vmatmul.mubr.f32.gmra.mxu0 %v166
  %v373 = vpop.f32.mrf.mxu0
  %v374 = vadd.f32 0.0, %v373
  %v375 = vpop.f32.mrf.mxu0
  %376 = vmatprep.mubr.f32.mxu0 0.0
  %377 = vmatmul.mubr.f32.gmra.mxu0 %v169
  %v378 = vpop.f32.mrf.mxu0
  %v379 = vadd.f32 0.0, %v378
  %v380 = vpop.f32.mrf.mxu0
  %381 = vmatprep.mubr.f32.mxu0 0.0
  %382 = vmatmul.mubr.f32.gmra.mxu0 %v172
  %v383 = vpop.f32.mrf.mxu0
  %v384 = vadd.f32 0.0, %v383
  %v385 = vpop.f32.mrf.mxu0
  %386 = vmatprep.mubr.f32.mxu0 0.0
  %387 = vmatmul.mubr.f32.gmra.mxu0 %v175
  %v388 = vpop.f32.mrf.mxu0
  %v389 = vadd.f32 0.0, %v388
  %v390 = vpop.f32.mrf.mxu0
  %391 = vmatprep.mubr.f32.mxu0 0.0
  %392 = vmatmul.mubr.f32.gmra.mxu0 %v178
  %v393 = vpop.f32.mrf.mxu0
  %v394 = vadd.f32 0.0, %v393
  %v395 = vpop.f32.mrf.mxu0
  %396 = vmatprep.mubr.f32.mxu0 0.0
  %397 = vmatmul.mubr.f32.gmra.mxu0 %v181
  %v398 = vpop.f32.mrf.mxu0
  %v399 = vadd.f32 0.0, %v398
  %v400 = vpop.f32.mrf.mxu0
  %401 = vmatprep.mubr.f32.mxu0 0.0
  %402 = vmatmul.mubr.f32.gmra.mxu0 %v184
  %v403 = vpop.f32.mrf.mxu0
  %v404 = vadd.f32 0.0, %v403
  %v405 = vpop.f32.mrf.mxu0
  %406 = vmatprep.mubr.f32.mxu0 0.0
  %407 = vmatmul.mubr.f32.gmra.mxu0 %v187
  %v408 = vpop.f32.mrf.mxu0
  %v409 = vadd.f32 0.0, %v408
  %v410 = vpop.f32.mrf.mxu0
  %411 = vmatprep.mubr.f32.mxu0 0.0
  %412 = vmatmul.mubr.f32.gmra.mxu0 %v190
  %v413 = vpop.f32.mrf.mxu0
  %v414 = vadd.f32 0.0, %v413
  %v415 = vpop.f32.mrf.mxu0
  %416 = vmatprep.mubr.f32.mxu0 0.0
  %417 = vmatmul.mubr.f32.gmra.mxu0 %v193
  %v418 = vpop.f32.mrf.mxu0
  %v419 = vadd.f32 0.0, %v418
  %v420 = vpop.f32.mrf.mxu0
  %421 = vmatprep.mubr.f32.mxu0 0.0
  %422 = vmatmul.mubr.f32.gmra.mxu0 %v196
  %v423 = vpop.f32.mrf.mxu0
  %v424 = vadd.f32 0.0, %v423
  %v425 = vpop.f32.mrf.mxu0
  %426 = vdwg.mxu0
  %vm427 = vcmask 130048
  %v429 = vsel %vm427, %v35, 0
  %v432 = vsel %vm427, %v36, 0
  %434 = vmatprep.subr.mxu0 0.0
  %435 = vmatpush1.msra.mxu0 0.0
  %436 = vmatprep.subr.mxu0 0.0
  %437 = vmatpush1.msra.mxu0 0.0
  %438 = vmatprep.subr.mxu0 0.0
  %439 = vmatpush1.msra.mxu0 0.0
  %440 = vmatprep.subr.mxu0 0.0
  %441 = vmatpush1.msra.mxu0 0.0
  %442 = vmatprep.subr.mxu0 0.0
  %443 = vmatpush1.msra.mxu0 0.0
  %444 = vmatprep.subr.mxu0 0.0
  %445 = vmatpush1.msra.mxu0 0.0
  %446 = vmatprep.subr.mxu0 0.0
  %447 = vmatpush1.msra.mxu0 0.0
  %448 = vmatprep.subr.mxu0 0.0
  %449 = vmatpush1.msra.mxu0 0.0
  %450 = vmatprep.subr.mxu0 0.0
  %451 = vmatpush1.msra.mxu0 0.0
  %452 = vmatprep.subr.mxu0 0.0
  %453 = vmatpush1.msra.mxu0 0.0
  %454 = vmatprep.subr.mxu0 0.0
  %455 = vmatpush1.msra.mxu0 0.0
  %456 = vmatprep.subr.mxu0 0.0
  %457 = vmatpush1.msra.mxu0 0.0
  %458 = vmatprep.subr.mxu0 0.0
  %459 = vmatpush1.msra.mxu0 0.0
  %460 = vmatprep.subr.mxu0 0.0
  %461 = vmatpush1.msra.mxu0 0.0
  %462 = vmatprep.subr.mxu0 0.0
  %463 = vmatpush1.msra.mxu0 %v274
  %464 = vmatprep.subr.mxu0 0.0
  %465 = vmatpush1.msra.mxu0 %v269
  %466 = vmatprep.subr.mxu0 0.0
  %467 = vmatpush2.msra.mxu0 0.0
  %468 = vmatprep.subr.mxu0 0.0
  %469 = vmatpush2.msra.mxu0 0.0
  %470 = vmatprep.subr.mxu0 0.0
  %471 = vmatpush2.msra.mxu0 0.0
  %472 = vmatprep.subr.mxu0 0.0
  %473 = vmatpush2.msra.mxu0 0.0
  %474 = vmatprep.subr.mxu0 0.0
  %475 = vmatpush2.msra.mxu0 0.0
  %476 = vmatprep.subr.mxu0 0.0
  %477 = vmatpush2.msra.mxu0 0.0
  %478 = vmatprep.subr.mxu0 0.0
  %479 = vmatpush2.msra.mxu0 0.0
  %480 = vmatprep.subr.mxu0 0.0
  %481 = vmatpush2.msra.mxu0 0.0
  %482 = vmatprep.subr.mxu0 0.0
  %483 = vmatpush2.msra.mxu0 0.0
  %484 = vmatprep.subr.mxu0 0.0
  %485 = vmatpush2.msra.mxu0 0.0
  %486 = vmatprep.subr.mxu0 0.0
  %487 = vmatpush2.msra.mxu0 0.0
  %488 = vmatprep.subr.mxu0 0.0
  %489 = vmatpush2.msra.mxu0 0.0
  %490 = vmatprep.subr.mxu0 0.0
  %491 = vmatpush2.msra.mxu0 0.0
  %492 = vmatprep.subr.mxu0 0.0
  %493 = vmatpush2.msra.mxu0 0.0
  %494 = vmatprep.subr.mxu0 0.0
  %495 = vmatpush2.msra.mxu0 0.0
  %496 = vmatprep.subr.mxu0 0.0
  %497 = vmatpush2.msra.mxu0 0.0
  %498 = vmatprep.mubr.f32.mxu0 0.0
  %499 = vmatmul.mubr.f32.gmra.mxu0 %v429
  %v500 = vpop.f32.mrf.mxu0
  %v501 = vadd.f32 0.0, %v500
  %v502 = vpop.f32.mrf.mxu0
  %503 = vmatprep.mubr.f32.mxu0 0.0
  %504 = vmatmul.mubr.f32.gmra.mxu0 %v432
  %v505 = vpop.f32.mrf.mxu0
  %v506 = vadd.f32 0.0, %v505
  %v507 = vpop.f32.mrf.mxu0
  %508 = vdwg.mxu0
  %v510 = vsel %vm427, %v37, 0
  %v513 = vsel %vm427, %v38, 0
  %515 = vmatprep.subr.mxu0 0.0
  %516 = vmatpush1.msra.mxu0 0.0
  %517 = vmatprep.subr.mxu0 0.0
  %518 = vmatpush1.msra.mxu0 0.0
  %519 = vmatprep.subr.mxu0 0.0
  %520 = vmatpush1.msra.mxu0 0.0
  %521 = vmatprep.subr.mxu0 0.0
  %522 = vmatpush1.msra.mxu0 0.0
  %523 = vmatprep.subr.mxu0 0.0
  %524 = vmatpush1.msra.mxu0 0.0
  %525 = vmatprep.subr.mxu0 0.0
  %526 = vmatpush1.msra.mxu0 0.0
  %527 = vmatprep.subr.mxu0 0.0
  %528 = vmatpush1.msra.mxu0 0.0
  %529 = vmatprep.subr.mxu0 0.0
  %530 = vmatpush1.msra.mxu0 0.0
  %531 = vmatprep.subr.mxu0 0.0
  %532 = vmatpush1.msra.mxu0 0.0
  %533 = vmatprep.subr.mxu0 0.0
  %534 = vmatpush1.msra.mxu0 0.0
  %535 = vmatprep.subr.mxu0 0.0
  %536 = vmatpush1.msra.mxu0 0.0
  %537 = vmatprep.subr.mxu0 0.0
  %538 = vmatpush1.msra.mxu0 0.0
  %539 = vmatprep.subr.mxu0 0.0
  %540 = vmatpush1.msra.mxu0 0.0
  %541 = vmatprep.subr.mxu0 0.0
  %542 = vmatpush1.msra.mxu0 0.0
  %543 = vmatprep.subr.mxu0 0.0
  %544 = vmatpush1.msra.mxu0 %v284
  %545 = vmatprep.subr.mxu0 0.0
  %546 = vmatpush1.msra.mxu0 %v279
  %547 = vmatprep.subr.mxu0 0.0
  %548 = vmatpush2.msra.mxu0 0.0
  %549 = vmatprep.subr.mxu0 0.0
  %550 = vmatpush2.msra.mxu0 0.0
  %551 = vmatprep.subr.mxu0 0.0
  %552 = vmatpush2.msra.mxu0 0.0
  %553 = vmatprep.subr.mxu0 0.0
  %554 = vmatpush2.msra.mxu0 0.0
  %555 = vmatprep.subr.mxu0 0.0
  %556 = vmatpush2.msra.mxu0 0.0
  %557 = vmatprep.subr.mxu0 0.0
  %558 = vmatpush2.msra.mxu0 0.0
  %559 = vmatprep.subr.mxu0 0.0
  %560 = vmatpush2.msra.mxu0 0.0
  %561 = vmatprep.subr.mxu0 0.0
  %562 = vmatpush2.msra.mxu0 0.0
  %563 = vmatprep.subr.mxu0 0.0
  %564 = vmatpush2.msra.mxu0 0.0
  %565 = vmatprep.subr.mxu0 0.0
  %566 = vmatpush2.msra.mxu0 0.0
  %567 = vmatprep.subr.mxu0 0.0
  %568 = vmatpush2.msra.mxu0 0.0
  %569 = vmatprep.subr.mxu0 0.0
  %570 = vmatpush2.msra.mxu0 0.0
  %571 = vmatprep.subr.mxu0 0.0
  %572 = vmatpush2.msra.mxu0 0.0
  %573 = vmatprep.subr.mxu0 0.0
  %574 = vmatpush2.msra.mxu0 0.0
  %575 = vmatprep.subr.mxu0 0.0
  %576 = vmatpush2.msra.mxu0 0.0
  %577 = vmatprep.subr.mxu0 0.0
  %578 = vmatpush2.msra.mxu0 0.0
  %579 = vmatprep.mubr.f32.mxu0 0.0
  %580 = vmatmul.mubr.f32.gmra.mxu0 %v510
  %v581 = vpop.f32.mrf.mxu0
  %v582 = vadd.f32 0.0, %v581
  %v583 = vpop.f32.mrf.mxu0
  %584 = vmatprep.mubr.f32.mxu0 0.0
  %585 = vmatmul.mubr.f32.gmra.mxu0 %v513
  %v586 = vpop.f32.mrf.mxu0
  %v587 = vadd.f32 0.0, %v586
  %v588 = vpop.f32.mrf.mxu0
  %589 = vdwg.mxu0
  %v591 = vsel %vm427, %v39, 0
  %v594 = vsel %vm427, %v40, 0
  %596 = vmatprep.subr.mxu0 0.0
  %597 = vmatpush1.msra.mxu0 0.0
  %598 = vmatprep.subr.mxu0 0.0
  %599 = vmatpush1.msra.mxu0 0.0
  %600 = vmatprep.subr.mxu0 0.0
  %601 = vmatpush1.msra.mxu0 0.0
  %602 = vmatprep.subr.mxu0 0.0
  %603 = vmatpush1.msra.mxu0 0.0
  %604 = vmatprep.subr.mxu0 0.0
  %605 = vmatpush1.msra.mxu0 0.0
  %606 = vmatprep.subr.mxu0 0.0
  %607 = vmatpush1.msra.mxu0 0.0
  %608 = vmatprep.subr.mxu0 0.0
  %609 = vmatpush1.msra.mxu0 0.0
  %610 = vmatprep.subr.mxu0 0.0
  %611 = vmatpush1.msra.mxu0 0.0
  %612 = vmatprep.subr.mxu0 0.0
  %613 = vmatpush1.msra.mxu0 0.0
  %614 = vmatprep.subr.mxu0 0.0
  %615 = vmatpush1.msra.mxu0 0.0
  %616 = vmatprep.subr.mxu0 0.0
  %617 = vmatpush1.msra.mxu0 0.0
  %618 = vmatprep.subr.mxu0 0.0
  %619 = vmatpush1.msra.mxu0 0.0
  %620 = vmatprep.subr.mxu0 0.0
  %621 = vmatpush1.msra.mxu0 0.0
  %622 = vmatprep.subr.mxu0 0.0
  %623 = vmatpush1.msra.mxu0 0.0
  %624 = vmatprep.subr.mxu0 0.0
  %625 = vmatpush1.msra.mxu0 %v294
  %626 = vmatprep.subr.mxu0 0.0
  %627 = vmatpush1.msra.mxu0 %v289
  %628 = vmatprep.subr.mxu0 0.0
  %629 = vmatpush2.msra.mxu0 0.0
  %630 = vmatprep.subr.mxu0 0.0
  %631 = vmatpush2.msra.mxu0 0.0
  %632 = vmatprep.subr.mxu0 0.0
  %633 = vmatpush2.msra.mxu0 0.0
  %634 = vmatprep.subr.mxu0 0.0
  %635 = vmatpush2.msra.mxu0 0.0
  %636 = vmatprep.subr.mxu0 0.0
  %637 = vmatpush2.msra.mxu0 0.0
  %638 = vmatprep.subr.mxu0 0.0
  %639 = vmatpush2.msra.mxu0 0.0
  %640 = vmatprep.subr.mxu0 0.0
  %641 = vmatpush2.msra.mxu0 0.0
  %642 = vmatprep.subr.mxu0 0.0
  %643 = vmatpush2.msra.mxu0 0.0
  %644 = vmatprep.subr.mxu0 0.0
  %645 = vmatpush2.msra.mxu0 0.0
  %646 = vmatprep.subr.mxu0 0.0
  %647 = vmatpush2.msra.mxu0 0.0
  %648 = vmatprep.subr.mxu0 0.0
  %649 = vmatpush2.msra.mxu0 0.0
  %650 = vmatprep.subr.mxu0 0.0
  %651 = vmatpush2.msra.mxu0 0.0
  %652 = vmatprep.subr.mxu0 0.0
  %653 = vmatpush2.msra.mxu0 0.0
  %654 = vmatprep.subr.mxu0 0.0
  %655 = vmatpush2.msra.mxu0 0.0
  %656 = vmatprep.subr.mxu0 0.0
  %657 = vmatpush2.msra.mxu0 0.0
  %658 = vmatprep.subr.mxu0 0.0
  %659 = vmatpush2.msra.mxu0 0.0
  %660 = vmatprep.mubr.f32.mxu0 0.0
  %661 = vmatmul.mubr.f32.gmra.mxu0 %v591
  %v662 = vpop.f32.mrf.mxu0
  %v663 = vadd.f32 0.0, %v662
  %v664 = vpop.f32.mrf.mxu0
  %665 = vmatprep.mubr.f32.mxu0 0.0
  %666 = vmatmul.mubr.f32.gmra.mxu0 %v594
  %v667 = vpop.f32.mrf.mxu0
  %v668 = vadd.f32 0.0, %v667
  %v669 = vpop.f32.mrf.mxu0
  %670 = vdwg.mxu0
  %v672 = vsel %vm427, %v41, 0
  %v675 = vsel %vm427, %v42, 0
  %677 = vmatprep.subr.mxu0 0.0
  %678 = vmatpush1.msra.mxu0 0.0
  %679 = vmatprep.subr.mxu0 0.0
  %680 = vmatpush1.msra.mxu0 0.0
  %681 = vmatprep.subr.mxu0 0.0
  %682 = vmatpush1.msra.mxu0 0.0
  %683 = vmatprep.subr.mxu0 0.0
  %684 = vmatpush1.msra.mxu0 0.0
  %685 = vmatprep.subr.mxu0 0.0
  %686 = vmatpush1.msra.mxu0 0.0
  %687 = vmatprep.subr.mxu0 0.0
  %688 = vmatpush1.msra.mxu0 0.0
  %689 = vmatprep.subr.mxu0 0.0
  %690 = vmatpush1.msra.mxu0 0.0
  %691 = vmatprep.subr.mxu0 0.0
  %692 = vmatpush1.msra.mxu0 0.0
  %693 = vmatprep.subr.mxu0 0.0
  %694 = vmatpush1.msra.mxu0 0.0
  %695 = vmatprep.subr.mxu0 0.0
  %696 = vmatpush1.msra.mxu0 0.0
  %697 = vmatprep.subr.mxu0 0.0
  %698 = vmatpush1.msra.mxu0 0.0
  %699 = vmatprep.subr.mxu0 0.0
  %700 = vmatpush1.msra.mxu0 0.0
  %701 = vmatprep.subr.mxu0 0.0
  %702 = vmatpush1.msra.mxu0 0.0
  %703 = vmatprep.subr.mxu0 0.0
  %704 = vmatpush1.msra.mxu0 0.0
  %705 = vmatprep.subr.mxu0 0.0
  %706 = vmatpush1.msra.mxu0 %v304
  %707 = vmatprep.subr.mxu0 0.0
  %708 = vmatpush1.msra.mxu0 %v299
  %709 = vmatprep.subr.mxu0 0.0
  %710 = vmatpush2.msra.mxu0 0.0
  %711 = vmatprep.subr.mxu0 0.0
  %712 = vmatpush2.msra.mxu0 0.0
  %713 = vmatprep.subr.mxu0 0.0
  %714 = vmatpush2.msra.mxu0 0.0
  %715 = vmatprep.subr.mxu0 0.0
  %716 = vmatpush2.msra.mxu0 0.0
  %717 = vmatprep.subr.mxu0 0.0
  %718 = vmatpush2.msra.mxu0 0.0
  %719 = vmatprep.subr.mxu0 0.0
  %720 = vmatpush2.msra.mxu0 0.0
  %721 = vmatprep.subr.mxu0 0.0
  %722 = vmatpush2.msra.mxu0 0.0
  %723 = vmatprep.subr.mxu0 0.0
  %724 = vmatpush2.msra.mxu0 0.0
  %725 = vmatprep.subr.mxu0 0.0
  %726 = vmatpush2.msra.mxu0 0.0
  %727 = vmatprep.subr.mxu0 0.0
  %728 = vmatpush2.msra.mxu0 0.0
  %729 = vmatprep.subr.mxu0 0.0
  %730 = vmatpush2.msra.mxu0 0.0
  %731 = vmatprep.subr.mxu0 0.0
  %732 = vmatpush2.msra.mxu0 0.0
  %733 = vmatprep.subr.mxu0 0.0
  %734 = vmatpush2.msra.mxu0 0.0
  %735 = vmatprep.subr.mxu0 0.0
  %736 = vmatpush2.msra.mxu0 0.0
  %737 = vmatprep.subr.mxu0 0.0
  %738 = vmatpush2.msra.mxu0 0.0
  %739 = vmatprep.subr.mxu0 0.0
  %740 = vmatpush2.msra.mxu0 0.0
  %741 = vmatprep.mubr.f32.mxu0 0.0
  %742 = vmatmul.mubr.f32.gmra.mxu0 %v672
  %v743 = vpop.f32.mrf.mxu0
  %v744 = vadd.f32 0.0, %v743
  %v745 = vpop.f32.mrf.mxu0
  %746 = vmatprep.mubr.f32.mxu0 0.0
  %747 = vmatmul.mubr.f32.gmra.mxu0 %v675
  %v748 = vpop.f32.mrf.mxu0
  %v749 = vadd.f32 0.0, %v748
  %v750 = vpop.f32.mrf.mxu0
  %751 = vdwg.mxu0
  %v753 = vsel %vm427, %v43, 0
  %v756 = vsel %vm427, %v44, 0
  %758 = vmatprep.subr.mxu0 0.0
  %759 = vmatpush1.msra.mxu0 0.0
  %760 = vmatprep.subr.mxu0 0.0
  %761 = vmatpush1.msra.mxu0 0.0
  %762 = vmatprep.subr.mxu0 0.0
  %763 = vmatpush1.msra.mxu0 0.0
  %764 = vmatprep.subr.mxu0 0.0
  %765 = vmatpush1.msra.mxu0 0.0
  %766 = vmatprep.subr.mxu0 0.0
  %767 = vmatpush1.msra.mxu0 0.0
  %768 = vmatprep.subr.mxu0 0.0
  %769 = vmatpush1.msra.mxu0 0.0
  %770 = vmatprep.subr.mxu0 0.0
  %771 = vmatpush1.msra.mxu0 0.0
  %772 = vmatprep.subr.mxu0 0.0
  %773 = vmatpush1.msra.mxu0 0.0
  %774 = vmatprep.subr.mxu0 0.0
  %775 = vmatpush1.msra.mxu0 0.0
  %776 = vmatprep.subr.mxu0 0.0
  %777 = vmatpush1.msra.mxu0 0.0
  %778 = vmatprep.subr.mxu0 0.0
  %779 = vmatpush1.msra.mxu0 0.0
  %780 = vmatprep.subr.mxu0 0.0
  %781 = vmatpush1.msra.mxu0 0.0
  %782 = vmatprep.subr.mxu0 0.0
  %783 = vmatpush1.msra.mxu0 0.0
  %784 = vmatprep.subr.mxu0 0.0
  %785 = vmatpush1.msra.mxu0 0.0
  %786 = vmatprep.subr.mxu0 0.0
  %787 = vmatpush1.msra.mxu0 %v314
  %788 = vmatprep.subr.mxu0 0.0
  %789 = vmatpush1.msra.mxu0 %v309
  %790 = vmatprep.subr.mxu0 0.0
  %791 = vmatpush2.msra.mxu0 0.0
  %792 = vmatprep.subr.mxu0 0.0
  %793 = vmatpush2.msra.mxu0 0.0
  %794 = vmatprep.subr.mxu0 0.0
  %795 = vmatpush2.msra.mxu0 0.0
  %796 = vmatprep.subr.mxu0 0.0
  %797 = vmatpush2.msra.mxu0 0.0
  %798 = vmatprep.subr.mxu0 0.0
  %799 = vmatpush2.msra.mxu0 0.0
  %800 = vmatprep.subr.mxu0 0.0
  %801 = vmatpush2.msra.mxu0 0.0
  %802 = vmatprep.subr.mxu0 0.0
  %803 = vmatpush2.msra.mxu0 0.0
  %804 = vmatprep.subr.mxu0 0.0
  %805 = vmatpush2.msra.mxu0 0.0
  %806 = vmatprep.subr.mxu0 0.0
  %807 = vmatpush2.msra.mxu0 0.0
  %808 = vmatprep.subr.mxu0 0.0
  %809 = vmatpush2.msra.mxu0 0.0
  %810 = vmatprep.subr.mxu0 0.0
  %811 = vmatpush2.msra.mxu0 0.0
  %812 = vmatprep.subr.mxu0 0.0
  %813 = vmatpush2.msra.mxu0 0.0
  %814 = vmatprep.subr.mxu0 0.0
  %815 = vmatpush2.msra.mxu0 0.0
  %816 = vmatprep.subr.mxu0 0.0
  %817 = vmatpush2.msra.mxu0 0.0
  %818 = vmatprep.subr.mxu0 0.0
  %819 = vmatpush2.msra.mxu0 0.0
  %820 = vmatprep.subr.mxu0 0.0
  %821 = vmatpush2.msra.mxu0 0.0
  %822 = vmatprep.mubr.f32.mxu0 0.0
  %823 = vmatmul.mubr.f32.gmra.mxu0 %v753
  %v824 = vpop.f32.mrf.mxu0
  %v825 = vadd.f32 0.0, %v824
  %v826 = vpop.f32.mrf.mxu0
  %827 = vmatprep.mubr.f32.mxu0 0.0
  %828 = vmatmul.mubr.f32.gmra.mxu0 %v756
  %v829 = vpop.f32.mrf.mxu0
  %v830 = vadd.f32 0.0, %v829
  %v831 = vpop.f32.mrf.mxu0
  %832 = vdwg.mxu0
  %v834 = vsel %vm427, %v45, 0
  %v837 = vsel %vm427, %v46, 0
  %839 = vmatprep.subr.mxu0 0.0
  %840 = vmatpush1.msra.mxu0 0.0
  %841 = vmatprep.subr.mxu0 0.0
  %842 = vmatpush1.msra.mxu0 0.0
  %843 = vmatprep.subr.mxu0 0.0
  %844 = vmatpush1.msra.mxu0 0.0
  %845 = vmatprep.subr.mxu0 0.0
  %846 = vmatpush1.msra.mxu0 0.0
  %847 = vmatprep.subr.mxu0 0.0
  %848 = vmatpush1.msra.mxu0 0.0
  %849 = vmatprep.subr.mxu0 0.0
  %850 = vmatpush1.msra.mxu0 0.0
  %851 = vmatprep.subr.mxu0 0.0
  %852 = vmatpush1.msra.mxu0 0.0
  %853 = vmatprep.subr.mxu0 0.0
  %854 = vmatpush1.msra.mxu0 0.0
  %855 = vmatprep.subr.mxu0 0.0
  %856 = vmatpush1.msra.mxu0 0.0
  %857 = vmatprep.subr.mxu0 0.0
  %858 = vmatpush1.msra.mxu0 0.0
  %859 = vmatprep.subr.mxu0 0.0
  %860 = vmatpush1.msra.mxu0 0.0
  %861 = vmatprep.subr.mxu0 0.0
  %862 = vmatpush1.msra.mxu0 0.0
  %863 = vmatprep.subr.mxu0 0.0
  %864 = vmatpush1.msra.mxu0 0.0
  %865 = vmatprep.subr.mxu0 0.0
  %866 = vmatpush1.msra.mxu0 0.0
  %867 = vmatprep.subr.mxu0 0.0
  %868 = vmatpush1.msra.mxu0 %v324
  %869 = vmatprep.subr.mxu0 0.0
  %870 = vmatpush1.msra.mxu0 %v319
  %871 = vmatprep.subr.mxu0 0.0
  %872 = vmatpush2.msra.mxu0 0.0
  %873 = vmatprep.subr.mxu0 0.0
  %874 = vmatpush2.msra.mxu0 0.0
  %875 = vmatprep.subr.mxu0 0.0
  %876 = vmatpush2.msra.mxu0 0.0
  %877 = vmatprep.subr.mxu0 0.0
  %878 = vmatpush2.msra.mxu0 0.0
  %879 = vmatprep.subr.mxu0 0.0
  %880 = vmatpush2.msra.mxu0 0.0
  %881 = vmatprep.subr.mxu0 0.0
  %882 = vmatpush2.msra.mxu0 0.0
  %883 = vmatprep.subr.mxu0 0.0
  %884 = vmatpush2.msra.mxu0 0.0
  %885 = vmatprep.subr.mxu0 0.0
  %886 = vmatpush2.msra.mxu0 0.0
  %887 = vmatprep.subr.mxu0 0.0
  %888 = vmatpush2.msra.mxu0 0.0
  %889 = vmatprep.subr.mxu0 0.0
  %890 = vmatpush2.msra.mxu0 0.0
  %891 = vmatprep.subr.mxu0 0.0
  %892 = vmatpush2.msra.mxu0 0.0
  %893 = vmatprep.subr.mxu0 0.0
  %894 = vmatpush2.msra.mxu0 0.0
  %895 = vmatprep.subr.mxu0 0.0
  %896 = vmatpush2.msra.mxu0 0.0
  %897 = vmatprep.subr.mxu0 0.0
  %898 = vmatpush2.msra.mxu0 0.0
  %899 = vmatprep.subr.mxu0 0.0
  %900 = vmatpush2.msra.mxu0 0.0
  %901 = vmatprep.subr.mxu0 0.0
  %902 = vmatpush2.msra.mxu0 0.0
  %903 = vmatprep.mubr.f32.mxu0 0.0
  %904 = vmatmul.mubr.f32.gmra.mxu0 %v834
  %v905 = vpop.f32.mrf.mxu0
  %v906 = vadd.f32 0.0, %v905
  %v907 = vpop.f32.mrf.mxu0
  %908 = vmatprep.mubr.f32.mxu0 0.0
  %909 = vmatmul.mubr.f32.gmra.mxu0 %v837
  %v910 = vpop.f32.mrf.mxu0
  %v911 = vadd.f32 0.0, %v910
  %v912 = vpop.f32.mrf.mxu0
  %913 = vdwg.mxu0
  %v915 = vsel %vm427, %v47, 0
  %v918 = vsel %vm427, %v48, 0
  %920 = vmatprep.subr.mxu0 0.0
  %921 = vmatpush1.msra.mxu0 0.0
  %922 = vmatprep.subr.mxu0 0.0
  %923 = vmatpush1.msra.mxu0 0.0
  %924 = vmatprep.subr.mxu0 0.0
  %925 = vmatpush1.msra.mxu0 0.0
  %926 = vmatprep.subr.mxu0 0.0
  %927 = vmatpush1.msra.mxu0 0.0
  %928 = vmatprep.subr.mxu0 0.0
  %929 = vmatpush1.msra.mxu0 0.0
  %930 = vmatprep.subr.mxu0 0.0
  %931 = vmatpush1.msra.mxu0 0.0
  %932 = vmatprep.subr.mxu0 0.0
  %933 = vmatpush1.msra.mxu0 0.0
  %934 = vmatprep.subr.mxu0 0.0
  %935 = vmatpush1.msra.mxu0 0.0
  %936 = vmatprep.subr.mxu0 0.0
  %937 = vmatpush1.msra.mxu0 0.0
  %938 = vmatprep.subr.mxu0 0.0
  %939 = vmatpush1.msra.mxu0 0.0
  %940 = vmatprep.subr.mxu0 0.0
  %941 = vmatpush1.msra.mxu0 0.0
  %942 = vmatprep.subr.mxu0 0.0
  %943 = vmatpush1.msra.mxu0 0.0
  %944 = vmatprep.subr.mxu0 0.0
  %945 = vmatpush1.msra.mxu0 0.0
  %946 = vmatprep.subr.mxu0 0.0
  %947 = vmatpush1.msra.mxu0 0.0
  %948 = vmatprep.subr.mxu0 0.0
  %949 = vmatpush1.msra.mxu0 %v334
  %950 = vmatprep.subr.mxu0 0.0
  %951 = vmatpush1.msra.mxu0 %v329
  %952 = vmatprep.subr.mxu0 0.0
  %953 = vmatpush2.msra.mxu0 0.0
  %954 = vmatprep.subr.mxu0 0.0
  %955 = vmatpush2.msra.mxu0 0.0
  %956 = vmatprep.subr.mxu0 0.0
  %957 = vmatpush2.msra.mxu0 0.0
  %958 = vmatprep.subr.mxu0 0.0
  %959 = vmatpush2.msra.mxu0 0.0
  %960 = vmatprep.subr.mxu0 0.0
  %961 = vmatpush2.msra.mxu0 0.0
  %962 = vmatprep.subr.mxu0 0.0
  %963 = vmatpush2.msra.mxu0 0.0
  %964 = vmatprep.subr.mxu0 0.0
  %965 = vmatpush2.msra.mxu0 0.0
  %966 = vmatprep.subr.mxu0 0.0
  %967 = vmatpush2.msra.mxu0 0.0
  %968 = vmatprep.subr.mxu0 0.0
  %969 = vmatpush2.msra.mxu0 0.0
  %970 = vmatprep.subr.mxu0 0.0
  %971 = vmatpush2.msra.mxu0 0.0
  %972 = vmatprep.subr.mxu0 0.0
  %973 = vmatpush2.msra.mxu0 0.0
  %974 = vmatprep.subr.mxu0 0.0
  %975 = vmatpush2.msra.mxu0 0.0
  %976 = vmatprep.subr.mxu0 0.0
  %977 = vmatpush2.msra.mxu0 0.0
  %978 = vmatprep.subr.mxu0 0.0
  %979 = vmatpush2.msra.mxu0 0.0
  %980 = vmatprep.subr.mxu0 0.0
  %981 = vmatpush2.msra.mxu0 0.0
  %982 = vmatprep.subr.mxu0 0.0
  %983 = vmatpush2.msra.mxu0 0.0
  %984 = vmatprep.mubr.f32.mxu0 0.0
  %985 = vmatmul.mubr.f32.gmra.mxu0 %v915
  %v986 = vpop.f32.mrf.mxu0
  %v987 = vadd.f32 0.0, %v986
  %v988 = vpop.f32.mrf.mxu0
  %989 = vmatprep.mubr.f32.mxu0 0.0
  %990 = vmatmul.mubr.f32.gmra.mxu0 %v918
  %v991 = vpop.f32.mrf.mxu0
  %v992 = vadd.f32 0.0, %v991
  %v993 = vpop.f32.mrf.mxu0
  %994 = vdwg.mxu0
  %v996 = vsel %vm427, %v49, 0
  %v999 = vsel %vm427, %v50, 0
  %1001 = vmatprep.subr.mxu0 0.0
  %1002 = vmatpush1.msra.mxu0 0.0
  %1003 = vmatprep.subr.mxu0 0.0
  %1004 = vmatpush1.msra.mxu0 0.0
  %1005 = vmatprep.subr.mxu0 0.0
  %1006 = vmatpush1.msra.mxu0 0.0
  %1007 = vmatprep.subr.mxu0 0.0
  %1008 = vmatpush1.msra.mxu0 0.0
  %1009 = vmatprep.subr.mxu0 0.0
  %1010 = vmatpush1.msra.mxu0 0.0
  %1011 = vmatprep.subr.mxu0 0.0
  %1012 = vmatpush1.msra.mxu0 0.0
  %1013 = vmatprep.subr.mxu0 0.0
  %1014 = vmatpush1.msra.mxu0 0.0
  %1015 = vmatprep.subr.mxu0 0.0
  %1016 = vmatpush1.msra.mxu0 0.0
  %1017 = vmatprep.subr.mxu0 0.0
  %1018 = vmatpush1.msra.mxu0 0.0
  %1019 = vmatprep.subr.mxu0 0.0
  %1020 = vmatpush1.msra.mxu0 0.0
  %1021 = vmatprep.subr.mxu0 0.0
  %1022 = vmatpush1.msra.mxu0 0.0
  %1023 = vmatprep.subr.mxu0 0.0
  %1024 = vmatpush1.msra.mxu0 0.0
  %1025 = vmatprep.subr.mxu0 0.0
  %1026 = vmatpush1.msra.mxu0 0.0
  %1027 = vmatprep.subr.mxu0 0.0
  %1028 = vmatpush1.msra.mxu0 0.0
  %1029 = vmatprep.subr.mxu0 0.0
  %1030 = vmatpush1.msra.mxu0 %v344
  %1031 = vmatprep.subr.mxu0 0.0
  %1032 = vmatpush1.msra.mxu0 %v339
  %1033 = vmatprep.subr.mxu0 0.0
  %1034 = vmatpush2.msra.mxu0 0.0
  %1035 = vmatprep.subr.mxu0 0.0
  %1036 = vmatpush2.msra.mxu0 0.0
  %1037 = vmatprep.subr.mxu0 0.0
  %1038 = vmatpush2.msra.mxu0 0.0
  %1039 = vmatprep.subr.mxu0 0.0
  %1040 = vmatpush2.msra.mxu0 0.0
  %1041 = vmatprep.subr.mxu0 0.0
  %1042 = vmatpush2.msra.mxu0 0.0
  %1043 = vmatprep.subr.mxu0 0.0
  %1044 = vmatpush2.msra.mxu0 0.0
  %1045 = vmatprep.subr.mxu0 0.0
  %1046 = vmatpush2.msra.mxu0 0.0
  %1047 = vmatprep.subr.mxu0 0.0
  %1048 = vmatpush2.msra.mxu0 0.0
  %1049 = vmatprep.subr.mxu0 0.0
  %1050 = vmatpush2.msra.mxu0 0.0
  %1051 = vmatprep.subr.mxu0 0.0
  %1052 = vmatpush2.msra.mxu0 0.0
  %1053 = vmatprep.subr.mxu0 0.0
  %1054 = vmatpush2.msra.mxu0 0.0
  %1055 = vmatprep.subr.mxu0 0.0
  %1056 = vmatpush2.msra.mxu0 0.0
  %1057 = vmatprep.subr.mxu0 0.0
  %1058 = vmatpush2.msra.mxu0 0.0
  %1059 = vmatprep.subr.mxu0 0.0
  %1060 = vmatpush2.msra.mxu0 0.0
  %1061 = vmatprep.subr.mxu0 0.0
  %1062 = vmatpush2.msra.mxu0 0.0
  %1063 = vmatprep.subr.mxu0 0.0
  %1064 = vmatpush2.msra.mxu0 0.0
  %1065 = vmatprep.mubr.f32.mxu0 0.0
  %1066 = vmatmul.mubr.f32.gmra.mxu0 %v996
  %v1067 = vpop.f32.mrf.mxu0
  %v1068 = vadd.f32 0.0, %v1067
  %v1069 = vpop.f32.mrf.mxu0
  %1070 = vmatprep.mubr.f32.mxu0 0.0
  %1071 = vmatmul.mubr.f32.gmra.mxu0 %v999
  %v1072 = vpop.f32.mrf.mxu0
  %v1073 = vadd.f32 0.0, %v1072
  %v1074 = vpop.f32.mrf.mxu0
  %1075 = vdwg.mxu0
  %v1077 = vsel %vm427, %v51, 0
  %v1080 = vsel %vm427, %v52, 0
  %1082 = vmatprep.subr.mxu0 0.0
  %1083 = vmatpush1.msra.mxu0 0.0
  %1084 = vmatprep.subr.mxu0 0.0
  %1085 = vmatpush1.msra.mxu0 0.0
  %1086 = vmatprep.subr.mxu0 0.0
  %1087 = vmatpush1.msra.mxu0 0.0
  %1088 = vmatprep.subr.mxu0 0.0
  %1089 = vmatpush1.msra.mxu0 0.0
  %1090 = vmatprep.subr.mxu0 0.0
  %1091 = vmatpush1.msra.mxu0 0.0
  %1092 = vmatprep.subr.mxu0 0.0
  %1093 = vmatpush1.msra.mxu0 0.0
  %1094 = vmatprep.subr.mxu0 0.0
  %1095 = vmatpush1.msra.mxu0 0.0
  %1096 = vmatprep.subr.mxu0 0.0
  %1097 = vmatpush1.msra.mxu0 0.0
  %1098 = vmatprep.subr.mxu0 0.0
  %1099 = vmatpush1.msra.mxu0 0.0
  %1100 = vmatprep.subr.mxu0 0.0
  %1101 = vmatpush1.msra.mxu0 0.0
  %1102 = vmatprep.subr.mxu0 0.0
  %1103 = vmatpush1.msra.mxu0 0.0
  %1104 = vmatprep.subr.mxu0 0.0
  %1105 = vmatpush1.msra.mxu0 0.0
  %1106 = vmatprep.subr.mxu0 0.0
  %1107 = vmatpush1.msra.mxu0 0.0
  %1108 = vmatprep.subr.mxu0 0.0
  %1109 = vmatpush1.msra.mxu0 0.0
  %1110 = vmatprep.subr.mxu0 0.0
  %1111 = vmatpush1.msra.mxu0 %v354
  %1112 = vmatprep.subr.mxu0 0.0
  %1113 = vmatpush1.msra.mxu0 %v349
  %1114 = vmatprep.subr.mxu0 0.0
  %1115 = vmatpush2.msra.mxu0 0.0
  %1116 = vmatprep.subr.mxu0 0.0
  %1117 = vmatpush2.msra.mxu0 0.0
  %1118 = vmatprep.subr.mxu0 0.0
  %1119 = vmatpush2.msra.mxu0 0.0
  %1120 = vmatprep.subr.mxu0 0.0
  %1121 = vmatpush2.msra.mxu0 0.0
  %1122 = vmatprep.subr.mxu0 0.0
  %1123 = vmatpush2.msra.mxu0 0.0
  %1124 = vmatprep.subr.mxu0 0.0
  %1125 = vmatpush2.msra.mxu0 0.0
  %1126 = vmatprep.subr.mxu0 0.0
  %1127 = vmatpush2.msra.mxu0 0.0
  %1128 = vmatprep.subr.mxu0 0.0
  %1129 = vmatpush2.msra.mxu0 0.0
  %1130 = vmatprep.subr.mxu0 0.0
  %1131 = vmatpush2.msra.mxu0 0.0
  %1132 = vmatprep.subr.mxu0 0.0
  %1133 = vmatpush2.msra.mxu0 0.0
  %1134 = vmatprep.subr.mxu0 0.0
  %1135 = vmatpush2.msra.mxu0 0.0
  %1136 = vmatprep.subr.mxu0 0.0
  %1137 = vmatpush2.msra.mxu0 0.0
  %1138 = vmatprep.subr.mxu0 0.0
  %1139 = vmatpush2.msra.mxu0 0.0
  %1140 = vmatprep.subr.mxu0 0.0
  %1141 = vmatpush2.msra.mxu0 0.0
  %1142 = vmatprep.subr.mxu0 0.0
  %1143 = vmatpush2.msra.mxu0 0.0
  %1144 = vmatprep.subr.mxu0 0.0
  %1145 = vmatpush2.msra.mxu0 0.0
  %1146 = vmatprep.mubr.f32.mxu0 0.0
  %1147 = vmatmul.mubr.f32.gmra.mxu0 %v1077
  %v1148 = vpop.f32.mrf.mxu0
  %v1149 = vadd.f32 0.0, %v1148
  %v1150 = vpop.f32.mrf.mxu0
  %1151 = vmatprep.mubr.f32.mxu0 0.0
  %1152 = vmatmul.mubr.f32.gmra.mxu0 %v1080
  %v1153 = vpop.f32.mrf.mxu0
  %v1154 = vadd.f32 0.0, %v1153
  %v1155 = vpop.f32.mrf.mxu0
  %1156 = vdwg.mxu0
  %v1158 = vsel %vm427, %v53, 0
  %v1161 = vsel %vm427, %v54, 0
  %1163 = vmatprep.subr.mxu0 0.0
  %1164 = vmatpush1.msra.mxu0 0.0
  %1165 = vmatprep.subr.mxu0 0.0
  %1166 = vmatpush1.msra.mxu0 0.0
  %1167 = vmatprep.subr.mxu0 0.0
  %1168 = vmatpush1.msra.mxu0 0.0
  %1169 = vmatprep.subr.mxu0 0.0
  %1170 = vmatpush1.msra.mxu0 0.0
  %1171 = vmatprep.subr.mxu0 0.0
  %1172 = vmatpush1.msra.mxu0 0.0
  %1173 = vmatprep.subr.mxu0 0.0
  %1174 = vmatpush1.msra.mxu0 0.0
  %1175 = vmatprep.subr.mxu0 0.0
  %1176 = vmatpush1.msra.mxu0 0.0
  %1177 = vmatprep.subr.mxu0 0.0
  %1178 = vmatpush1.msra.mxu0 0.0
  %1179 = vmatprep.subr.mxu0 0.0
  %1180 = vmatpush1.msra.mxu0 0.0
  %1181 = vmatprep.subr.mxu0 0.0
  %1182 = vmatpush1.msra.mxu0 0.0
  %1183 = vmatprep.subr.mxu0 0.0
  %1184 = vmatpush1.msra.mxu0 0.0
  %1185 = vmatprep.subr.mxu0 0.0
  %1186 = vmatpush1.msra.mxu0 0.0
  %1187 = vmatprep.subr.mxu0 0.0
  %1188 = vmatpush1.msra.mxu0 0.0
  %1189 = vmatprep.subr.mxu0 0.0
  %1190 = vmatpush1.msra.mxu0 0.0
  %1191 = vmatprep.subr.mxu0 0.0
  %1192 = vmatpush1.msra.mxu0 %v364
  %1193 = vmatprep.subr.mxu0 0.0
  %1194 = vmatpush1.msra.mxu0 %v359
  %1195 = vmatprep.subr.mxu0 0.0
  %1196 = vmatpush2.msra.mxu0 0.0
  %1197 = vmatprep.subr.mxu0 0.0
  %1198 = vmatpush2.msra.mxu0 0.0
  %1199 = vmatprep.subr.mxu0 0.0
  %1200 = vmatpush2.msra.mxu0 0.0
  %1201 = vmatprep.subr.mxu0 0.0
  %1202 = vmatpush2.msra.mxu0 0.0
  %1203 = vmatprep.subr.mxu0 0.0
  %1204 = vmatpush2.msra.mxu0 0.0
  %1205 = vmatprep.subr.mxu0 0.0
  %1206 = vmatpush2.msra.mxu0 0.0
  %1207 = vmatprep.subr.mxu0 0.0
  %1208 = vmatpush2.msra.mxu0 0.0
  %1209 = vmatprep.subr.mxu0 0.0
  %1210 = vmatpush2.msra.mxu0 0.0
  %1211 = vmatprep.subr.mxu0 0.0
  %1212 = vmatpush2.msra.mxu0 0.0
  %1213 = vmatprep.subr.mxu0 0.0
  %1214 = vmatpush2.msra.mxu0 0.0
  %1215 = vmatprep.subr.mxu0 0.0
  %1216 = vmatpush2.msra.mxu0 0.0
  %1217 = vmatprep.subr.mxu0 0.0
  %1218 = vmatpush2.msra.mxu0 0.0
  %1219 = vmatprep.subr.mxu0 0.0
  %1220 = vmatpush2.msra.mxu0 0.0
  %1221 = vmatprep.subr.mxu0 0.0
  %1222 = vmatpush2.msra.mxu0 0.0
  %1223 = vmatprep.subr.mxu0 0.0
  %1224 = vmatpush2.msra.mxu0 0.0
  %1225 = vmatprep.subr.mxu0 0.0
  %1226 = vmatpush2.msra.mxu0 0.0
  %1227 = vmatprep.mubr.f32.mxu0 0.0
  %1228 = vmatmul.mubr.f32.gmra.mxu0 %v1158
  %v1229 = vpop.f32.mrf.mxu0
  %v1230 = vadd.f32 0.0, %v1229
  %v1231 = vpop.f32.mrf.mxu0
  %1232 = vmatprep.mubr.f32.mxu0 0.0
  %1233 = vmatmul.mubr.f32.gmra.mxu0 %v1161
  %v1234 = vpop.f32.mrf.mxu0
  %v1235 = vadd.f32 0.0, %v1234
  %v1236 = vpop.f32.mrf.mxu0
  %1237 = vdwg.mxu0
  %v1239 = vsel %vm427, %v55, 0
  %v1242 = vsel %vm427, %v56, 0
  %1244 = vmatprep.subr.mxu0 0.0
  %1245 = vmatpush1.msra.mxu0 0.0
  %1246 = vmatprep.subr.mxu0 0.0
  %1247 = vmatpush1.msra.mxu0 0.0
  %1248 = vmatprep.subr.mxu0 0.0
  %1249 = vmatpush1.msra.mxu0 0.0
  %1250 = vmatprep.subr.mxu0 0.0
  %1251 = vmatpush1.msra.mxu0 0.0
  %1252 = vmatprep.subr.mxu0 0.0
  %1253 = vmatpush1.msra.mxu0 0.0
  %1254 = vmatprep.subr.mxu0 0.0
  %1255 = vmatpush1.msra.mxu0 0.0
  %1256 = vmatprep.subr.mxu0 0.0
  %1257 = vmatpush1.msra.mxu0 0.0
  %1258 = vmatprep.subr.mxu0 0.0
  %1259 = vmatpush1.msra.mxu0 0.0
  %1260 = vmatprep.subr.mxu0 0.0
  %1261 = vmatpush1.msra.mxu0 0.0
  %1262 = vmatprep.subr.mxu0 0.0
  %1263 = vmatpush1.msra.mxu0 0.0
  %1264 = vmatprep.subr.mxu0 0.0
  %1265 = vmatpush1.msra.mxu0 0.0
  %1266 = vmatprep.subr.mxu0 0.0
  %1267 = vmatpush1.msra.mxu0 0.0
  %1268 = vmatprep.subr.mxu0 0.0
  %1269 = vmatpush1.msra.mxu0 0.0
  %1270 = vmatprep.subr.mxu0 0.0
  %1271 = vmatpush1.msra.mxu0 0.0
  %1272 = vmatprep.subr.mxu0 0.0
  %1273 = vmatpush1.msra.mxu0 %v374
  %1274 = vmatprep.subr.mxu0 0.0
  %1275 = vmatpush1.msra.mxu0 %v369
  %1276 = vmatprep.subr.mxu0 0.0
  %1277 = vmatpush2.msra.mxu0 0.0
  %1278 = vmatprep.subr.mxu0 0.0
  %1279 = vmatpush2.msra.mxu0 0.0
  %1280 = vmatprep.subr.mxu0 0.0
  %1281 = vmatpush2.msra.mxu0 0.0
  %1282 = vmatprep.subr.mxu0 0.0
  %1283 = vmatpush2.msra.mxu0 0.0
  %1284 = vmatprep.subr.mxu0 0.0
  %1285 = vmatpush2.msra.mxu0 0.0
  %1286 = vmatprep.subr.mxu0 0.0
  %1287 = vmatpush2.msra.mxu0 0.0
  %1288 = vmatprep.subr.mxu0 0.0
  %1289 = vmatpush2.msra.mxu0 0.0
  %1290 = vmatprep.subr.mxu0 0.0
  %1291 = vmatpush2.msra.mxu0 0.0
  %1292 = vmatprep.subr.mxu0 0.0
  %1293 = vmatpush2.msra.mxu0 0.0
  %1294 = vmatprep.subr.mxu0 0.0
  %1295 = vmatpush2.msra.mxu0 0.0
  %1296 = vmatprep.subr.mxu0 0.0
  %1297 = vmatpush2.msra.mxu0 0.0
  %1298 = vmatprep.subr.mxu0 0.0
  %1299 = vmatpush2.msra.mxu0 0.0
  %1300 = vmatprep.subr.mxu0 0.0
  %1301 = vmatpush2.msra.mxu0 0.0
  %1302 = vmatprep.subr.mxu0 0.0
  %1303 = vmatpush2.msra.mxu0 0.0
  %1304 = vmatprep.subr.mxu0 0.0
  %1305 = vmatpush2.msra.mxu0 0.0
  %1306 = vmatprep.subr.mxu0 0.0
  %1307 = vmatpush2.msra.mxu0 0.0
  %1308 = vmatprep.mubr.f32.mxu0 0.0
  %1309 = vmatmul.mubr.f32.gmra.mxu0 %v1239
  %v1310 = vpop.f32.mrf.mxu0
  %v1311 = vadd.f32 0.0, %v1310
  %v1312 = vpop.f32.mrf.mxu0
  %1313 = vmatprep.mubr.f32.mxu0 0.0
  %1314 = vmatmul.mubr.f32.gmra.mxu0 %v1242
  %v1315 = vpop.f32.mrf.mxu0
  %v1316 = vadd.f32 0.0, %v1315
  %v1317 = vpop.f32.mrf.mxu0
  %1318 = vdwg.mxu0
  %v1320 = vsel %vm427, %v57, 0
  %v1323 = vsel %vm427, %v58, 0
  %1325 = vmatprep.subr.mxu0 0.0
  %1326 = vmatpush1.msra.mxu0 0.0
  %1327 = vmatprep.subr.mxu0 0.0
  %1328 = vmatpush1.msra.mxu0 0.0
  %1329 = vmatprep.subr.mxu0 0.0
  %1330 = vmatpush1.msra.mxu0 0.0
  %1331 = vmatprep.subr.mxu0 0.0
  %1332 = vmatpush1.msra.mxu0 0.0
  %1333 = vmatprep.subr.mxu0 0.0
  %1334 = vmatpush1.msra.mxu0 0.0
  %1335 = vmatprep.subr.mxu0 0.0
  %1336 = vmatpush1.msra.mxu0 0.0
  %1337 = vmatprep.subr.mxu0 0.0
  %1338 = vmatpush1.msra.mxu0 0.0
  %1339 = vmatprep.subr.mxu0 0.0
  %1340 = vmatpush1.msra.mxu0 0.0
  %1341 = vmatprep.subr.mxu0 0.0
  %1342 = vmatpush1.msra.mxu0 0.0
  %1343 = vmatprep.subr.mxu0 0.0
  %1344 = vmatpush1.msra.mxu0 0.0
  %1345 = vmatprep.subr.mxu0 0.0
  %1346 = vmatpush1.msra.mxu0 0.0
  %1347 = vmatprep.subr.mxu0 0.0
  %1348 = vmatpush1.msra.mxu0 0.0
  %1349 = vmatprep.subr.mxu0 0.0
  %1350 = vmatpush1.msra.mxu0 0.0
  %1351 = vmatprep.subr.mxu0 0.0
  %1352 = vmatpush1.msra.mxu0 0.0
  %1353 = vmatprep.subr.mxu0 0.0
  %1354 = vmatpush1.msra.mxu0 %v384
  %1355 = vmatprep.subr.mxu0 0.0
  %1356 = vmatpush1.msra.mxu0 %v379
  %1357 = vmatprep.subr.mxu0 0.0
  %1358 = vmatpush2.msra.mxu0 0.0
  %1359 = vmatprep.subr.mxu0 0.0
  %1360 = vmatpush2.msra.mxu0 0.0
  %1361 = vmatprep.subr.mxu0 0.0
  %1362 = vmatpush2.msra.mxu0 0.0
  %1363 = vmatprep.subr.mxu0 0.0
  %1364 = vmatpush2.msra.mxu0 0.0
  %1365 = vmatprep.subr.mxu0 0.0
  %1366 = vmatpush2.msra.mxu0 0.0
  %1367 = vmatprep.subr.mxu0 0.0
  %1368 = vmatpush2.msra.mxu0 0.0
  %1369 = vmatprep.subr.mxu0 0.0
  %1370 = vmatpush2.msra.mxu0 0.0
  %1371 = vmatprep.subr.mxu0 0.0
  %1372 = vmatpush2.msra.mxu0 0.0
  %1373 = vmatprep.subr.mxu0 0.0
  %1374 = vmatpush2.msra.mxu0 0.0
  %1375 = vmatprep.subr.mxu0 0.0
  %1376 = vmatpush2.msra.mxu0 0.0
  %1377 = vmatprep.subr.mxu0 0.0
  %1378 = vmatpush2.msra.mxu0 0.0
  %1379 = vmatprep.subr.mxu0 0.0
  %1380 = vmatpush2.msra.mxu0 0.0
  %1381 = vmatprep.subr.mxu0 0.0
  %1382 = vmatpush2.msra.mxu0 0.0
  %1383 = vmatprep.subr.mxu0 0.0
  %1384 = vmatpush2.msra.mxu0 0.0
  %1385 = vmatprep.subr.mxu0 0.0
  %1386 = vmatpush2.msra.mxu0 0.0
  %1387 = vmatprep.subr.mxu0 0.0
  %1388 = vmatpush2.msra.mxu0 0.0
  %1389 = vmatprep.mubr.f32.mxu0 0.0
  %1390 = vmatmul.mubr.f32.gmra.mxu0 %v1320
  %v1391 = vpop.f32.mrf.mxu0
  %v1392 = vadd.f32 0.0, %v1391
  %v1393 = vpop.f32.mrf.mxu0
  %1394 = vmatprep.mubr.f32.mxu0 0.0
  %1395 = vmatmul.mubr.f32.gmra.mxu0 %v1323
  %v1396 = vpop.f32.mrf.mxu0
  %v1397 = vadd.f32 0.0, %v1396
  %v1398 = vpop.f32.mrf.mxu0
  %1399 = vdwg.mxu0
  %v1401 = vsel %vm427, %v59, 0
  %v1404 = vsel %vm427, %v60, 0
  %1406 = vmatprep.subr.mxu0 0.0
  %1407 = vmatpush1.msra.mxu0 0.0
  %1408 = vmatprep.subr.mxu0 0.0
  %1409 = vmatpush1.msra.mxu0 0.0
  %1410 = vmatprep.subr.mxu0 0.0
  %1411 = vmatpush1.msra.mxu0 0.0
  %1412 = vmatprep.subr.mxu0 0.0
  %1413 = vmatpush1.msra.mxu0 0.0
  %1414 = vmatprep.subr.mxu0 0.0
  %1415 = vmatpush1.msra.mxu0 0.0
  %1416 = vmatprep.subr.mxu0 0.0
  %1417 = vmatpush1.msra.mxu0 0.0
  %1418 = vmatprep.subr.mxu0 0.0
  %1419 = vmatpush1.msra.mxu0 0.0
  %1420 = vmatprep.subr.mxu0 0.0
  %1421 = vmatpush1.msra.mxu0 0.0
  %1422 = vmatprep.subr.mxu0 0.0
  %1423 = vmatpush1.msra.mxu0 0.0
  %1424 = vmatprep.subr.mxu0 0.0
  %1425 = vmatpush1.msra.mxu0 0.0
  %1426 = vmatprep.subr.mxu0 0.0
  %1427 = vmatpush1.msra.mxu0 0.0
  %1428 = vmatprep.subr.mxu0 0.0
  %1429 = vmatpush1.msra.mxu0 0.0
  %1430 = vmatprep.subr.mxu0 0.0
  %1431 = vmatpush1.msra.mxu0 0.0
  %1432 = vmatprep.subr.mxu0 0.0
  %1433 = vmatpush1.msra.mxu0 0.0
  %1434 = vmatprep.subr.mxu0 0.0
  %1435 = vmatpush1.msra.mxu0 %v394
  %1436 = vmatprep.subr.mxu0 0.0
  %1437 = vmatpush1.msra.mxu0 %v389
  %1438 = vmatprep.subr.mxu0 0.0
  %1439 = vmatpush2.msra.mxu0 0.0
  %1440 = vmatprep.subr.mxu0 0.0
  %1441 = vmatpush2.msra.mxu0 0.0
  %1442 = vmatprep.subr.mxu0 0.0
  %1443 = vmatpush2.msra.mxu0 0.0
  %1444 = vmatprep.subr.mxu0 0.0
  %1445 = vmatpush2.msra.mxu0 0.0
  %1446 = vmatprep.subr.mxu0 0.0
  %1447 = vmatpush2.msra.mxu0 0.0
  %1448 = vmatprep.subr.mxu0 0.0
  %1449 = vmatpush2.msra.mxu0 0.0
  %1450 = vmatprep.subr.mxu0 0.0
  %1451 = vmatpush2.msra.mxu0 0.0
  %1452 = vmatprep.subr.mxu0 0.0
  %1453 = vmatpush2.msra.mxu0 0.0
  %1454 = vmatprep.subr.mxu0 0.0
  %1455 = vmatpush2.msra.mxu0 0.0
  %1456 = vmatprep.subr.mxu0 0.0
  %1457 = vmatpush2.msra.mxu0 0.0
  %1458 = vmatprep.subr.mxu0 0.0
  %1459 = vmatpush2.msra.mxu0 0.0
  %1460 = vmatprep.subr.mxu0 0.0
  %1461 = vmatpush2.msra.mxu0 0.0
  %1462 = vmatprep.subr.mxu0 0.0
  %1463 = vmatpush2.msra.mxu0 0.0
  %1464 = vmatprep.subr.mxu0 0.0
  %1465 = vmatpush2.msra.mxu0 0.0
  %1466 = vmatprep.subr.mxu0 0.0
  %1467 = vmatpush2.msra.mxu0 0.0
  %1468 = vmatprep.subr.mxu0 0.0
  %1469 = vmatpush2.msra.mxu0 0.0
  %1470 = vmatprep.mubr.f32.mxu0 0.0
  %1471 = vmatmul.mubr.f32.gmra.mxu0 %v1401
  %v1472 = vpop.f32.mrf.mxu0
  %v1473 = vadd.f32 0.0, %v1472
  %v1474 = vpop.f32.mrf.mxu0
  %1475 = vmatprep.mubr.f32.mxu0 0.0
  %1476 = vmatmul.mubr.f32.gmra.mxu0 %v1404
  %v1477 = vpop.f32.mrf.mxu0
  %v1478 = vadd.f32 0.0, %v1477
  %v1479 = vpop.f32.mrf.mxu0
  %1480 = vdwg.mxu0
  %v1482 = vsel %vm427, %v61, 0
  %v1485 = vsel %vm427, %v62, 0
  %1487 = vmatprep.subr.mxu0 0.0
  %1488 = vmatpush1.msra.mxu0 0.0
  %1489 = vmatprep.subr.mxu0 0.0
  %1490 = vmatpush1.msra.mxu0 0.0
  %1491 = vmatprep.subr.mxu0 0.0
  %1492 = vmatpush1.msra.mxu0 0.0
  %1493 = vmatprep.subr.mxu0 0.0
  %1494 = vmatpush1.msra.mxu0 0.0
  %1495 = vmatprep.subr.mxu0 0.0
  %1496 = vmatpush1.msra.mxu0 0.0
  %1497 = vmatprep.subr.mxu0 0.0
  %1498 = vmatpush1.msra.mxu0 0.0
  %1499 = vmatprep.subr.mxu0 0.0
  %1500 = vmatpush1.msra.mxu0 0.0
  %1501 = vmatprep.subr.mxu0 0.0
  %1502 = vmatpush1.msra.mxu0 0.0
  %1503 = vmatprep.subr.mxu0 0.0
  %1504 = vmatpush1.msra.mxu0 0.0
  %1505 = vmatprep.subr.mxu0 0.0
  %1506 = vmatpush1.msra.mxu0 0.0
  %1507 = vmatprep.subr.mxu0 0.0
  %1508 = vmatpush1.msra.mxu0 0.0
  %1509 = vmatprep.subr.mxu0 0.0
  %1510 = vmatpush1.msra.mxu0 0.0
  %1511 = vmatprep.subr.mxu0 0.0
  %1512 = vmatpush1.msra.mxu0 0.0
  %1513 = vmatprep.subr.mxu0 0.0
  %1514 = vmatpush1.msra.mxu0 0.0
  %1515 = vmatprep.subr.mxu0 0.0
  %1516 = vmatpush1.msra.mxu0 %v404
  %1517 = vmatprep.subr.mxu0 0.0
  %1518 = vmatpush1.msra.mxu0 %v399
  %1519 = vmatprep.subr.mxu0 0.0
  %1520 = vmatpush2.msra.mxu0 0.0
  %1521 = vmatprep.subr.mxu0 0.0
  %1522 = vmatpush2.msra.mxu0 0.0
  %1523 = vmatprep.subr.mxu0 0.0
  %1524 = vmatpush2.msra.mxu0 0.0
  %1525 = vmatprep.subr.mxu0 0.0
  %1526 = vmatpush2.msra.mxu0 0.0
  %1527 = vmatprep.subr.mxu0 0.0
  %1528 = vmatpush2.msra.mxu0 0.0
  %1529 = vmatprep.subr.mxu0 0.0
  %1530 = vmatpush2.msra.mxu0 0.0
  %1531 = vmatprep.subr.mxu0 0.0
  %1532 = vmatpush2.msra.mxu0 0.0
  %1533 = vmatprep.subr.mxu0 0.0
  %1534 = vmatpush2.msra.mxu0 0.0
  %1535 = vmatprep.subr.mxu0 0.0
  %1536 = vmatpush2.msra.mxu0 0.0
  %1537 = vmatprep.subr.mxu0 0.0
  %1538 = vmatpush2.msra.mxu0 0.0
  %1539 = vmatprep.subr.mxu0 0.0
  %1540 = vmatpush2.msra.mxu0 0.0
  %1541 = vmatprep.subr.mxu0 0.0
  %1542 = vmatpush2.msra.mxu0 0.0
  %1543 = vmatprep.subr.mxu0 0.0
  %1544 = vmatpush2.msra.mxu0 0.0
  %1545 = vmatprep.subr.mxu0 0.0
  %1546 = vmatpush2.msra.mxu0 0.0
  %1547 = vmatprep.subr.mxu0 0.0
  %1548 = vmatpush2.msra.mxu0 0.0
  %1549 = vmatprep.subr.mxu0 0.0
  %1550 = vmatpush2.msra.mxu0 0.0
  %1551 = vmatprep.mubr.f32.mxu0 0.0
  %1552 = vmatmul.mubr.f32.gmra.mxu0 %v1482
  %v1553 = vpop.f32.mrf.mxu0
  %v1554 = vadd.f32 0.0, %v1553
  %v1555 = vpop.f32.mrf.mxu0
  %1556 = vmatprep.mubr.f32.mxu0 0.0
  %1557 = vmatmul.mubr.f32.gmra.mxu0 %v1485
  %v1558 = vpop.f32.mrf.mxu0
  %v1559 = vadd.f32 0.0, %v1558
  %v1560 = vpop.f32.mrf.mxu0
  %1561 = vdwg.mxu0
  %v1563 = vsel %vm427, %v63, 0
  %v1566 = vsel %vm427, %v64, 0
  %1568 = vmatprep.subr.mxu0 0.0
  %1569 = vmatpush1.msra.mxu0 0.0
  %1570 = vmatprep.subr.mxu0 0.0
  %1571 = vmatpush1.msra.mxu0 0.0
  %1572 = vmatprep.subr.mxu0 0.0
  %1573 = vmatpush1.msra.mxu0 0.0
  %1574 = vmatprep.subr.mxu0 0.0
  %1575 = vmatpush1.msra.mxu0 0.0
  %1576 = vmatprep.subr.mxu0 0.0
  %1577 = vmatpush1.msra.mxu0 0.0
  %1578 = vmatprep.subr.mxu0 0.0
  %1579 = vmatpush1.msra.mxu0 0.0
  %1580 = vmatprep.subr.mxu0 0.0
  %1581 = vmatpush1.msra.mxu0 0.0
  %1582 = vmatprep.subr.mxu0 0.0
  %1583 = vmatpush1.msra.mxu0 0.0
  %1584 = vmatprep.subr.mxu0 0.0
  %1585 = vmatpush1.msra.mxu0 0.0
  %1586 = vmatprep.subr.mxu0 0.0
  %1587 = vmatpush1.msra.mxu0 0.0
  %1588 = vmatprep.subr.mxu0 0.0
  %1589 = vmatpush1.msra.mxu0 0.0
  %1590 = vmatprep.subr.mxu0 0.0
  %1591 = vmatpush1.msra.mxu0 0.0
  %1592 = vmatprep.subr.mxu0 0.0
  %1593 = vmatpush1.msra.mxu0 0.0
  %1594 = vmatprep.subr.mxu0 0.0
  %1595 = vmatpush1.msra.mxu0 0.0
  %1596 = vmatprep.subr.mxu0 0.0
  %1597 = vmatpush1.msra.mxu0 %v414
  %1598 = vmatprep.subr.mxu0 0.0
  %1599 = vmatpush1.msra.mxu0 %v409
  %1600 = vmatprep.subr.mxu0 0.0
  %1601 = vmatpush2.msra.mxu0 0.0
  %1602 = vmatprep.subr.mxu0 0.0
  %1603 = vmatpush2.msra.mxu0 0.0
  %1604 = vmatprep.subr.mxu0 0.0
  %1605 = vmatpush2.msra.mxu0 0.0
  %1606 = vmatprep.subr.mxu0 0.0
  %1607 = vmatpush2.msra.mxu0 0.0
  %1608 = vmatprep.subr.mxu0 0.0
  %1609 = vmatpush2.msra.mxu0 0.0
  %1610 = vmatprep.subr.mxu0 0.0
  %1611 = vmatpush2.msra.mxu0 0.0
  %1612 = vmatprep.subr.mxu0 0.0
  %1613 = vmatpush2.msra.mxu0 0.0
  %1614 = vmatprep.subr.mxu0 0.0
  %1615 = vmatpush2.msra.mxu0 0.0
  %1616 = vmatprep.subr.mxu0 0.0
  %1617 = vmatpush2.msra.mxu0 0.0
  %1618 = vmatprep.subr.mxu0 0.0
  %1619 = vmatpush2.msra.mxu0 0.0
  %1620 = vmatprep.subr.mxu0 0.0
  %1621 = vmatpush2.msra.mxu0 0.0
  %1622 = vmatprep.subr.mxu0 0.0
  %1623 = vmatpush2.msra.mxu0 0.0
  %1624 = vmatprep.subr.mxu0 0.0
  %1625 = vmatpush2.msra.mxu0 0.0
  %1626 = vmatprep.subr.mxu0 0.0
  %1627 = vmatpush2.msra.mxu0 0.0
  %1628 = vmatprep.subr.mxu0 0.0
  %1629 = vmatpush2.msra.mxu0 0.0
  %1630 = vmatprep.subr.mxu0 0.0
  %1631 = vmatpush2.msra.mxu0 0.0
  %1632 = vmatprep.mubr.f32.mxu0 0.0
  %1633 = vmatmul.mubr.f32.gmra.mxu0 %v1563
  %v1634 = vpop.f32.mrf.mxu0
  %v1635 = vadd.f32 0.0, %v1634
  %v1636 = vpop.f32.mrf.mxu0
  %1637 = vmatprep.mubr.f32.mxu0 0.0
  %1638 = vmatmul.mubr.f32.gmra.mxu0 %v1566
  %v1639 = vpop.f32.mrf.mxu0
  %v1640 = vadd.f32 0.0, %v1639
  %v1641 = vpop.f32.mrf.mxu0
  %1642 = vdwg.mxu0
  %v1644 = vsel %vm427, %v65, 0
  %v1647 = vsel %vm427, %v66, 0
  %1649 = vmatprep.subr.mxu0 0.0
  %1650 = vmatpush1.msra.mxu0 0.0
  %1651 = vmatprep.subr.mxu0 0.0
  %1652 = vmatpush1.msra.mxu0 0.0
  %1653 = vmatprep.subr.mxu0 0.0
  %1654 = vmatpush1.msra.mxu0 0.0
  %1655 = vmatprep.subr.mxu0 0.0
  %1656 = vmatpush1.msra.mxu0 0.0
  %1657 = vmatprep.subr.mxu0 0.0
  %1658 = vmatpush1.msra.mxu0 0.0
  %1659 = vmatprep.subr.mxu0 0.0
  %1660 = vmatpush1.msra.mxu0 0.0
  %1661 = vmatprep.subr.mxu0 0.0
  %1662 = vmatpush1.msra.mxu0 0.0
  %1663 = vmatprep.subr.mxu0 0.0
  %1664 = vmatpush1.msra.mxu0 0.0
  %1665 = vmatprep.subr.mxu0 0.0
  %1666 = vmatpush1.msra.mxu0 0.0
  %1667 = vmatprep.subr.mxu0 0.0
  %1668 = vmatpush1.msra.mxu0 0.0
  %1669 = vmatprep.subr.mxu0 0.0
  %1670 = vmatpush1.msra.mxu0 0.0
  %1671 = vmatprep.subr.mxu0 0.0
  %1672 = vmatpush1.msra.mxu0 0.0
  %1673 = vmatprep.subr.mxu0 0.0
  %1674 = vmatpush1.msra.mxu0 0.0
  %1675 = vmatprep.subr.mxu0 0.0
  %1676 = vmatpush1.msra.mxu0 0.0
  %1677 = vmatprep.subr.mxu0 0.0
  %1678 = vmatpush1.msra.mxu0 %v424
  %1679 = vmatprep.subr.mxu0 0.0
  %1680 = vmatpush1.msra.mxu0 %v419
  %1681 = vmatprep.subr.mxu0 0.0
  %1682 = vmatpush2.msra.mxu0 0.0
  %1683 = vmatprep.subr.mxu0 0.0
  %1684 = vmatpush2.msra.mxu0 0.0
  %1685 = vmatprep.subr.mxu0 0.0
  %1686 = vmatpush2.msra.mxu0 0.0
  %1687 = vmatprep.subr.mxu0 0.0
  %1688 = vmatpush2.msra.mxu0 0.0
  %1689 = vmatprep.subr.mxu0 0.0
  %1690 = vmatpush2.msra.mxu0 0.0
  %1691 = vmatprep.subr.mxu0 0.0
  %1692 = vmatpush2.msra.mxu0 0.0
  %1693 = vmatprep.subr.mxu0 0.0
  %1694 = vmatpush2.msra.mxu0 0.0
  %1695 = vmatprep.subr.mxu0 0.0
  %1696 = vmatpush2.msra.mxu0 0.0
  %1697 = vmatprep.subr.mxu0 0.0
  %1698 = vmatpush2.msra.mxu0 0.0
  %1699 = vmatprep.subr.mxu0 0.0
  %1700 = vmatpush2.msra.mxu0 0.0
  %1701 = vmatprep.subr.mxu0 0.0
  %1702 = vmatpush2.msra.mxu0 0.0
  %1703 = vmatprep.subr.mxu0 0.0
  %1704 = vmatpush2.msra.mxu0 0.0
  %1705 = vmatprep.subr.mxu0 0.0
  %1706 = vmatpush2.msra.mxu0 0.0
  %1707 = vmatprep.subr.mxu0 0.0
  %1708 = vmatpush2.msra.mxu0 0.0
  %1709 = vmatprep.subr.mxu0 0.0
  %1710 = vmatpush2.msra.mxu0 0.0
  %1711 = vmatprep.subr.mxu0 0.0
  %1712 = vmatpush2.msra.mxu0 0.0
  %1713 = vmatprep.mubr.f32.mxu0 0.0
  %1714 = vmatmul.mubr.f32.gmra.mxu0 %v1644
  %v1715 = vpop.f32.mrf.mxu0
  %v1716 = vadd.f32 0.0, %v1715
  %v1717 = vpop.f32.mrf.mxu0
  %1718 = vmatprep.mubr.f32.mxu0 0.0
  %1719 = vmatmul.mubr.f32.gmra.mxu0 %v1647
  %v1720 = vpop.f32.mrf.mxu0
  %v1721 = vadd.f32 0.0, %v1720
  %v1722 = vpop.f32.mrf.mxu0
  %1723 = vdwg.mxu0
  %v1725 = vlaneseq
  %v1726 = vshrl.u32 %v1725, 7
  %v1727 = vsub.s32 0, %v1726
  %v1728 = vrot.slane %v100, %v1727
  %v1730 = vadd.f32 %v501, %v1728
  %v1731 = vadd.f32 %v506, %v1728
  %v1732 = vadd.f32 %v582, %v1728
  %v1733 = vadd.f32 %v587, %v1728
  %v1734 = vadd.f32 %v663, %v1728
  %v1735 = vadd.f32 %v668, %v1728
  %v1736 = vadd.f32 %v744, %v1728
  %v1737 = vadd.f32 %v749, %v1728
  %v1738 = vadd.f32 %v825, %v1728
  %v1739 = vadd.f32 %v830, %v1728
  %v1740 = vadd.f32 %v906, %v1728
  %v1741 = vadd.f32 %v911, %v1728
  %v1742 = vadd.f32 %v987, %v1728
  %v1743 = vadd.f32 %v992, %v1728
  %v1744 = vadd.f32 %v1068, %v1728
  %v1745 = vadd.f32 %v1073, %v1728
  %v1746 = vadd.f32 %v1149, %v1728
  %v1747 = vadd.f32 %v1154, %v1728
  %v1748 = vadd.f32 %v1230, %v1728
  %v1749 = vadd.f32 %v1235, %v1728
  %v1750 = vadd.f32 %v1311, %v1728
  %v1751 = vadd.f32 %v1316, %v1728
  %v1752 = vadd.f32 %v1392, %v1728
  %v1753 = vadd.f32 %v1397, %v1728
  %v1754 = vadd.f32 %v1473, %v1728
  %v1755 = vadd.f32 %v1478, %v1728
  %v1756 = vadd.f32 %v1554, %v1728
  %v1757 = vadd.f32 %v1559, %v1728
  %v1758 = vadd.f32 %v1635, %v1728
  %v1759 = vadd.f32 %v1640, %v1728
  %v1760 = vadd.f32 %v1716, %v1728
  %v1761 = vadd.f32 %v1721, %v1728
  %v1762 = vmax.f32 %v1730, 0.0
  %v1763 = vmax.f32 %v1731, 0.0
  %v1764 = vmax.f32 %v1732, 0.0
  %v1765 = vmax.f32 %v1733, 0.0
  %v1766 = vmax.f32 %v1734, 0.0
  %v1767 = vmax.f32 %v1735, 0.0
  %v1768 = vmax.f32 %v1736, 0.0
  %v1769 = vmax.f32 %v1737, 0.0
  %v1770 = vmax.f32 %v1738, 0.0
  %v1771 = vmax.f32 %v1739, 0.0
  %v1772 = vmax.f32 %v1740, 0.0
  %v1773 = vmax.f32 %v1741, 0.0
  %v1774 = vmax.f32 %v1742, 0.0
  %v1775 = vmax.f32 %v1743, 0.0
  %v1776 = vmax.f32 %v1744, 0.0
  %v1777 = vmax.f32 %v1745, 0.0
  %v1778 = vmax.f32 %v1746, 0.0
  %v1779 = vmax.f32 %v1747, 0.0
  %v1780 = vmax.f32 %v1748, 0.0
  %v1781 = vmax.f32 %v1749, 0.0
  %v1782 = vmax.f32 %v1750, 0.0
  %v1783 = vmax.f32 %v1751, 0.0
  %v1784 = vmax.f32 %v1752, 0.0
  %v1785 = vmax.f32 %v1753, 0.0
  %v1786 = vmax.f32 %v1754, 0.0
  %v1787 = vmax.f32 %v1755, 0.0
  %v1788 = vmax.f32 %v1756, 0.0
  %v1789 = vmax.f32 %v1757, 0.0
  %v1790 = vmax.f32 %v1758, 0.0
  %v1791 = vmax.f32 %v1759, 0.0
  %v1792 = vmax.f32 %v1760, 0.0
  %v1793 = vmax.f32 %v1761, 0.0
  %v1794 = vld [vmem:[%s4] sm:$0xff]
  %v1795 = vld [vmem:[%s4 + $0x8] sm:$0xff]
  %v1796 = vld [vmem:[%s4 + $0x10] sm:$0xff]
  %v1797 = vld [vmem:[%s4 + $0x18] sm:$0xff]
  %v1798 = vld [vmem:[%s5] sm:$0x1]
  %vm1799 = vcmask 261120
  %v1801 = vsel %vm1799, %v1762, 0
  %v1804 = vsel %vm1799, %v1763, 0
  %v1807 = vsel %vm1799, %v1764, 0
  %v1810 = vsel %vm1799, %v1765, 0
  %v1813 = vsel %vm1799, %v1766, 0
  %v1816 = vsel %vm1799, %v1767, 0
  %v1819 = vsel %vm1799, %v1768, 0
  %v1822 = vsel %vm1799, %v1769, 0
  %v1825 = vsel %vm1799, %v1770, 0
  %v1828 = vsel %vm1799, %v1771, 0
  %v1831 = vsel %vm1799, %v1772, 0
  %v1834 = vsel %vm1799, %v1773, 0
  %v1837 = vsel %vm1799, %v1774, 0
  %v1840 = vsel %vm1799, %v1775, 0
  %v1843 = vsel %vm1799, %v1776, 0
  %v1846 = vsel %vm1799, %v1777, 0
  %v1849 = vsel %vm1799, %v1778, 0
  %v1852 = vsel %vm1799, %v1779, 0
  %v1855 = vsel %vm1799, %v1780, 0
  %v1858 = vsel %vm1799, %v1781, 0
  %v1861 = vsel %vm1799, %v1782, 0
  %v1864 = vsel %vm1799, %v1783, 0
  %v1867 = vsel %vm1799, %v1784, 0
  %v1870 = vsel %vm1799, %v1785, 0
  %v1873 = vsel %vm1799, %v1786, 0
  %v1876 = vsel %vm1799, %v1787, 0
  %v1879 = vsel %vm1799, %v1788, 0
  %v1882 = vsel %vm1799, %v1789, 0
  %v1885 = vsel %vm1799, %v1790, 0
  %v1888 = vsel %vm1799, %v1791, 0
  %v1891 = vsel %vm1799, %v1792, 0
  %v1894 = vsel %vm1799, %v1793, 0
  %1896 = vmatprep.subr.mxu0 0.0
  %1897 = vmatpush1.msra.mxu0 0.0
  %1898 = vmatprep.subr.mxu0 0.0
  %1899 = vmatpush1.msra.mxu0 0.0
  %1900 = vmatprep.subr.mxu0 0.0
  %1901 = vmatpush1.msra.mxu0 0.0
  %1902 = vmatprep.subr.mxu0 0.0
  %1903 = vmatpush1.msra.mxu0 0.0
  %1904 = vmatprep.subr.mxu0 0.0
  %1905 = vmatpush1.msra.mxu0 0.0
  %1906 = vmatprep.subr.mxu0 0.0
  %1907 = vmatpush1.msra.mxu0 0.0
  %1908 = vmatprep.subr.mxu0 0.0
  %1909 = vmatpush1.msra.mxu0 0.0
  %1910 = vmatprep.subr.mxu0 0.0
  %1911 = vmatpush1.msra.mxu0 0.0
  %1912 = vmatprep.subr.mxu0 0.0
  %1913 = vmatpush1.msra.mxu0 0.0
  %1914 = vmatprep.subr.mxu0 0.0
  %1915 = vmatpush1.msra.mxu0 0.0
  %1916 = vmatprep.subr.mxu0 0.0
  %1917 = vmatpush1.msra.mxu0 0.0
  %1918 = vmatprep.subr.mxu0 0.0
  %1919 = vmatpush1.msra.mxu0 0.0
  %1920 = vmatprep.subr.mxu0 0.0
  %1921 = vmatpush1.msra.mxu0 %v1797
  %1922 = vmatprep.subr.mxu0 0.0
  %1923 = vmatpush1.msra.mxu0 %v1796
  %1924 = vmatprep.subr.mxu0 0.0
  %1925 = vmatpush1.msra.mxu0 %v1795
  %1926 = vmatprep.subr.mxu0 0.0
  %1927 = vmatpush1.msra.mxu0 %v1794
  %1928 = vmatprep.subr.mxu0 0.0
  %1929 = vmatpush2.msra.mxu0 0.0
  %1930 = vmatprep.subr.mxu0 0.0
  %1931 = vmatpush2.msra.mxu0 0.0
  %1932 = vmatprep.subr.mxu0 0.0
  %1933 = vmatpush2.msra.mxu0 0.0
  %1934 = vmatprep.subr.mxu0 0.0
  %1935 = vmatpush2.msra.mxu0 0.0
  %1936 = vmatprep.subr.mxu0 0.0
  %1937 = vmatpush2.msra.mxu0 0.0
  %1938 = vmatprep.subr.mxu0 0.0
  %1939 = vmatpush2.msra.mxu0 0.0
  %1940 = vmatprep.subr.mxu0 0.0
  %1941 = vmatpush2.msra.mxu0 0.0
  %1942 = vmatprep.subr.mxu0 0.0
  %1943 = vmatpush2.msra.mxu0 0.0
  %1944 = vmatprep.subr.mxu0 0.0
  %1945 = vmatpush2.msra.mxu0 0.0
  %1946 = vmatprep.subr.mxu0 0.0
  %1947 = vmatpush2.msra.mxu0 0.0
  %1948 = vmatprep.subr.mxu0 0.0
  %1949 = vmatpush2.msra.mxu0 0.0
  %1950 = vmatprep.subr.mxu0 0.0
  %1951 = vmatpush2.msra.mxu0 0.0
  %1952 = vmatprep.subr.mxu0 0.0
  %1953 = vmatpush2.msra.mxu0 0.0
  %1954 = vmatprep.subr.mxu0 0.0
  %1955 = vmatpush2.msra.mxu0 0.0
  %1956 = vmatprep.subr.mxu0 0.0
  %1957 = vmatpush2.msra.mxu0 0.0
  %1958 = vmatprep.subr.mxu0 0.0
  %1959 = vmatpush2.msra.mxu0 0.0
  %1960 = vmatprep.mubr.f32.mxu0 0.0
  %1961 = vmatmul.mubr.f32.gmra.mxu0 %v1801
  %v1962 = vpop.f32.mrf.mxu0
  %v1963 = vadd.f32 0.0, %v1962
  %v1964 = vpop.f32.mrf.mxu0
  %1965 = vmatprep.mubr.f32.mxu0 0.0
  %1966 = vmatmul.mubr.f32.gmra.mxu0 %v1804
  %v1967 = vpop.f32.mrf.mxu0
  %v1968 = vadd.f32 0.0, %v1967
  %v1969 = vpop.f32.mrf.mxu0
  %1970 = vmatprep.mubr.f32.mxu0 0.0
  %1971 = vmatmul.mubr.f32.gmra.mxu0 %v1807
  %v1972 = vpop.f32.mrf.mxu0
  %v1973 = vadd.f32 0.0, %v1972
  %v1974 = vpop.f32.mrf.mxu0
  %1975 = vmatprep.mubr.f32.mxu0 0.0
  %1976 = vmatmul.mubr.f32.gmra.mxu0 %v1810
  %v1977 = vpop.f32.mrf.mxu0
  %v1978 = vadd.f32 0.0, %v1977
  %v1979 = vpop.f32.mrf.mxu0
  %1980 = vmatprep.mubr.f32.mxu0 0.0
  %1981 = vmatmul.mubr.f32.gmra.mxu0 %v1813
  %v1982 = vpop.f32.mrf.mxu0
  %v1983 = vadd.f32 0.0, %v1982
  %v1984 = vpop.f32.mrf.mxu0
  %1985 = vmatprep.mubr.f32.mxu0 0.0
  %1986 = vmatmul.mubr.f32.gmra.mxu0 %v1816
  %v1987 = vpop.f32.mrf.mxu0
  %v1988 = vadd.f32 0.0, %v1987
  %v1989 = vpop.f32.mrf.mxu0
  %1990 = vmatprep.mubr.f32.mxu0 0.0
  %1991 = vmatmul.mubr.f32.gmra.mxu0 %v1819
  %v1992 = vpop.f32.mrf.mxu0
  %v1993 = vadd.f32 0.0, %v1992
  %v1994 = vpop.f32.mrf.mxu0
  %1995 = vmatprep.mubr.f32.mxu0 0.0
  %1996 = vmatmul.mubr.f32.gmra.mxu0 %v1822
  %v1997 = vpop.f32.mrf.mxu0
  %v1998 = vadd.f32 0.0, %v1997
  %v1999 = vpop.f32.mrf.mxu0
  %2000 = vmatprep.mubr.f32.mxu0 0.0
  %2001 = vmatmul.mubr.f32.gmra.mxu0 %v1825
  %v2002 = vpop.f32.mrf.mxu0
  %v2003 = vadd.f32 0.0, %v2002
  %v2004 = vpop.f32.mrf.mxu0
  %2005 = vmatprep.mubr.f32.mxu0 0.0
  %2006 = vmatmul.mubr.f32.gmra.mxu0 %v1828
  %v2007 = vpop.f32.mrf.mxu0
  %v2008 = vadd.f32 0.0, %v2007
  %v2009 = vpop.f32.mrf.mxu0
  %2010 = vmatprep.mubr.f32.mxu0 0.0
  %2011 = vmatmul.mubr.f32.gmra.mxu0 %v1831
  %v2012 = vpop.f32.mrf.mxu0
  %v2013 = vadd.f32 0.0, %v2012
  %v2014 = vpop.f32.mrf.mxu0
  %2015 = vmatprep.mubr.f32.mxu0 0.0
  %2016 = vmatmul.mubr.f32.gmra.mxu0 %v1834
  %v2017 = vpop.f32.mrf.mxu0
  %v2018 = vadd.f32 0.0, %v2017
  %v2019 = vpop.f32.mrf.mxu0
  %2020 = vmatprep.mubr.f32.mxu0 0.0
  %2021 = vmatmul.mubr.f32.gmra.mxu0 %v1837
  %v2022 = vpop.f32.mrf.mxu0
  %v2023 = vadd.f32 0.0, %v2022
  %v2024 = vpop.f32.mrf.mxu0
  %2025 = vmatprep.mubr.f32.mxu0 0.0
  %2026 = vmatmul.mubr.f32.gmra.mxu0 %v1840
  %v2027 = vpop.f32.mrf.mxu0
  %v2028 = vadd.f32 0.0, %v2027
  %v2029 = vpop.f32.mrf.mxu0
  %2030 = vmatprep.mubr.f32.mxu0 0.0
  %2031 = vmatmul.mubr.f32.gmra.mxu0 %v1843
  %v2032 = vpop.f32.mrf.mxu0
  %v2033 = vadd.f32 0.0, %v2032
  %v2034 = vpop.f32.mrf.mxu0
  %2035 = vmatprep.mubr.f32.mxu0 0.0
  %2036 = vmatmul.mubr.f32.gmra.mxu0 %v1846
  %v2037 = vpop.f32.mrf.mxu0
  %v2038 = vadd.f32 0.0, %v2037
  %v2039 = vpop.f32.mrf.mxu0
  %2040 = vmatprep.mubr.f32.mxu0 0.0
  %2041 = vmatmul.mubr.f32.gmra.mxu0 %v1849
  %v2042 = vpop.f32.mrf.mxu0
  %v2043 = vadd.f32 0.0, %v2042
  %v2044 = vpop.f32.mrf.mxu0
  %2045 = vmatprep.mubr.f32.mxu0 0.0
  %2046 = vmatmul.mubr.f32.gmra.mxu0 %v1852
  %v2047 = vpop.f32.mrf.mxu0
  %v2048 = vadd.f32 0.0, %v2047
  %v2049 = vpop.f32.mrf.mxu0
  %2050 = vmatprep.mubr.f32.mxu0 0.0
  %2051 = vmatmul.mubr.f32.gmra.mxu0 %v1855
  %v2052 = vpop.f32.mrf.mxu0
  %v2053 = vadd.f32 0.0, %v2052
  %v2054 = vpop.f32.mrf.mxu0
  %2055 = vmatprep.mubr.f32.mxu0 0.0
  %2056 = vmatmul.mubr.f32.gmra.mxu0 %v1858
  %v2057 = vpop.f32.mrf.mxu0
  %v2058 = vadd.f32 0.0, %v2057
  %v2059 = vpop.f32.mrf.mxu0
  %2060 = vmatprep.mubr.f32.mxu0 0.0
  %2061 = vmatmul.mubr.f32.gmra.mxu0 %v1861
  %v2062 = vpop.f32.mrf.mxu0
  %v2063 = vadd.f32 0.0, %v2062
  %v2064 = vpop.f32.mrf.mxu0
  %2065 = vmatprep.mubr.f32.mxu0 0.0
  %2066 = vmatmul.mubr.f32.gmra.mxu0 %v1864
  %v2067 = vpop.f32.mrf.mxu0
  %v2068 = vadd.f32 0.0, %v2067
  %v2069 = vpop.f32.mrf.mxu0
  %2070 = vmatprep.mubr.f32.mxu0 0.0
  %2071 = vmatmul.mubr.f32.gmra.mxu0 %v1867
  %v2072 = vpop.f32.mrf.mxu0
  %v2073 = vadd.f32 0.0, %v2072
  %v2074 = vpop.f32.mrf.mxu0
  %2075 = vmatprep.mubr.f32.mxu0 0.0
  %2076 = vmatmul.mubr.f32.gmra.mxu0 %v1870
  %v2077 = vpop.f32.mrf.mxu0
  %v2078 = vadd.f32 0.0, %v2077
  %v2079 = vpop.f32.mrf.mxu0
  %2080 = vmatprep.mubr.f32.mxu0 0.0
  %2081 = vmatmul.mubr.f32.gmra.mxu0 %v1873
  %v2082 = vpop.f32.mrf.mxu0
  %v2083 = vadd.f32 0.0, %v2082
  %v2084 = vpop.f32.mrf.mxu0
  %2085 = vmatprep.mubr.f32.mxu0 0.0
  %2086 = vmatmul.mubr.f32.gmra.mxu0 %v1876
  %v2087 = vpop.f32.mrf.mxu0
  %v2088 = vadd.f32 0.0, %v2087
  %v2089 = vpop.f32.mrf.mxu0
  %2090 = vmatprep.mubr.f32.mxu0 0.0
  %2091 = vmatmul.mubr.f32.gmra.mxu0 %v1879
  %v2092 = vpop.f32.mrf.mxu0
  %v2093 = vadd.f32 0.0, %v2092
  %v2094 = vpop.f32.mrf.mxu0
  %2095 = vmatprep.mubr.f32.mxu0 0.0
  %2096 = vmatmul.mubr.f32.gmra.mxu0 %v1882
  %v2097 = vpop.f32.mrf.mxu0
  %v2098 = vadd.f32 0.0, %v2097
  %v2099 = vpop.f32.mrf.mxu0
  %2100 = vmatprep.mubr.f32.mxu0 0.0
  %2101 = vmatmul.mubr.f32.gmra.mxu0 %v1885
  %v2102 = vpop.f32.mrf.mxu0
  %v2103 = vadd.f32 0.0, %v2102
  %v2104 = vpop.f32.mrf.mxu0
  %2105 = vmatprep.mubr.f32.mxu0 0.0
  %2106 = vmatmul.mubr.f32.gmra.mxu0 %v1888
  %v2107 = vpop.f32.mrf.mxu0
  %v2108 = vadd.f32 0.0, %v2107
  %v2109 = vpop.f32.mrf.mxu0
  %2110 = vmatprep.mubr.f32.mxu0 0.0
  %2111 = vmatmul.mubr.f32.gmra.mxu0 %v1891
  %v2112 = vpop.f32.mrf.mxu0
  %v2113 = vadd.f32 0.0, %v2112
  %v2114 = vpop.f32.mrf.mxu0
  %2115 = vmatprep.mubr.f32.mxu0 0.0
  %2116 = vmatmul.mubr.f32.gmra.mxu0 %v1894
  %v2117 = vpop.f32.mrf.mxu0
  %v2118 = vadd.f32 0.0, %v2117
  %v2119 = vpop.f32.mrf.mxu0
  %2120 = vdwg.mxu0
  %2121 = vmatprep.subr.mxu0 0.0
  %2122 = vmatpush1.msra.mxu0 0.0
  %2123 = vmatprep.subr.mxu0 0.0
  %2124 = vmatpush1.msra.mxu0 0.0
  %2125 = vmatprep.subr.mxu0 0.0
  %2126 = vmatpush1.msra.mxu0 0.0
  %2127 = vmatprep.subr.mxu0 0.0
  %2128 = vmatpush1.msra.mxu0 0.0
  %2129 = vmatprep.subr.mxu0 0.0
  %2130 = vmatpush1.msra.mxu0 0.0
  %2131 = vmatprep.subr.mxu0 0.0
  %2132 = vmatpush1.msra.mxu0 0.0
  %2133 = vmatprep.subr.mxu0 0.0
  %2134 = vmatpush1.msra.mxu0 0.0
  %2135 = vmatprep.subr.mxu0 0.0
  %2136 = vmatpush1.msra.mxu0 0.0
  %2137 = vmatprep.subr.mxu0 0.0
  %2138 = vmatpush1.msra.mxu0 0.0
  %2139 = vmatprep.subr.mxu0 0.0
  %2140 = vmatpush1.msra.mxu0 0.0
  %2141 = vmatprep.subr.mxu0 0.0
  %2142 = vmatpush1.msra.mxu0 0.0
  %2143 = vmatprep.subr.mxu0 0.0
  %2144 = vmatpush1.msra.mxu0 0.0
  %2145 = vmatprep.subr.mxu0 0.0
  %2146 = vmatpush1.msra.mxu0 0.0
  %2147 = vmatprep.subr.mxu0 0.0
  %2148 = vmatpush1.msra.mxu0 0.0
  %2149 = vmatprep.subr.mxu0 0.0
  %2150 = vmatpush1.msra.mxu0 %v1968
  %2151 = vmatprep.subr.mxu0 0.0
  %2152 = vmatpush1.msra.mxu0 %v1963
  %2153 = vmatprep.subr.mxu0 0.0
  %2154 = vmatpush2.msra.mxu0 0.0
  %2155 = vmatprep.subr.mxu0 0.0
  %2156 = vmatpush2.msra.mxu0 0.0
  %2157 = vmatprep.subr.mxu0 0.0
  %2158 = vmatpush2.msra.mxu0 0.0
  %2159 = vmatprep.subr.mxu0 0.0
  %2160 = vmatpush2.msra.mxu0 0.0
  %2161 = vmatprep.subr.mxu0 0.0
  %2162 = vmatpush2.msra.mxu0 0.0
  %2163 = vmatprep.subr.mxu0 0.0
  %2164 = vmatpush2.msra.mxu0 0.0
  %2165 = vmatprep.subr.mxu0 0.0
  %2166 = vmatpush2.msra.mxu0 0.0
  %2167 = vmatprep.subr.mxu0 0.0
  %2168 = vmatpush2.msra.mxu0 0.0
  %2169 = vmatprep.subr.mxu0 0.0
  %2170 = vmatpush2.msra.mxu0 0.0
  %2171 = vmatprep.subr.mxu0 0.0
  %2172 = vmatpush2.msra.mxu0 0.0
  %2173 = vmatprep.subr.mxu0 0.0
  %2174 = vmatpush2.msra.mxu0 0.0
  %2175 = vmatprep.subr.mxu0 0.0
  %2176 = vmatpush2.msra.mxu0 0.0
  %2177 = vmatprep.subr.mxu0 0.0
  %2178 = vmatpush2.msra.mxu0 0.0
  %2179 = vmatprep.subr.mxu0 0.0
  %2180 = vmatpush2.msra.mxu0 0.0
  %2181 = vmatprep.subr.mxu0 0.0
  %2182 = vmatpush2.msra.mxu0 0.0
  %2183 = vmatprep.subr.mxu0 0.0
  %2184 = vmatpush2.msra.mxu0 0.0
  %2185 = vmatprep.mubr.f32.mxu0 0.0
  %2186 = vmatmul.mubr.f32.gmra.mxu0 %v429
  %v2187 = vpop.f32.mrf.mxu0
  %v2188 = vadd.f32 0.0, %v2187
  %v2189 = vpop.f32.mrf.mxu0
  %2190 = vmatprep.mubr.f32.mxu0 0.0
  %2191 = vmatmul.mubr.f32.gmra.mxu0 %v432
  %v2192 = vpop.f32.mrf.mxu0
  %v2193 = vadd.f32 0.0, %v2192
  %v2194 = vpop.f32.mrf.mxu0
  %2195 = vdwg.mxu0
  %2196 = vmatprep.subr.mxu0 0.0
  %2197 = vmatpush1.msra.mxu0 0.0
  %2198 = vmatprep.subr.mxu0 0.0
  %2199 = vmatpush1.msra.mxu0 0.0
  %2200 = vmatprep.subr.mxu0 0.0
  %2201 = vmatpush1.msra.mxu0 0.0
  %2202 = vmatprep.subr.mxu0 0.0
  %2203 = vmatpush1.msra.mxu0 0.0
  %2204 = vmatprep.subr.mxu0 0.0
  %2205 = vmatpush1.msra.mxu0 0.0
  %2206 = vmatprep.subr.mxu0 0.0
  %2207 = vmatpush1.msra.mxu0 0.0
  %2208 = vmatprep.subr.mxu0 0.0
  %2209 = vmatpush1.msra.mxu0 0.0
  %2210 = vmatprep.subr.mxu0 0.0
  %2211 = vmatpush1.msra.mxu0 0.0
  %2212 = vmatprep.subr.mxu0 0.0
  %2213 = vmatpush1.msra.mxu0 0.0
  %2214 = vmatprep.subr.mxu0 0.0
  %2215 = vmatpush1.msra.mxu0 0.0
  %2216 = vmatprep.subr.mxu0 0.0
  %2217 = vmatpush1.msra.mxu0 0.0
  %2218 = vmatprep.subr.mxu0 0.0
  %2219 = vmatpush1.msra.mxu0 0.0
  %2220 = vmatprep.subr.mxu0 0.0
  %2221 = vmatpush1.msra.mxu0 0.0
  %2222 = vmatprep.subr.mxu0 0.0
  %2223 = vmatpush1.msra.mxu0 0.0
  %2224 = vmatprep.subr.mxu0 0.0
  %2225 = vmatpush1.msra.mxu0 %v1978
  %2226 = vmatprep.subr.mxu0 0.0
  %2227 = vmatpush1.msra.mxu0 %v1973
  %2228 = vmatprep.subr.mxu0 0.0
  %2229 = vmatpush2.msra.mxu0 0.0
  %2230 = vmatprep.subr.mxu0 0.0
  %2231 = vmatpush2.msra.mxu0 0.0
  %2232 = vmatprep.subr.mxu0 0.0
  %2233 = vmatpush2.msra.mxu0 0.0
  %2234 = vmatprep.subr.mxu0 0.0
  %2235 = vmatpush2.msra.mxu0 0.0
  %2236 = vmatprep.subr.mxu0 0.0
  %2237 = vmatpush2.msra.mxu0 0.0
  %2238 = vmatprep.subr.mxu0 0.0
  %2239 = vmatpush2.msra.mxu0 0.0
  %2240 = vmatprep.subr.mxu0 0.0
  %2241 = vmatpush2.msra.mxu0 0.0
  %2242 = vmatprep.subr.mxu0 0.0
  %2243 = vmatpush2.msra.mxu0 0.0
  %2244 = vmatprep.subr.mxu0 0.0
  %2245 = vmatpush2.msra.mxu0 0.0
  %2246 = vmatprep.subr.mxu0 0.0
  %2247 = vmatpush2.msra.mxu0 0.0
  %2248 = vmatprep.subr.mxu0 0.0
  %2249 = vmatpush2.msra.mxu0 0.0
  %2250 = vmatprep.subr.mxu0 0.0
  %2251 = vmatpush2.msra.mxu0 0.0
  %2252 = vmatprep.subr.mxu0 0.0
  %2253 = vmatpush2.msra.mxu0 0.0
  %2254 = vmatprep.subr.mxu0 0.0
  %2255 = vmatpush2.msra.mxu0 0.0
  %2256 = vmatprep.subr.mxu0 0.0
  %2257 = vmatpush2.msra.mxu0 0.0
  %2258 = vmatprep.subr.mxu0 0.0
  %2259 = vmatpush2.msra.mxu0 0.0
  %2260 = vmatprep.mubr.f32.mxu0 0.0
  %2261 = vmatmul.mubr.f32.gmra.mxu0 %v510
  %v2262 = vpop.f32.mrf.mxu0
  %v2263 = vadd.f32 0.0, %v2262
  %v2264 = vpop.f32.mrf.mxu0
  %2265 = vmatprep.mubr.f32.mxu0 0.0
  %2266 = vmatmul.mubr.f32.gmra.mxu0 %v513
  %v2267 = vpop.f32.mrf.mxu0
  %v2268 = vadd.f32 0.0, %v2267
  %v2269 = vpop.f32.mrf.mxu0
  %2270 = vdwg.mxu0
  %2271 = vmatprep.subr.mxu0 0.0
  %2272 = vmatpush1.msra.mxu0 0.0
  %2273 = vmatprep.subr.mxu0 0.0
  %2274 = vmatpush1.msra.mxu0 0.0
  %2275 = vmatprep.subr.mxu0 0.0
  %2276 = vmatpush1.msra.mxu0 0.0
  %2277 = vmatprep.subr.mxu0 0.0
  %2278 = vmatpush1.msra.mxu0 0.0
  %2279 = vmatprep.subr.mxu0 0.0
  %2280 = vmatpush1.msra.mxu0 0.0
  %2281 = vmatprep.subr.mxu0 0.0
  %2282 = vmatpush1.msra.mxu0 0.0
  %2283 = vmatprep.subr.mxu0 0.0
  %2284 = vmatpush1.msra.mxu0 0.0
  %2285 = vmatprep.subr.mxu0 0.0
  %2286 = vmatpush1.msra.mxu0 0.0
  %2287 = vmatprep.subr.mxu0 0.0
  %2288 = vmatpush1.msra.mxu0 0.0
  %2289 = vmatprep.subr.mxu0 0.0
  %2290 = vmatpush1.msra.mxu0 0.0
  %2291 = vmatprep.subr.mxu0 0.0
  %2292 = vmatpush1.msra.mxu0 0.0
  %2293 = vmatprep.subr.mxu0 0.0
  %2294 = vmatpush1.msra.mxu0 0.0
  %2295 = vmatprep.subr.mxu0 0.0
  %2296 = vmatpush1.msra.mxu0 0.0
  %2297 = vmatprep.subr.mxu0 0.0
  %2298 = vmatpush1.msra.mxu0 0.0
  %2299 = vmatprep.subr.mxu0 0.0
  %2300 = vmatpush1.msra.mxu0 %v1988
  %2301 = vmatprep.subr.mxu0 0.0
  %2302 = vmatpush1.msra.mxu0 %v1983
  %2303 = vmatprep.subr.mxu0 0.0
  %2304 = vmatpush2.msra.mxu0 0.0
  %2305 = vmatprep.subr.mxu0 0.0
  %2306 = vmatpush2.msra.mxu0 0.0
  %2307 = vmatprep.subr.mxu0 0.0
  %2308 = vmatpush2.msra.mxu0 0.0
  %2309 = vmatprep.subr.mxu0 0.0
  %2310 = vmatpush2.msra.mxu0 0.0
  %2311 = vmatprep.subr.mxu0 0.0
  %2312 = vmatpush2.msra.mxu0 0.0
  %2313 = vmatprep.subr.mxu0 0.0
  %2314 = vmatpush2.msra.mxu0 0.0
  %2315 = vmatprep.subr.mxu0 0.0
  %2316 = vmatpush2.msra.mxu0 0.0
  %2317 = vmatprep.subr.mxu0 0.0
  %2318 = vmatpush2.msra.mxu0 0.0
  %2319 = vmatprep.subr.mxu0 0.0
  %2320 = vmatpush2.msra.mxu0 0.0
  %2321 = vmatprep.subr.mxu0 0.0
  %2322 = vmatpush2.msra.mxu0 0.0
  %2323 = vmatprep.subr.mxu0 0.0
  %2324 = vmatpush2.msra.mxu0 0.0
  %2325 = vmatprep.subr.mxu0 0.0
  %2326 = vmatpush2.msra.mxu0 0.0
  %2327 = vmatprep.subr.mxu0 0.0
  %2328 = vmatpush2.msra.mxu0 0.0
  %2329 = vmatprep.subr.mxu0 0.0
  %2330 = vmatpush2.msra.mxu0 0.0
  %2331 = vmatprep.subr.mxu0 0.0
  %2332 = vmatpush2.msra.mxu0 0.0
  %2333 = vmatprep.subr.mxu0 0.0
  %2334 = vmatpush2.msra.mxu0 0.0
  %2335 = vmatprep.mubr.f32.mxu0 0.0
  %2336 = vmatmul.mubr.f32.gmra.mxu0 %v591
  %v2337 = vpop.f32.mrf.mxu0
  %v2338 = vadd.f32 0.0, %v2337
  %v2339 = vpop.f32.mrf.mxu0
  %2340 = vmatprep.mubr.f32.mxu0 0.0
  %2341 = vmatmul.mubr.f32.gmra.mxu0 %v594
  %v2342 = vpop.f32.mrf.mxu0
  %v2343 = vadd.f32 0.0, %v2342
  %v2344 = vpop.f32.mrf.mxu0
  %2345 = vdwg.mxu0
  %2346 = vmatprep.subr.mxu0 0.0
  %2347 = vmatpush1.msra.mxu0 0.0
  %2348 = vmatprep.subr.mxu0 0.0
  %2349 = vmatpush1.msra.mxu0 0.0
  %2350 = vmatprep.subr.mxu0 0.0
  %2351 = vmatpush1.msra.mxu0 0.0
  %2352 = vmatprep.subr.mxu0 0.0
  %2353 = vmatpush1.msra.mxu0 0.0
  %2354 = vmatprep.subr.mxu0 0.0
  %2355 = vmatpush1.msra.mxu0 0.0
  %2356 = vmatprep.subr.mxu0 0.0
  %2357 = vmatpush1.msra.mxu0 0.0
  %2358 = vmatprep.subr.mxu0 0.0
  %2359 = vmatpush1.msra.mxu0 0.0
  %2360 = vmatprep.subr.mxu0 0.0
  %2361 = vmatpush1.msra.mxu0 0.0
  %2362 = vmatprep.subr.mxu0 0.0
  %2363 = vmatpush1.msra.mxu0 0.0
  %2364 = vmatprep.subr.mxu0 0.0
  %2365 = vmatpush1.msra.mxu0 0.0
  %2366 = vmatprep.subr.mxu0 0.0
  %2367 = vmatpush1.msra.mxu0 0.0
  %2368 = vmatprep.subr.mxu0 0.0
  %2369 = vmatpush1.msra.mxu0 0.0
  %2370 = vmatprep.subr.mxu0 0.0
  %2371 = vmatpush1.msra.mxu0 0.0
  %2372 = vmatprep.subr.mxu0 0.0
  %2373 = vmatpush1.msra.mxu0 0.0
  %2374 = vmatprep.subr.mxu0 0.0
  %2375 = vmatpush1.msra.mxu0 %v1998
  %2376 = vmatprep.subr.mxu0 0.0
  %2377 = vmatpush1.msra.mxu0 %v1993
  %2378 = vmatprep.subr.mxu0 0.0
  %2379 = vmatpush2.msra.mxu0 0.0
  %2380 = vmatprep.subr.mxu0 0.0
  %2381 = vmatpush2.msra.mxu0 0.0
  %2382 = vmatprep.subr.mxu0 0.0
  %2383 = vmatpush2.msra.mxu0 0.0
  %2384 = vmatprep.subr.mxu0 0.0
  %2385 = vmatpush2.msra.mxu0 0.0
  %2386 = vmatprep.subr.mxu0 0.0
  %2387 = vmatpush2.msra.mxu0 0.0
  %2388 = vmatprep.subr.mxu0 0.0
  %2389 = vmatpush2.msra.mxu0 0.0
  %2390 = vmatprep.subr.mxu0 0.0
  %2391 = vmatpush2.msra.mxu0 0.0
  %2392 = vmatprep.subr.mxu0 0.0
  %2393 = vmatpush2.msra.mxu0 0.0
  %2394 = vmatprep.subr.mxu0 0.0
  %2395 = vmatpush2.msra.mxu0 0.0
  %2396 = vmatprep.subr.mxu0 0.0
  %2397 = vmatpush2.msra.mxu0 0.0
  %2398 = vmatprep.subr.mxu0 0.0
  %2399 = vmatpush2.msra.mxu0 0.0
  %2400 = vmatprep.subr.mxu0 0.0
  %2401 = vmatpush2.msra.mxu0 0.0
  %2402 = vmatprep.subr.mxu0 0.0
  %2403 = vmatpush2.msra.mxu0 0.0
  %2404 = vmatprep.subr.mxu0 0.0
  %2405 = vmatpush2.msra.mxu0 0.0
  %2406 = vmatprep.subr.mxu0 0.0
  %2407 = vmatpush2.msra.mxu0 0.0
  %2408 = vmatprep.subr.mxu0 0.0
  %2409 = vmatpush2.msra.mxu0 0.0
  %2410 = vmatprep.mubr.f32.mxu0 0.0
  %2411 = vmatmul.mubr.f32.gmra.mxu0 %v672
  %v2412 = vpop.f32.mrf.mxu0
  %v2413 = vadd.f32 0.0, %v2412
  %v2414 = vpop.f32.mrf.mxu0
  %2415 = vmatprep.mubr.f32.mxu0 0.0
  %2416 = vmatmul.mubr.f32.gmra.mxu0 %v675
  %v2417 = vpop.f32.mrf.mxu0
  %v2418 = vadd.f32 0.0, %v2417
  %v2419 = vpop.f32.mrf.mxu0
  %2420 = vdwg.mxu0
  %2421 = vmatprep.subr.mxu0 0.0
  %2422 = vmatpush1.msra.mxu0 0.0
  %2423 = vmatprep.subr.mxu0 0.0
  %2424 = vmatpush1.msra.mxu0 0.0
  %2425 = vmatprep.subr.mxu0 0.0
  %2426 = vmatpush1.msra.mxu0 0.0
  %2427 = vmatprep.subr.mxu0 0.0
  %2428 = vmatpush1.msra.mxu0 0.0
  %2429 = vmatprep.subr.mxu0 0.0
  %2430 = vmatpush1.msra.mxu0 0.0
  %2431 = vmatprep.subr.mxu0 0.0
  %2432 = vmatpush1.msra.mxu0 0.0
  %2433 = vmatprep.subr.mxu0 0.0
  %2434 = vmatpush1.msra.mxu0 0.0
  %2435 = vmatprep.subr.mxu0 0.0
  %2436 = vmatpush1.msra.mxu0 0.0
  %2437 = vmatprep.subr.mxu0 0.0
  %2438 = vmatpush1.msra.mxu0 0.0
  %2439 = vmatprep.subr.mxu0 0.0
  %2440 = vmatpush1.msra.mxu0 0.0
  %2441 = vmatprep.subr.mxu0 0.0
  %2442 = vmatpush1.msra.mxu0 0.0
  %2443 = vmatprep.subr.mxu0 0.0
  %2444 = vmatpush1.msra.mxu0 0.0
  %2445 = vmatprep.subr.mxu0 0.0
  %2446 = vmatpush1.msra.mxu0 0.0
  %2447 = vmatprep.subr.mxu0 0.0
  %2448 = vmatpush1.msra.mxu0 0.0
  %2449 = vmatprep.subr.mxu0 0.0
  %2450 = vmatpush1.msra.mxu0 %v2008
  %2451 = vmatprep.subr.mxu0 0.0
  %2452 = vmatpush1.msra.mxu0 %v2003
  %2453 = vmatprep.subr.mxu0 0.0
  %2454 = vmatpush2.msra.mxu0 0.0
  %2455 = vmatprep.subr.mxu0 0.0
  %2456 = vmatpush2.msra.mxu0 0.0
  %2457 = vmatprep.subr.mxu0 0.0
  %2458 = vmatpush2.msra.mxu0 0.0
  %2459 = vmatprep.subr.mxu0 0.0
  %2460 = vmatpush2.msra.mxu0 0.0
  %2461 = vmatprep.subr.mxu0 0.0
  %2462 = vmatpush2.msra.mxu0 0.0
  %2463 = vmatprep.subr.mxu0 0.0
  %2464 = vmatpush2.msra.mxu0 0.0
  %2465 = vmatprep.subr.mxu0 0.0
  %2466 = vmatpush2.msra.mxu0 0.0
  %2467 = vmatprep.subr.mxu0 0.0
  %2468 = vmatpush2.msra.mxu0 0.0
  %2469 = vmatprep.subr.mxu0 0.0
  %2470 = vmatpush2.msra.mxu0 0.0
  %2471 = vmatprep.subr.mxu0 0.0
  %2472 = vmatpush2.msra.mxu0 0.0
  %2473 = vmatprep.subr.mxu0 0.0
  %2474 = vmatpush2.msra.mxu0 0.0
  %2475 = vmatprep.subr.mxu0 0.0
  %2476 = vmatpush2.msra.mxu0 0.0
  %2477 = vmatprep.subr.mxu0 0.0
  %2478 = vmatpush2.msra.mxu0 0.0
  %2479 = vmatprep.subr.mxu0 0.0
  %2480 = vmatpush2.msra.mxu0 0.0
  %2481 = vmatprep.subr.mxu0 0.0
  %2482 = vmatpush2.msra.mxu0 0.0
  %2483 = vmatprep.subr.mxu0 0.0
  %2484 = vmatpush2.msra.mxu0 0.0
  %2485 = vmatprep.mubr.f32.mxu0 0.0
  %2486 = vmatmul.mubr.f32.gmra.mxu0 %v753
  %v2487 = vpop.f32.mrf.mxu0
  %v2488 = vadd.f32 0.0, %v2487
  %v2489 = vpop.f32.mrf.mxu0
  %2490 = vmatprep.mubr.f32.mxu0 0.0
  %2491 = vmatmul.mubr.f32.gmra.mxu0 %v756
  %v2492 = vpop.f32.mrf.mxu0
  %v2493 = vadd.f32 0.0, %v2492
  %v2494 = vpop.f32.mrf.mxu0
  %2495 = vdwg.mxu0
  %2496 = vmatprep.subr.mxu0 0.0
  %2497 = vmatpush1.msra.mxu0 0.0
  %2498 = vmatprep.subr.mxu0 0.0
  %2499 = vmatpush1.msra.mxu0 0.0
  %2500 = vmatprep.subr.mxu0 0.0
  %2501 = vmatpush1.msra.mxu0 0.0
  %2502 = vmatprep.subr.mxu0 0.0
  %2503 = vmatpush1.msra.mxu0 0.0
  %2504 = vmatprep.subr.mxu0 0.0
  %2505 = vmatpush1.msra.mxu0 0.0
  %2506 = vmatprep.subr.mxu0 0.0
  %2507 = vmatpush1.msra.mxu0 0.0
  %2508 = vmatprep.subr.mxu0 0.0
  %2509 = vmatpush1.msra.mxu0 0.0
  %2510 = vmatprep.subr.mxu0 0.0
  %2511 = vmatpush1.msra.mxu0 0.0
  %2512 = vmatprep.subr.mxu0 0.0
  %2513 = vmatpush1.msra.mxu0 0.0
  %2514 = vmatprep.subr.mxu0 0.0
  %2515 = vmatpush1.msra.mxu0 0.0
  %2516 = vmatprep.subr.mxu0 0.0
  %2517 = vmatpush1.msra.mxu0 0.0
  %2518 = vmatprep.subr.mxu0 0.0
  %2519 = vmatpush1.msra.mxu0 0.0
  %2520 = vmatprep.subr.mxu0 0.0
  %2521 = vmatpush1.msra.mxu0 0.0
  %2522 = vmatprep.subr.mxu0 0.0
  %2523 = vmatpush1.msra.mxu0 0.0
  %2524 = vmatprep.subr.mxu0 0.0
  %2525 = vmatpush1.msra.mxu0 %v2018
  %2526 = vmatprep.subr.mxu0 0.0
  %2527 = vmatpush1.msra.mxu0 %v2013
  %2528 = vmatprep.subr.mxu0 0.0
  %2529 = vmatpush2.msra.mxu0 0.0
  %2530 = vmatprep.subr.mxu0 0.0
  %2531 = vmatpush2.msra.mxu0 0.0
  %2532 = vmatprep.subr.mxu0 0.0
  %2533 = vmatpush2.msra.mxu0 0.0
  %2534 = vmatprep.subr.mxu0 0.0
  %2535 = vmatpush2.msra.mxu0 0.0
  %2536 = vmatprep.subr.mxu0 0.0
  %2537 = vmatpush2.msra.mxu0 0.0
  %2538 = vmatprep.subr.mxu0 0.0
  %2539 = vmatpush2.msra.mxu0 0.0
  %2540 = vmatprep.subr.mxu0 0.0
  %2541 = vmatpush2.msra.mxu0 0.0
  %2542 = vmatprep.subr.mxu0 0.0
  %2543 = vmatpush2.msra.mxu0 0.0
  %2544 = vmatprep.subr.mxu0 0.0
  %2545 = vmatpush2.msra.mxu0 0.0
  %2546 = vmatprep.subr.mxu0 0.0
  %2547 = vmatpush2.msra.mxu0 0.0
  %2548 = vmatprep.subr.mxu0 0.0
  %2549 = vmatpush2.msra.mxu0 0.0
  %2550 = vmatprep.subr.mxu0 0.0
  %2551 = vmatpush2.msra.mxu0 0.0
  %2552 = vmatprep.subr.mxu0 0.0
  %2553 = vmatpush2.msra.mxu0 0.0
  %2554 = vmatprep.subr.mxu0 0.0
  %2555 = vmatpush2.msra.mxu0 0.0
  %2556 = vmatprep.subr.mxu0 0.0
  %2557 = vmatpush2.msra.mxu0 0.0
  %2558 = vmatprep.subr.mxu0 0.0
  %2559 = vmatpush2.msra.mxu0 0.0
  %2560 = vmatprep.mubr.f32.mxu0 0.0
  %2561 = vmatmul.mubr.f32.gmra.mxu0 %v834
  %v2562 = vpop.f32.mrf.mxu0
  %v2563 = vadd.f32 0.0, %v2562
  %v2564 = vpop.f32.mrf.mxu0
  %2565 = vmatprep.mubr.f32.mxu0 0.0
  %2566 = vmatmul.mubr.f32.gmra.mxu0 %v837
  %v2567 = vpop.f32.mrf.mxu0
  %v2568 = vadd.f32 0.0, %v2567
  %v2569 = vpop.f32.mrf.mxu0
  %2570 = vdwg.mxu0
  %2571 = vmatprep.subr.mxu0 0.0
  %2572 = vmatpush1.msra.mxu0 0.0
  %2573 = vmatprep.subr.mxu0 0.0
  %2574 = vmatpush1.msra.mxu0 0.0
  %2575 = vmatprep.subr.mxu0 0.0
  %2576 = vmatpush1.msra.mxu0 0.0
  %2577 = vmatprep.subr.mxu0 0.0
  %2578 = vmatpush1.msra.mxu0 0.0
  %2579 = vmatprep.subr.mxu0 0.0
  %2580 = vmatpush1.msra.mxu0 0.0
  %2581 = vmatprep.subr.mxu0 0.0
  %2582 = vmatpush1.msra.mxu0 0.0
  %2583 = vmatprep.subr.mxu0 0.0
  %2584 = vmatpush1.msra.mxu0 0.0
  %2585 = vmatprep.subr.mxu0 0.0
  %2586 = vmatpush1.msra.mxu0 0.0
  %2587 = vmatprep.subr.mxu0 0.0
  %2588 = vmatpush1.msra.mxu0 0.0
  %2589 = vmatprep.subr.mxu0 0.0
  %2590 = vmatpush1.msra.mxu0 0.0
  %2591 = vmatprep.subr.mxu0 0.0
  %2592 = vmatpush1.msra.mxu0 0.0
  %2593 = vmatprep.subr.mxu0 0.0
  %2594 = vmatpush1.msra.mxu0 0.0
  %2595 = vmatprep.subr.mxu0 0.0
  %2596 = vmatpush1.msra.mxu0 0.0
  %2597 = vmatprep.subr.mxu0 0.0
  %2598 = vmatpush1.msra.mxu0 0.0
  %2599 = vmatprep.subr.mxu0 0.0
  %2600 = vmatpush1.msra.mxu0 %v2028
  %2601 = vmatprep.subr.mxu0 0.0
  %2602 = vmatpush1.msra.mxu0 %v2023
  %2603 = vmatprep.subr.mxu0 0.0
  %2604 = vmatpush2.msra.mxu0 0.0
  %2605 = vmatprep.subr.mxu0 0.0
  %2606 = vmatpush2.msra.mxu0 0.0
  %2607 = vmatprep.subr.mxu0 0.0
  %2608 = vmatpush2.msra.mxu0 0.0
  %2609 = vmatprep.subr.mxu0 0.0
  %2610 = vmatpush2.msra.mxu0 0.0
  %2611 = vmatprep.subr.mxu0 0.0
  %2612 = vmatpush2.msra.mxu0 0.0
  %2613 = vmatprep.subr.mxu0 0.0
  %2614 = vmatpush2.msra.mxu0 0.0
  %2615 = vmatprep.subr.mxu0 0.0
  %2616 = vmatpush2.msra.mxu0 0.0
  %2617 = vmatprep.subr.mxu0 0.0
  %2618 = vmatpush2.msra.mxu0 0.0
  %2619 = vmatprep.subr.mxu0 0.0
  %2620 = vmatpush2.msra.mxu0 0.0
  %2621 = vmatprep.subr.mxu0 0.0
  %2622 = vmatpush2.msra.mxu0 0.0
  %2623 = vmatprep.subr.mxu0 0.0
  %2624 = vmatpush2.msra.mxu0 0.0
  %2625 = vmatprep.subr.mxu0 0.0
  %2626 = vmatpush2.msra.mxu0 0.0
  %2627 = vmatprep.subr.mxu0 0.0
  %2628 = vmatpush2.msra.mxu0 0.0
  %2629 = vmatprep.subr.mxu0 0.0
  %2630 = vmatpush2.msra.mxu0 0.0
  %2631 = vmatprep.subr.mxu0 0.0
  %2632 = vmatpush2.msra.mxu0 0.0
  %2633 = vmatprep.subr.mxu0 0.0
  %2634 = vmatpush2.msra.mxu0 0.0
  %2635 = vmatprep.mubr.f32.mxu0 0.0
  %2636 = vmatmul.mubr.f32.gmra.mxu0 %v915
  %v2637 = vpop.f32.mrf.mxu0
  %v2638 = vadd.f32 0.0, %v2637
  %v2639 = vpop.f32.mrf.mxu0
  %2640 = vmatprep.mubr.f32.mxu0 0.0
  %2641 = vmatmul.mubr.f32.gmra.mxu0 %v918
  %v2642 = vpop.f32.mrf.mxu0
  %v2643 = vadd.f32 0.0, %v2642
  %v2644 = vpop.f32.mrf.mxu0
  %2645 = vdwg.mxu0
  %2646 = vmatprep.subr.mxu0 0.0
  %2647 = vmatpush1.msra.mxu0 0.0
  %2648 = vmatprep.subr.mxu0 0.0
  %2649 = vmatpush1.msra.mxu0 0.0
  %2650 = vmatprep.subr.mxu0 0.0
  %2651 = vmatpush1.msra.mxu0 0.0
  %2652 = vmatprep.subr.mxu0 0.0
  %2653 = vmatpush1.msra.mxu0 0.0
  %2654 = vmatprep.subr.mxu0 0.0
  %2655 = vmatpush1.msra.mxu0 0.0
  %2656 = vmatprep.subr.mxu0 0.0
  %2657 = vmatpush1.msra.mxu0 0.0
  %2658 = vmatprep.subr.mxu0 0.0
  %2659 = vmatpush1.msra.mxu0 0.0
  %2660 = vmatprep.subr.mxu0 0.0
  %2661 = vmatpush1.msra.mxu0 0.0
  %2662 = vmatprep.subr.mxu0 0.0
  %2663 = vmatpush1.msra.mxu0 0.0
  %2664 = vmatprep.subr.mxu0 0.0
  %2665 = vmatpush1.msra.mxu0 0.0
  %2666 = vmatprep.subr.mxu0 0.0
  %2667 = vmatpush1.msra.mxu0 0.0
  %2668 = vmatprep.subr.mxu0 0.0
  %2669 = vmatpush1.msra.mxu0 0.0
  %2670 = vmatprep.subr.mxu0 0.0
  %2671 = vmatpush1.msra.mxu0 0.0
  %2672 = vmatprep.subr.mxu0 0.0
  %2673 = vmatpush1.msra.mxu0 0.0
  %2674 = vmatprep.subr.mxu0 0.0
  %2675 = vmatpush1.msra.mxu0 %v2038
  %2676 = vmatprep.subr.mxu0 0.0
  %2677 = vmatpush1.msra.mxu0 %v2033
  %2678 = vmatprep.subr.mxu0 0.0
  %2679 = vmatpush2.msra.mxu0 0.0
  %2680 = vmatprep.subr.mxu0 0.0
  %2681 = vmatpush2.msra.mxu0 0.0
  %2682 = vmatprep.subr.mxu0 0.0
  %2683 = vmatpush2.msra.mxu0 0.0
  %2684 = vmatprep.subr.mxu0 0.0
  %2685 = vmatpush2.msra.mxu0 0.0
  %2686 = vmatprep.subr.mxu0 0.0
  %2687 = vmatpush2.msra.mxu0 0.0
  %2688 = vmatprep.subr.mxu0 0.0
  %2689 = vmatpush2.msra.mxu0 0.0
  %2690 = vmatprep.subr.mxu0 0.0
  %2691 = vmatpush2.msra.mxu0 0.0
  %2692 = vmatprep.subr.mxu0 0.0
  %2693 = vmatpush2.msra.mxu0 0.0
  %2694 = vmatprep.subr.mxu0 0.0
  %2695 = vmatpush2.msra.mxu0 0.0
  %2696 = vmatprep.subr.mxu0 0.0
  %2697 = vmatpush2.msra.mxu0 0.0
  %2698 = vmatprep.subr.mxu0 0.0
  %2699 = vmatpush2.msra.mxu0 0.0
  %2700 = vmatprep.subr.mxu0 0.0
  %2701 = vmatpush2.msra.mxu0 0.0
  %2702 = vmatprep.subr.mxu0 0.0
  %2703 = vmatpush2.msra.mxu0 0.0
  %2704 = vmatprep.subr.mxu0 0.0
  %2705 = vmatpush2.msra.mxu0 0.0
  %2706 = vmatprep.subr.mxu0 0.0
  %2707 = vmatpush2.msra.mxu0 0.0
  %2708 = vmatprep.subr.mxu0 0.0
  %2709 = vmatpush2.msra.mxu0 0.0
  %2710 = vmatprep.mubr.f32.mxu0 0.0
  %2711 = vmatmul.mubr.f32.gmra.mxu0 %v996
  %v2712 = vpop.f32.mrf.mxu0
  %v2713 = vadd.f32 0.0, %v2712
  %v2714 = vpop.f32.mrf.mxu0
  %2715 = vmatprep.mubr.f32.mxu0 0.0
  %2716 = vmatmul.mubr.f32.gmra.mxu0 %v999
  %v2717 = vpop.f32.mrf.mxu0
  %v2718 = vadd.f32 0.0, %v2717
  %v2719 = vpop.f32.mrf.mxu0
  %2720 = vdwg.mxu0
  %2721 = vmatprep.subr.mxu0 0.0
  %2722 = vmatpush1.msra.mxu0 0.0
  %2723 = vmatprep.subr.mxu0 0.0
  %2724 = vmatpush1.msra.mxu0 0.0
  %2725 = vmatprep.subr.mxu0 0.0
  %2726 = vmatpush1.msra.mxu0 0.0
  %2727 = vmatprep.subr.mxu0 0.0
  %2728 = vmatpush1.msra.mxu0 0.0
  %2729 = vmatprep.subr.mxu0 0.0
  %2730 = vmatpush1.msra.mxu0 0.0
  %2731 = vmatprep.subr.mxu0 0.0
  %2732 = vmatpush1.msra.mxu0 0.0
  %2733 = vmatprep.subr.mxu0 0.0
  %2734 = vmatpush1.msra.mxu0 0.0
  %2735 = vmatprep.subr.mxu0 0.0
  %2736 = vmatpush1.msra.mxu0 0.0
  %2737 = vmatprep.subr.mxu0 0.0
  %2738 = vmatpush1.msra.mxu0 0.0
  %2739 = vmatprep.subr.mxu0 0.0
  %2740 = vmatpush1.msra.mxu0 0.0
  %2741 = vmatprep.subr.mxu0 0.0
  %2742 = vmatpush1.msra.mxu0 0.0
  %2743 = vmatprep.subr.mxu0 0.0
  %2744 = vmatpush1.msra.mxu0 0.0
  %2745 = vmatprep.subr.mxu0 0.0
  %2746 = vmatpush1.msra.mxu0 0.0
  %2747 = vmatprep.subr.mxu0 0.0
  %2748 = vmatpush1.msra.mxu0 0.0
  %2749 = vmatprep.subr.mxu0 0.0
  %2750 = vmatpush1.msra.mxu0 %v2048
  %2751 = vmatprep.subr.mxu0 0.0
  %2752 = vmatpush1.msra.mxu0 %v2043
  %2753 = vmatprep.subr.mxu0 0.0
  %2754 = vmatpush2.msra.mxu0 0.0
  %2755 = vmatprep.subr.mxu0 0.0
  %2756 = vmatpush2.msra.mxu0 0.0
  %2757 = vmatprep.subr.mxu0 0.0
  %2758 = vmatpush2.msra.mxu0 0.0
  %2759 = vmatprep.subr.mxu0 0.0
  %2760 = vmatpush2.msra.mxu0 0.0
  %2761 = vmatprep.subr.mxu0 0.0
  %2762 = vmatpush2.msra.mxu0 0.0
  %2763 = vmatprep.subr.mxu0 0.0
  %2764 = vmatpush2.msra.mxu0 0.0
  %2765 = vmatprep.subr.mxu0 0.0
  %2766 = vmatpush2.msra.mxu0 0.0
  %2767 = vmatprep.subr.mxu0 0.0
  %2768 = vmatpush2.msra.mxu0 0.0
  %2769 = vmatprep.subr.mxu0 0.0
  %2770 = vmatpush2.msra.mxu0 0.0
  %2771 = vmatprep.subr.mxu0 0.0
  %2772 = vmatpush2.msra.mxu0 0.0
  %2773 = vmatprep.subr.mxu0 0.0
  %2774 = vmatpush2.msra.mxu0 0.0
  %2775 = vmatprep.subr.mxu0 0.0
  %2776 = vmatpush2.msra.mxu0 0.0
  %2777 = vmatprep.subr.mxu0 0.0
  %2778 = vmatpush2.msra.mxu0 0.0
  %2779 = vmatprep.subr.mxu0 0.0
  %2780 = vmatpush2.msra.mxu0 0.0
  %2781 = vmatprep.subr.mxu0 0.0
  %2782 = vmatpush2.msra.mxu0 0.0
  %2783 = vmatprep.subr.mxu0 0.0
  %2784 = vmatpush2.msra.mxu0 0.0
  %2785 = vmatprep.mubr.f32.mxu0 0.0
  %2786 = vmatmul.mubr.f32.gmra.mxu0 %v1077
  %v2787 = vpop.f32.mrf.mxu0
  %v2788 = vadd.f32 0.0, %v2787
  %v2789 = vpop.f32.mrf.mxu0
  %2790 = vmatprep.mubr.f32.mxu0 0.0
  %2791 = vmatmul.mubr.f32.gmra.mxu0 %v1080
  %v2792 = vpop.f32.mrf.mxu0
  %v2793 = vadd.f32 0.0, %v2792
  %v2794 = vpop.f32.mrf.mxu0
  %2795 = vdwg.mxu0
  %2796 = vmatprep.subr.mxu0 0.0
  %2797 = vmatpush1.msra.mxu0 0.0
  %2798 = vmatprep.subr.mxu0 0.0
  %2799 = vmatpush1.msra.mxu0 0.0
  %2800 = vmatprep.subr.mxu0 0.0
  %2801 = vmatpush1.msra.mxu0 0.0
  %2802 = vmatprep.subr.mxu0 0.0
  %2803 = vmatpush1.msra.mxu0 0.0
  %2804 = vmatprep.subr.mxu0 0.0
  %2805 = vmatpush1.msra.mxu0 0.0
  %2806 = vmatprep.subr.mxu0 0.0
  %2807 = vmatpush1.msra.mxu0 0.0
  %2808 = vmatprep.subr.mxu0 0.0
  %2809 = vmatpush1.msra.mxu0 0.0
  %2810 = vmatprep.subr.mxu0 0.0
  %2811 = vmatpush1.msra.mxu0 0.0
  %2812 = vmatprep.subr.mxu0 0.0
  %2813 = vmatpush1.msra.mxu0 0.0
  %2814 = vmatprep.subr.mxu0 0.0
  %2815 = vmatpush1.msra.mxu0 0.0
  %2816 = vmatprep.subr.mxu0 0.0
  %2817 = vmatpush1.msra.mxu0 0.0
  %2818 = vmatprep.subr.mxu0 0.0
  %2819 = vmatpush1.msra.mxu0 0.0
  %2820 = vmatprep.subr.mxu0 0.0
  %2821 = vmatpush1.msra.mxu0 0.0
  %2822 = vmatprep.subr.mxu0 0.0
  %2823 = vmatpush1.msra.mxu0 0.0
  %2824 = vmatprep.subr.mxu0 0.0
  %2825 = vmatpush1.msra.mxu0 %v2058
  %2826 = vmatprep.subr.mxu0 0.0
  %2827 = vmatpush1.msra.mxu0 %v2053
  %2828 = vmatprep.subr.mxu0 0.0
  %2829 = vmatpush2.msra.mxu0 0.0
  %2830 = vmatprep.subr.mxu0 0.0
  %2831 = vmatpush2.msra.mxu0 0.0
  %2832 = vmatprep.subr.mxu0 0.0
  %2833 = vmatpush2.msra.mxu0 0.0
  %2834 = vmatprep.subr.mxu0 0.0
  %2835 = vmatpush2.msra.mxu0 0.0
  %2836 = vmatprep.subr.mxu0 0.0
  %2837 = vmatpush2.msra.mxu0 0.0
  %2838 = vmatprep.subr.mxu0 0.0
  %2839 = vmatpush2.msra.mxu0 0.0
  %2840 = vmatprep.subr.mxu0 0.0
  %2841 = vmatpush2.msra.mxu0 0.0
  %2842 = vmatprep.subr.mxu0 0.0
  %2843 = vmatpush2.msra.mxu0 0.0
  %2844 = vmatprep.subr.mxu0 0.0
  %2845 = vmatpush2.msra.mxu0 0.0
  %2846 = vmatprep.subr.mxu0 0.0
  %2847 = vmatpush2.msra.mxu0 0.0
  %2848 = vmatprep.subr.mxu0 0.0
  %2849 = vmatpush2.msra.mxu0 0.0
  %2850 = vmatprep.subr.mxu0 0.0
  %2851 = vmatpush2.msra.mxu0 0.0
  %2852 = vmatprep.subr.mxu0 0.0
  %2853 = vmatpush2.msra.mxu0 0.0
  %2854 = vmatprep.subr.mxu0 0.0
  %2855 = vmatpush2.msra.mxu0 0.0
  %2856 = vmatprep.subr.mxu0 0.0
  %2857 = vmatpush2.msra.mxu0 0.0
  %2858 = vmatprep.subr.mxu0 0.0
  %2859 = vmatpush2.msra.mxu0 0.0
  %2860 = vmatprep.mubr.f32.mxu0 0.0
  %2861 = vmatmul.mubr.f32.gmra.mxu0 %v1158
  %v2862 = vpop.f32.mrf.mxu0
  %v2863 = vadd.f32 0.0, %v2862
  %v2864 = vpop.f32.mrf.mxu0
  %2865 = vmatprep.mubr.f32.mxu0 0.0
  %2866 = vmatmul.mubr.f32.gmra.mxu0 %v1161
  %v2867 = vpop.f32.mrf.mxu0
  %v2868 = vadd.f32 0.0, %v2867
  %v2869 = vpop.f32.mrf.mxu0
  %2870 = vdwg.mxu0
  %2871 = vmatprep.subr.mxu0 0.0
  %2872 = vmatpush1.msra.mxu0 0.0
  %2873 = vmatprep.subr.mxu0 0.0
  %2874 = vmatpush1.msra.mxu0 0.0
  %2875 = vmatprep.subr.mxu0 0.0
  %2876 = vmatpush1.msra.mxu0 0.0
  %2877 = vmatprep.subr.mxu0 0.0
  %2878 = vmatpush1.msra.mxu0 0.0
  %2879 = vmatprep.subr.mxu0 0.0
  %2880 = vmatpush1.msra.mxu0 0.0
  %2881 = vmatprep.subr.mxu0 0.0
  %2882 = vmatpush1.msra.mxu0 0.0
  %2883 = vmatprep.subr.mxu0 0.0
  %2884 = vmatpush1.msra.mxu0 0.0
  %2885 = vmatprep.subr.mxu0 0.0
  %2886 = vmatpush1.msra.mxu0 0.0
  %2887 = vmatprep.subr.mxu0 0.0
  %2888 = vmatpush1.msra.mxu0 0.0
  %2889 = vmatprep.subr.mxu0 0.0
  %2890 = vmatpush1.msra.mxu0 0.0
  %2891 = vmatprep.subr.mxu0 0.0
  %2892 = vmatpush1.msra.mxu0 0.0
  %2893 = vmatprep.subr.mxu0 0.0
  %2894 = vmatpush1.msra.mxu0 0.0
  %2895 = vmatprep.subr.mxu0 0.0
  %2896 = vmatpush1.msra.mxu0 0.0
  %2897 = vmatprep.subr.mxu0 0.0
  %2898 = vmatpush1.msra.mxu0 0.0
  %2899 = vmatprep.subr.mxu0 0.0
  %2900 = vmatpush1.msra.mxu0 %v2068
  %2901 = vmatprep.subr.mxu0 0.0
  %2902 = vmatpush1.msra.mxu0 %v2063
  %2903 = vmatprep.subr.mxu0 0.0
  %2904 = vmatpush2.msra.mxu0 0.0
  %2905 = vmatprep.subr.mxu0 0.0
  %2906 = vmatpush2.msra.mxu0 0.0
  %2907 = vmatprep.subr.mxu0 0.0
  %2908 = vmatpush2.msra.mxu0 0.0
  %2909 = vmatprep.subr.mxu0 0.0
  %2910 = vmatpush2.msra.mxu0 0.0
  %2911 = vmatprep.subr.mxu0 0.0
  %2912 = vmatpush2.msra.mxu0 0.0
  %2913 = vmatprep.subr.mxu0 0.0
  %2914 = vmatpush2.msra.mxu0 0.0
  %2915 = vmatprep.subr.mxu0 0.0
  %2916 = vmatpush2.msra.mxu0 0.0
  %2917 = vmatprep.subr.mxu0 0.0
  %2918 = vmatpush2.msra.mxu0 0.0
  %2919 = vmatprep.subr.mxu0 0.0
  %2920 = vmatpush2.msra.mxu0 0.0
  %2921 = vmatprep.subr.mxu0 0.0
  %2922 = vmatpush2.msra.mxu0 0.0
  %2923 = vmatprep.subr.mxu0 0.0
  %2924 = vmatpush2.msra.mxu0 0.0
  %2925 = vmatprep.subr.mxu0 0.0
  %2926 = vmatpush2.msra.mxu0 0.0
  %2927 = vmatprep.subr.mxu0 0.0
  %2928 = vmatpush2.msra.mxu0 0.0
  %2929 = vmatprep.subr.mxu0 0.0
  %2930 = vmatpush2.msra.mxu0 0.0
  %2931 = vmatprep.subr.mxu0 0.0
  %2932 = vmatpush2.msra.mxu0 0.0
  %2933 = vmatprep.subr.mxu0 0.0
  %2934 = vmatpush2.msra.mxu0 0.0
  %2935 = vmatprep.mubr.f32.mxu0 0.0
  %2936 = vmatmul.mubr.f32.gmra.mxu0 %v1239
  %v2937 = vpop.f32.mrf.mxu0
  %v2938 = vadd.f32 0.0, %v2937
  %v2939 = vpop.f32.mrf.mxu0
  %2940 = vmatprep.mubr.f32.mxu0 0.0
  %2941 = vmatmul.mubr.f32.gmra.mxu0 %v1242
  %v2942 = vpop.f32.mrf.mxu0
  %v2943 = vadd.f32 0.0, %v2942
  %v2944 = vpop.f32.mrf.mxu0
  %2945 = vdwg.mxu0
  %2946 = vmatprep.subr.mxu0 0.0
  %2947 = vmatpush1.msra.mxu0 0.0
  %2948 = vmatprep.subr.mxu0 0.0
  %2949 = vmatpush1.msra.mxu0 0.0
  %2950 = vmatprep.subr.mxu0 0.0
  %2951 = vmatpush1.msra.mxu0 0.0
  %2952 = vmatprep.subr.mxu0 0.0
  %2953 = vmatpush1.msra.mxu0 0.0
  %2954 = vmatprep.subr.mxu0 0.0
  %2955 = vmatpush1.msra.mxu0 0.0
  %2956 = vmatprep.subr.mxu0 0.0
  %2957 = vmatpush1.msra.mxu0 0.0
  %2958 = vmatprep.subr.mxu0 0.0
  %2959 = vmatpush1.msra.mxu0 0.0
  %2960 = vmatprep.subr.mxu0 0.0
  %2961 = vmatpush1.msra.mxu0 0.0
  %2962 = vmatprep.subr.mxu0 0.0
  %2963 = vmatpush1.msra.mxu0 0.0
  %2964 = vmatprep.subr.mxu0 0.0
  %2965 = vmatpush1.msra.mxu0 0.0
  %2966 = vmatprep.subr.mxu0 0.0
  %2967 = vmatpush1.msra.mxu0 0.0
  %2968 = vmatprep.subr.mxu0 0.0
  %2969 = vmatpush1.msra.mxu0 0.0
  %2970 = vmatprep.subr.mxu0 0.0
  %2971 = vmatpush1.msra.mxu0 0.0
  %2972 = vmatprep.subr.mxu0 0.0
  %2973 = vmatpush1.msra.mxu0 0.0
  %2974 = vmatprep.subr.mxu0 0.0
  %2975 = vmatpush1.msra.mxu0 %v2078
  %2976 = vmatprep.subr.mxu0 0.0
  %2977 = vmatpush1.msra.mxu0 %v2073
  %2978 = vmatprep.subr.mxu0 0.0
  %2979 = vmatpush2.msra.mxu0 0.0
  %2980 = vmatprep.subr.mxu0 0.0
  %2981 = vmatpush2.msra.mxu0 0.0
  %2982 = vmatprep.subr.mxu0 0.0
  %2983 = vmatpush2.msra.mxu0 0.0
  %2984 = vmatprep.subr.mxu0 0.0
  %2985 = vmatpush2.msra.mxu0 0.0
  %2986 = vmatprep.subr.mxu0 0.0
  %2987 = vmatpush2.msra.mxu0 0.0
  %2988 = vmatprep.subr.mxu0 0.0
  %2989 = vmatpush2.msra.mxu0 0.0
  %2990 = vmatprep.subr.mxu0 0.0
  %2991 = vmatpush2.msra.mxu0 0.0
  %2992 = vmatprep.subr.mxu0 0.0
  %2993 = vmatpush2.msra.mxu0 0.0
  %2994 = vmatprep.subr.mxu0 0.0
  %2995 = vmatpush2.msra.mxu0 0.0
  %2996 = vmatprep.subr.mxu0 0.0
  %2997 = vmatpush2.msra.mxu0 0.0
  %2998 = vmatprep.subr.mxu0 0.0
  %2999 = vmatpush2.msra.mxu0 0.0
  %3000 = vmatprep.subr.mxu0 0.0
  %3001 = vmatpush2.msra.mxu0 0.0
  %3002 = vmatprep.subr.mxu0 0.0
  %3003 = vmatpush2.msra.mxu0 0.0
  %3004 = vmatprep.subr.mxu0 0.0
  %3005 = vmatpush2.msra.mxu0 0.0
  %3006 = vmatprep.subr.mxu0 0.0
  %3007 = vmatpush2.msra.mxu0 0.0
  %3008 = vmatprep.subr.mxu0 0.0
  %3009 = vmatpush2.msra.mxu0 0.0
  %3010 = vmatprep.mubr.f32.mxu0 0.0
  %3011 = vmatmul.mubr.f32.gmra.mxu0 %v1320
  %v3012 = vpop.f32.mrf.mxu0
  %v3013 = vadd.f32 0.0, %v3012
  %v3014 = vpop.f32.mrf.mxu0
  %3015 = vmatprep.mubr.f32.mxu0 0.0
  %3016 = vmatmul.mubr.f32.gmra.mxu0 %v1323
  %v3017 = vpop.f32.mrf.mxu0
  %v3018 = vadd.f32 0.0, %v3017
  %v3019 = vpop.f32.mrf.mxu0
  %3020 = vdwg.mxu0
  %3021 = vmatprep.subr.mxu0 0.0
  %3022 = vmatpush1.msra.mxu0 0.0
  %3023 = vmatprep.subr.mxu0 0.0
  %3024 = vmatpush1.msra.mxu0 0.0
  %3025 = vmatprep.subr.mxu0 0.0
  %3026 = vmatpush1.msra.mxu0 0.0
  %3027 = vmatprep.subr.mxu0 0.0
  %3028 = vmatpush1.msra.mxu0 0.0
  %3029 = vmatprep.subr.mxu0 0.0
  %3030 = vmatpush1.msra.mxu0 0.0
  %3031 = vmatprep.subr.mxu0 0.0
  %3032 = vmatpush1.msra.mxu0 0.0
  %3033 = vmatprep.subr.mxu0 0.0
  %3034 = vmatpush1.msra.mxu0 0.0
  %3035 = vmatprep.subr.mxu0 0.0
  %3036 = vmatpush1.msra.mxu0 0.0
  %3037 = vmatprep.subr.mxu0 0.0
  %3038 = vmatpush1.msra.mxu0 0.0
  %3039 = vmatprep.subr.mxu0 0.0
  %3040 = vmatpush1.msra.mxu0 0.0
  %3041 = vmatprep.subr.mxu0 0.0
  %3042 = vmatpush1.msra.mxu0 0.0
  %3043 = vmatprep.subr.mxu0 0.0
  %3044 = vmatpush1.msra.mxu0 0.0
  %3045 = vmatprep.subr.mxu0 0.0
  %3046 = vmatpush1.msra.mxu0 0.0
  %3047 = vmatprep.subr.mxu0 0.0
  %3048 = vmatpush1.msra.mxu0 0.0
  %3049 = vmatprep.subr.mxu0 0.0
  %3050 = vmatpush1.msra.mxu0 %v2088
  %3051 = vmatprep.subr.mxu0 0.0
  %3052 = vmatpush1.msra.mxu0 %v2083
  %3053 = vmatprep.subr.mxu0 0.0
  %3054 = vmatpush2.msra.mxu0 0.0
  %3055 = vmatprep.subr.mxu0 0.0
  %3056 = vmatpush2.msra.mxu0 0.0
  %3057 = vmatprep.subr.mxu0 0.0
  %3058 = vmatpush2.msra.mxu0 0.0
  %3059 = vmatprep.subr.mxu0 0.0
  %3060 = vmatpush2.msra.mxu0 0.0
  %3061 = vmatprep.subr.mxu0 0.0
  %3062 = vmatpush2.msra.mxu0 0.0
  %3063 = vmatprep.subr.mxu0 0.0
  %3064 = vmatpush2.msra.mxu0 0.0
  %3065 = vmatprep.subr.mxu0 0.0
  %3066 = vmatpush2.msra.mxu0 0.0
  %3067 = vmatprep.subr.mxu0 0.0
  %3068 = vmatpush2.msra.mxu0 0.0
  %3069 = vmatprep.subr.mxu0 0.0
  %3070 = vmatpush2.msra.mxu0 0.0
  %3071 = vmatprep.subr.mxu0 0.0
  %3072 = vmatpush2.msra.mxu0 0.0
  %3073 = vmatprep.subr.mxu0 0.0
  %3074 = vmatpush2.msra.mxu0 0.0
  %3075 = vmatprep.subr.mxu0 0.0
  %3076 = vmatpush2.msra.mxu0 0.0
  %3077 = vmatprep.subr.mxu0 0.0
  %3078 = vmatpush2.msra.mxu0 0.0
  %3079 = vmatprep.subr.mxu0 0.0
  %3080 = vmatpush2.msra.mxu0 0.0
  %3081 = vmatprep.subr.mxu0 0.0
  %3082 = vmatpush2.msra.mxu0 0.0
  %3083 = vmatprep.subr.mxu0 0.0
  %3084 = vmatpush2.msra.mxu0 0.0
  %3085 = vmatprep.mubr.f32.mxu0 0.0
  %3086 = vmatmul.mubr.f32.gmra.mxu0 %v1401
  %v3087 = vpop.f32.mrf.mxu0
  %v3088 = vadd.f32 0.0, %v3087
  %v3089 = vpop.f32.mrf.mxu0
  %3090 = vmatprep.mubr.f32.mxu0 0.0
  %3091 = vmatmul.mubr.f32.gmra.mxu0 %v1404
  %v3092 = vpop.f32.mrf.mxu0
  %v3093 = vadd.f32 0.0, %v3092
  %v3094 = vpop.f32.mrf.mxu0
  %3095 = vdwg.mxu0
  %3096 = vmatprep.subr.mxu0 0.0
  %3097 = vmatpush1.msra.mxu0 0.0
  %3098 = vmatprep.subr.mxu0 0.0
  %3099 = vmatpush1.msra.mxu0 0.0
  %3100 = vmatprep.subr.mxu0 0.0
  %3101 = vmatpush1.msra.mxu0 0.0
  %3102 = vmatprep.subr.mxu0 0.0
  %3103 = vmatpush1.msra.mxu0 0.0
  %3104 = vmatprep.subr.mxu0 0.0
  %3105 = vmatpush1.msra.mxu0 0.0
  %3106 = vmatprep.subr.mxu0 0.0
  %3107 = vmatpush1.msra.mxu0 0.0
  %3108 = vmatprep.subr.mxu0 0.0
  %3109 = vmatpush1.msra.mxu0 0.0
  %3110 = vmatprep.subr.mxu0 0.0
  %3111 = vmatpush1.msra.mxu0 0.0
  %3112 = vmatprep.subr.mxu0 0.0
  %3113 = vmatpush1.msra.mxu0 0.0
  %3114 = vmatprep.subr.mxu0 0.0
  %3115 = vmatpush1.msra.mxu0 0.0
  %3116 = vmatprep.subr.mxu0 0.0
  %3117 = vmatpush1.msra.mxu0 0.0
  %3118 = vmatprep.subr.mxu0 0.0
  %3119 = vmatpush1.msra.mxu0 0.0
  %3120 = vmatprep.subr.mxu0 0.0
  %3121 = vmatpush1.msra.mxu0 0.0
  %3122 = vmatprep.subr.mxu0 0.0
  %3123 = vmatpush1.msra.mxu0 0.0
  %3124 = vmatprep.subr.mxu0 0.0
  %3125 = vmatpush1.msra.mxu0 %v2098
  %3126 = vmatprep.subr.mxu0 0.0
  %3127 = vmatpush1.msra.mxu0 %v2093
  %3128 = vmatprep.subr.mxu0 0.0
  %3129 = vmatpush2.msra.mxu0 0.0
  %3130 = vmatprep.subr.mxu0 0.0
  %3131 = vmatpush2.msra.mxu0 0.0
  %3132 = vmatprep.subr.mxu0 0.0
  %3133 = vmatpush2.msra.mxu0 0.0
  %3134 = vmatprep.subr.mxu0 0.0
  %3135 = vmatpush2.msra.mxu0 0.0
  %3136 = vmatprep.subr.mxu0 0.0
  %3137 = vmatpush2.msra.mxu0 0.0
  %3138 = vmatprep.subr.mxu0 0.0
  %3139 = vmatpush2.msra.mxu0 0.0
  %3140 = vmatprep.subr.mxu0 0.0
  %3141 = vmatpush2.msra.mxu0 0.0
  %3142 = vmatprep.subr.mxu0 0.0
  %3143 = vmatpush2.msra.mxu0 0.0
  %3144 = vmatprep.subr.mxu0 0.0
  %3145 = vmatpush2.msra.mxu0 0.0
  %3146 = vmatprep.subr.mxu0 0.0
  %3147 = vmatpush2.msra.mxu0 0.0
  %3148 = vmatprep.subr.mxu0 0.0
  %3149 = vmatpush2.msra.mxu0 0.0
  %3150 = vmatprep.subr.mxu0 0.0
  %3151 = vmatpush2.msra.mxu0 0.0
  %3152 = vmatprep.subr.mxu0 0.0
  %3153 = vmatpush2.msra.mxu0 0.0
  %3154 = vmatprep.subr.mxu0 0.0
  %3155 = vmatpush2.msra.mxu0 0.0
  %3156 = vmatprep.subr.mxu0 0.0
  %3157 = vmatpush2.msra.mxu0 0.0
  %3158 = vmatprep.subr.mxu0 0.0
  %3159 = vmatpush2.msra.mxu0 0.0
  %3160 = vmatprep.mubr.f32.mxu0 0.0
  %3161 = vmatmul.mubr.f32.gmra.mxu0 %v1482
  %v3162 = vpop.f32.mrf.mxu0
  %v3163 = vadd.f32 0.0, %v3162
  %v3164 = vpop.f32.mrf.mxu0
  %3165 = vmatprep.mubr.f32.mxu0 0.0
  %3166 = vmatmul.mubr.f32.gmra.mxu0 %v1485
  %v3167 = vpop.f32.mrf.mxu0
  %v3168 = vadd.f32 0.0, %v3167
  %v3169 = vpop.f32.mrf.mxu0
  %3170 = vdwg.mxu0
  %3171 = vmatprep.subr.mxu0 0.0
  %3172 = vmatpush1.msra.mxu0 0.0
  %3173 = vmatprep.subr.mxu0 0.0
  %3174 = vmatpush1.msra.mxu0 0.0
  %3175 = vmatprep.subr.mxu0 0.0
  %3176 = vmatpush1.msra.mxu0 0.0
  %3177 = vmatprep.subr.mxu0 0.0
  %3178 = vmatpush1.msra.mxu0 0.0
  %3179 = vmatprep.subr.mxu0 0.0
  %3180 = vmatpush1.msra.mxu0 0.0
  %3181 = vmatprep.subr.mxu0 0.0
  %3182 = vmatpush1.msra.mxu0 0.0
  %3183 = vmatprep.subr.mxu0 0.0
  %3184 = vmatpush1.msra.mxu0 0.0
  %3185 = vmatprep.subr.mxu0 0.0
  %3186 = vmatpush1.msra.mxu0 0.0
  %3187 = vmatprep.subr.mxu0 0.0
  %3188 = vmatpush1.msra.mxu0 0.0
  %3189 = vmatprep.subr.mxu0 0.0
  %3190 = vmatpush1.msra.mxu0 0.0
  %3191 = vmatprep.subr.mxu0 0.0
  %3192 = vmatpush1.msra.mxu0 0.0
  %3193 = vmatprep.subr.mxu0 0.0
  %3194 = vmatpush1.msra.mxu0 0.0
  %3195 = vmatprep.subr.mxu0 0.0
  %3196 = vmatpush1.msra.mxu0 0.0
  %3197 = vmatprep.subr.mxu0 0.0
  %3198 = vmatpush1.msra.mxu0 0.0
  %3199 = vmatprep.subr.mxu0 0.0
  %3200 = vmatpush1.msra.mxu0 %v2108
  %3201 = vmatprep.subr.mxu0 0.0
  %3202 = vmatpush1.msra.mxu0 %v2103
  %3203 = vmatprep.subr.mxu0 0.0
  %3204 = vmatpush2.msra.mxu0 0.0
  %3205 = vmatprep.subr.mxu0 0.0
  %3206 = vmatpush2.msra.mxu0 0.0
  %3207 = vmatprep.subr.mxu0 0.0
  %3208 = vmatpush2.msra.mxu0 0.0
  %3209 = vmatprep.subr.mxu0 0.0
  %3210 = vmatpush2.msra.mxu0 0.0
  %3211 = vmatprep.subr.mxu0 0.0
  %3212 = vmatpush2.msra.mxu0 0.0
  %3213 = vmatprep.subr.mxu0 0.0
  %3214 = vmatpush2.msra.mxu0 0.0
  %3215 = vmatprep.subr.mxu0 0.0
  %3216 = vmatpush2.msra.mxu0 0.0
  %3217 = vmatprep.subr.mxu0 0.0
  %3218 = vmatpush2.msra.mxu0 0.0
  %3219 = vmatprep.subr.mxu0 0.0
  %3220 = vmatpush2.msra.mxu0 0.0
  %3221 = vmatprep.subr.mxu0 0.0
  %3222 = vmatpush2.msra.mxu0 0.0
  %3223 = vmatprep.subr.mxu0 0.0
  %3224 = vmatpush2.msra.mxu0 0.0
  %3225 = vmatprep.subr.mxu0 0.0
  %3226 = vmatpush2.msra.mxu0 0.0
  %3227 = vmatprep.subr.mxu0 0.0
  %3228 = vmatpush2.msra.mxu0 0.0
  %3229 = vmatprep.subr.mxu0 0.0
  %3230 = vmatpush2.msra.mxu0 0.0
  %3231 = vmatprep.subr.mxu0 0.0
  %3232 = vmatpush2.msra.mxu0 0.0
  %3233 = vmatprep.subr.mxu0 0.0
  %3234 = vmatpush2.msra.mxu0 0.0
  %3235 = vmatprep.mubr.f32.mxu0 0.0
  %3236 = vmatmul.mubr.f32.gmra.mxu0 %v1563
  %v3237 = vpop.f32.mrf.mxu0
  %v3238 = vadd.f32 0.0, %v3237
  %v3239 = vpop.f32.mrf.mxu0
  %3240 = vmatprep.mubr.f32.mxu0 0.0
  %3241 = vmatmul.mubr.f32.gmra.mxu0 %v1566
  %v3242 = vpop.f32.mrf.mxu0
  %v3243 = vadd.f32 0.0, %v3242
  %v3244 = vpop.f32.mrf.mxu0
  %3245 = vdwg.mxu0
  %3246 = vmatprep.subr.mxu0 0.0
  %3247 = vmatpush1.msra.mxu0 0.0
  %3248 = vmatprep.subr.mxu0 0.0
  %3249 = vmatpush1.msra.mxu0 0.0
  %3250 = vmatprep.subr.mxu0 0.0
  %3251 = vmatpush1.msra.mxu0 0.0
  %3252 = vmatprep.subr.mxu0 0.0
  %3253 = vmatpush1.msra.mxu0 0.0
  %3254 = vmatprep.subr.mxu0 0.0
  %3255 = vmatpush1.msra.mxu0 0.0
  %3256 = vmatprep.subr.mxu0 0.0
  %3257 = vmatpush1.msra.mxu0 0.0
  %3258 = vmatprep.subr.mxu0 0.0
  %3259 = vmatpush1.msra.mxu0 0.0
  %3260 = vmatprep.subr.mxu0 0.0
  %3261 = vmatpush1.msra.mxu0 0.0
  %3262 = vmatprep.subr.mxu0 0.0
  %3263 = vmatpush1.msra.mxu0 0.0
  %3264 = vmatprep.subr.mxu0 0.0
  %3265 = vmatpush1.msra.mxu0 0.0
  %3266 = vmatprep.subr.mxu0 0.0
  %3267 = vmatpush1.msra.mxu0 0.0
  %3268 = vmatprep.subr.mxu0 0.0
  %3269 = vmatpush1.msra.mxu0 0.0
  %3270 = vmatprep.subr.mxu0 0.0
  %3271 = vmatpush1.msra.mxu0 0.0
  %3272 = vmatprep.subr.mxu0 0.0
  %3273 = vmatpush1.msra.mxu0 0.0
  %3274 = vmatprep.subr.mxu0 0.0
  %3275 = vmatpush1.msra.mxu0 %v2118
  %3276 = vmatprep.subr.mxu0 0.0
  %3277 = vmatpush1.msra.mxu0 %v2113
  %3278 = vmatprep.subr.mxu0 0.0
  %3279 = vmatpush2.msra.mxu0 0.0
  %3280 = vmatprep.subr.mxu0 0.0
  %3281 = vmatpush2.msra.mxu0 0.0
  %3282 = vmatprep.subr.mxu0 0.0
  %3283 = vmatpush2.msra.mxu0 0.0
  %3284 = vmatprep.subr.mxu0 0.0
  %3285 = vmatpush2.msra.mxu0 0.0
  %3286 = vmatprep.subr.mxu0 0.0
  %3287 = vmatpush2.msra.mxu0 0.0
  %3288 = vmatprep.subr.mxu0 0.0
  %3289 = vmatpush2.msra.mxu0 0.0
  %3290 = vmatprep.subr.mxu0 0.0
  %3291 = vmatpush2.msra.mxu0 0.0
  %3292 = vmatprep.subr.mxu0 0.0
  %3293 = vmatpush2.msra.mxu0 0.0
  %3294 = vmatprep.subr.mxu0 0.0
  %3295 = vmatpush2.msra.mxu0 0.0
  %3296 = vmatprep.subr.mxu0 0.0
  %3297 = vmatpush2.msra.mxu0 0.0
  %3298 = vmatprep.subr.mxu0 0.0
  %3299 = vmatpush2.msra.mxu0 0.0
  %3300 = vmatprep.subr.mxu0 0.0
  %3301 = vmatpush2.msra.mxu0 0.0
  %3302 = vmatprep.subr.mxu0 0.0
  %3303 = vmatpush2.msra.mxu0 0.0
  %3304 = vmatprep.subr.mxu0 0.0
  %3305 = vmatpush2.msra.mxu0 0.0
  %3306 = vmatprep.subr.mxu0 0.0
  %3307 = vmatpush2.msra.mxu0 0.0
  %3308 = vmatprep.subr.mxu0 0.0
  %3309 = vmatpush2.msra.mxu0 0.0
  %3310 = vmatprep.mubr.f32.mxu0 0.0
  %3311 = vmatmul.mubr.f32.gmra.mxu0 %v1644
  %v3312 = vpop.f32.mrf.mxu0
  %v3313 = vadd.f32 0.0, %v3312
  %v3314 = vpop.f32.mrf.mxu0
  %3315 = vmatprep.mubr.f32.mxu0 0.0
  %3316 = vmatmul.mubr.f32.gmra.mxu0 %v1647
  %v3317 = vpop.f32.mrf.mxu0
  %v3318 = vadd.f32 0.0, %v3317
  %v3319 = vpop.f32.mrf.mxu0
  %3320 = vdwg.mxu0
  %v3322 = vlaneseq
  %v3323 = vshrl.u32 %v3322, 7
  %v3324 = vsub.s32 0, %v3323
  %v3325 = vrot.slane %v1798, %v3324
  %v3327 = vadd.f32 %v2188, %v3325
  %v3328 = vadd.f32 %v2193, %v3325
  %v3329 = vadd.f32 %v2263, %v3325
  %v3330 = vadd.f32 %v2268, %v3325
  %v3331 = vadd.f32 %v2338, %v3325
  %v3332 = vadd.f32 %v2343, %v3325
  %v3333 = vadd.f32 %v2413, %v3325
  %v3334 = vadd.f32 %v2418, %v3325
  %v3335 = vadd.f32 %v2488, %v3325
  %v3336 = vadd.f32 %v2493, %v3325
  %v3337 = vadd.f32 %v2563, %v3325
  %v3338 = vadd.f32 %v2568, %v3325
  %v3339 = vadd.f32 %v2638, %v3325
  %v3340 = vadd.f32 %v2643, %v3325
  %v3341 = vadd.f32 %v2713, %v3325
  %v3342 = vadd.f32 %v2718, %v3325
  %v3343 = vadd.f32 %v2788, %v3325
  %v3344 = vadd.f32 %v2793, %v3325
  %v3345 = vadd.f32 %v2863, %v3325
  %v3346 = vadd.f32 %v2868, %v3325
  %v3347 = vadd.f32 %v2938, %v3325
  %v3348 = vadd.f32 %v2943, %v3325
  %v3349 = vadd.f32 %v3013, %v3325
  %v3350 = vadd.f32 %v3018, %v3325
  %v3351 = vadd.f32 %v3088, %v3325
  %v3352 = vadd.f32 %v3093, %v3325
  %v3353 = vadd.f32 %v3163, %v3325
  %v3354 = vadd.f32 %v3168, %v3325
  %v3355 = vadd.f32 %v3238, %v3325
  %v3356 = vadd.f32 %v3243, %v3325
  %v3357 = vadd.f32 %v3313, %v3325
  %v3358 = vadd.f32 %v3318, %v3325
  %v3359 = vld [vmem:[%s6] sm:$0xff]
  %v3360 = vld [vmem:[%s6 + $0x8] sm:$0xff]
  %v3361 = vld [vmem:[%s6 + $0x10] sm:$0xff]
  %v3362 = vld [vmem:[%s6 + $0x18] sm:$0xff]
  %v3363 = vld [vmem:[%s6 + $0x20] sm:$0xff]
  %v3364 = vld [vmem:[%s6 + $0x28] sm:$0xff]
  %v3365 = vld [vmem:[%s7] sm:$0x1]
  %v3367 = vsel %vm1799, 0.0, 0
  %3369 = vmatprep.subr.mxu0 0.0
  %3370 = vmatpush1.msra.mxu0 0.0
  %3371 = vmatprep.subr.mxu0 0.0
  %3372 = vmatpush1.msra.mxu0 0.0
  %3373 = vmatprep.subr.mxu0 0.0
  %3374 = vmatpush1.msra.mxu0 0.0
  %3375 = vmatprep.subr.mxu0 0.0
  %3376 = vmatpush1.msra.mxu0 0.0
  %3377 = vmatprep.subr.mxu0 0.0
  %3378 = vmatpush1.msra.mxu0 0.0
  %3379 = vmatprep.subr.mxu0 0.0
  %3380 = vmatpush1.msra.mxu0 0.0
  %3381 = vmatprep.subr.mxu0 0.0
  %3382 = vmatpush1.msra.mxu0 0.0
  %3383 = vmatprep.subr.mxu0 0.0
  %3384 = vmatpush1.msra.mxu0 0.0
  %3385 = vmatprep.subr.mxu0 0.0
  %3386 = vmatpush1.msra.mxu0 0.0
  %3387 = vmatprep.subr.mxu0 0.0
  %3388 = vmatpush1.msra.mxu0 0.0
  %3389 = vmatprep.subr.mxu0 0.0
  %3390 = vmatpush1.msra.mxu0 0.0
  %3391 = vmatprep.subr.mxu0 0.0
  %3392 = vmatpush1.msra.mxu0 0.0
  %3393 = vmatprep.subr.mxu0 0.0
  %3394 = vmatpush1.msra.mxu0 %v3364
  %3395 = vmatprep.subr.mxu0 0.0
  %3396 = vmatpush1.msra.mxu0 %v3363
  %3397 = vmatprep.subr.mxu0 0.0
  %3398 = vmatpush1.msra.mxu0 %v3362
  %3399 = vmatprep.subr.mxu0 0.0
  %3400 = vmatpush1.msra.mxu0 %v3361
  %3401 = vmatprep.subr.mxu0 0.0
  %3402 = vmatpush2.msra.mxu0 0.0
  %3403 = vmatprep.subr.mxu0 0.0
  %3404 = vmatpush2.msra.mxu0 0.0
  %3405 = vmatprep.subr.mxu0 0.0
  %3406 = vmatpush2.msra.mxu0 0.0
  %3407 = vmatprep.subr.mxu0 0.0
  %3408 = vmatpush2.msra.mxu0 0.0
  %3409 = vmatprep.subr.mxu0 0.0
  %3410 = vmatpush2.msra.mxu0 0.0
  %3411 = vmatprep.subr.mxu0 0.0
  %3412 = vmatpush2.msra.mxu0 0.0
  %3413 = vmatprep.subr.mxu0 0.0
  %3414 = vmatpush2.msra.mxu0 0.0
  %3415 = vmatprep.subr.mxu0 0.0
  %3416 = vmatpush2.msra.mxu0 0.0
  %3417 = vmatprep.subr.mxu0 0.0
  %3418 = vmatpush2.msra.mxu0 0.0
  %3419 = vmatprep.subr.mxu0 0.0
  %3420 = vmatpush2.msra.mxu0 0.0
  %3421 = vmatprep.subr.mxu0 0.0
  %3422 = vmatpush2.msra.mxu0 0.0
  %3423 = vmatprep.subr.mxu0 0.0
  %3424 = vmatpush2.msra.mxu0 0.0
  %3425 = vmatprep.subr.mxu0 0.0
  %3426 = vmatpush2.msra.mxu0 0.0
  %3427 = vmatprep.subr.mxu0 0.0
  %3428 = vmatpush2.msra.mxu0 0.0
  %3429 = vmatprep.subr.mxu0 0.0
  %3430 = vmatpush2.msra.mxu0 0.0
  %3431 = vmatprep.subr.mxu0 0.0
  %3432 = vmatpush2.msra.mxu0 0.0
  %3433 = vmatprep.mubr.f32.mxu0 0.0
  %3434 = vmatmul.mubr.f32.gmra.mxu0 %v3367
  %v3435 = vpop.f32.mrf.mxu0
  %v3436 = vadd.f32 0.0, %v3435
  %v3437 = vpop.f32.mrf.mxu0
  %3438 = vmatprep.mubr.f32.mxu0 0.0
  %3439 = vmatmul.mubr.f32.gmra.mxu0 %v3367
  %v3440 = vpop.f32.mrf.mxu0
  %v3441 = vadd.f32 0.0, %v3440
  %v3442 = vpop.f32.mrf.mxu0
  %3443 = vmatprep.mubr.f32.mxu0 0.0
  %3444 = vmatmul.mubr.f32.gmra.mxu0 %v3367
  %v3445 = vpop.f32.mrf.mxu0
  %v3446 = vadd.f32 0.0, %v3445
  %v3447 = vpop.f32.mrf.mxu0
  %3448 = vmatprep.mubr.f32.mxu0 0.0
  %3449 = vmatmul.mubr.f32.gmra.mxu0 %v3367
  %v3450 = vpop.f32.mrf.mxu0
  %v3451 = vadd.f32 0.0, %v3450
  %v3452 = vpop.f32.mrf.mxu0
  %3453 = vdwg.mxu0
  %v3455 = vsel %vm427, %v3327, 0
  %v3458 = vsel %vm427, %v3328, 0
  %v3461 = vsel %vm427, %v3329, 0
  %v3464 = vsel %vm427, %v3330, 0
  %3466 = vmatprep.subr.mxu0 0.0
  %3467 = vmatpush1.msra.mxu0 0.0
  %3468 = vmatprep.subr.mxu0 0.0
  %3469 = vmatpush1.msra.mxu0 0.0
  %3470 = vmatprep.subr.mxu0 0.0
  %3471 = vmatpush1.msra.mxu0 0.0
  %3472 = vmatprep.subr.mxu0 0.0
  %3473 = vmatpush1.msra.mxu0 0.0
  %3474 = vmatprep.subr.mxu0 0.0
  %3475 = vmatpush1.msra.mxu0 0.0
  %3476 = vmatprep.subr.mxu0 0.0
  %3477 = vmatpush1.msra.mxu0 0.0
  %3478 = vmatprep.subr.mxu0 0.0
  %3479 = vmatpush1.msra.mxu0 0.0
  %3480 = vmatprep.subr.mxu0 0.0
  %3481 = vmatpush1.msra.mxu0 0.0
  %3482 = vmatprep.subr.mxu0 0.0
  %3483 = vmatpush1.msra.mxu0 0.0
  %3484 = vmatprep.subr.mxu0 0.0
  %3485 = vmatpush1.msra.mxu0 0.0
  %3486 = vmatprep.subr.mxu0 0.0
  %3487 = vmatpush1.msra.mxu0 0.0
  %3488 = vmatprep.subr.mxu0 0.0
  %3489 = vmatpush1.msra.mxu0 0.0
  %3490 = vmatprep.subr.mxu0 0.0
  %3491 = vmatpush1.msra.mxu0 0.0
  %3492 = vmatprep.subr.mxu0 0.0
  %3493 = vmatpush1.msra.mxu0 0.0
  %3494 = vmatprep.subr.mxu0 0.0
  %3495 = vmatpush1.msra.mxu0 %v3360
  %3496 = vmatprep.subr.mxu0 0.0
  %3497 = vmatpush1.msra.mxu0 %v3359
  %3498 = vmatprep.subr.mxu0 0.0
  %3499 = vmatpush2.msra.mxu0 0.0
  %3500 = vmatprep.subr.mxu0 0.0
  %3501 = vmatpush2.msra.mxu0 0.0
  %3502 = vmatprep.subr.mxu0 0.0
  %3503 = vmatpush2.msra.mxu0 0.0
  %3504 = vmatprep.subr.mxu0 0.0
  %3505 = vmatpush2.msra.mxu0 0.0
  %3506 = vmatprep.subr.mxu0 0.0
  %3507 = vmatpush2.msra.mxu0 0.0
  %3508 = vmatprep.subr.mxu0 0.0
  %3509 = vmatpush2.msra.mxu0 0.0
  %3510 = vmatprep.subr.mxu0 0.0
  %3511 = vmatpush2.msra.mxu0 0.0
  %3512 = vmatprep.subr.mxu0 0.0
  %3513 = vmatpush2.msra.mxu0 0.0
  %3514 = vmatprep.subr.mxu0 0.0
  %3515 = vmatpush2.msra.mxu0 0.0
  %3516 = vmatprep.subr.mxu0 0.0
  %3517 = vmatpush2.msra.mxu0 0.0
  %3518 = vmatprep.subr.mxu0 0.0
  %3519 = vmatpush2.msra.mxu0 0.0
  %3520 = vmatprep.subr.mxu0 0.0
  %3521 = vmatpush2.msra.mxu0 0.0
  %3522 = vmatprep.subr.mxu0 0.0
  %3523 = vmatpush2.msra.mxu0 0.0
  %3524 = vmatprep.subr.mxu0 0.0
  %3525 = vmatpush2.msra.mxu0 0.0
  %3526 = vmatprep.subr.mxu0 0.0
  %3527 = vmatpush2.msra.mxu0 0.0
  %3528 = vmatprep.subr.mxu0 0.0
  %3529 = vmatpush2.msra.mxu0 0.0
  %3530 = vmatprep.mubr.f32.mxu0 0.0
  %3531 = vmatmul.mubr.f32.gmra.mxu0 %v3455
  %v3532 = vpop.f32.mrf.mxu0
  %v3533 = vadd.f32 %v3436, %v3532
  %v3534 = vpop.f32.mrf.mxu0
  %3535 = vmatprep.mubr.f32.mxu0 0.0
  %3536 = vmatmul.mubr.f32.gmra.mxu0 %v3458
  %v3537 = vpop.f32.mrf.mxu0
  %v3538 = vadd.f32 %v3441, %v3537
  %v3539 = vpop.f32.mrf.mxu0
  %3540 = vmatprep.mubr.f32.mxu0 0.0
  %3541 = vmatmul.mubr.f32.gmra.mxu0 %v3461
  %v3542 = vpop.f32.mrf.mxu0
  %v3543 = vadd.f32 %v3446, %v3542
  %v3544 = vpop.f32.mrf.mxu0
  %3545 = vmatprep.mubr.f32.mxu0 0.0
  %3546 = vmatmul.mubr.f32.gmra.mxu0 %v3464
  %v3547 = vpop.f32.mrf.mxu0
  %v3548 = vadd.f32 %v3451, %v3547
  %v3549 = vpop.f32.mrf.mxu0
  %3550 = vdwg.mxu0
  %v3552 = vlaneseq
  %v3553 = vshrl.u32 %v3552, 7
  %v3554 = vsub.s32 0, %v3553
  %v3555 = vrot.slane %v3365, %v3554
  %v3557 = vadd.f32 %v3533, %v3555
  %v3558 = vadd.f32 %v3538, %v3555
  %v3559 = vadd.f32 %v3543, %v3555
  %v3560 = vadd.f32 %v3548, %v3555
  %v3561 = vlaneseq
  %v3562 = vand.u32 %v3561, 127
  %vm3563 = vcmp.ge.s32.totalorder %v3562, 64
  %vm3564 = vcmp.lt.s32.totalorder %v3562, 96
  %vm3565 = vmand %vm3563, %vm3564
  %v3566 = vtanh.pop %v3557
  %v3567 = vtanh.pop %v3558
  %v3568 = vtanh.pop %v3559
  %v3569 = vtanh.pop %v3560
  %v3570 = vxor.u32 %v3557, 2147483648
  %v3571 = vxor.u32 %v3558, 2147483648
  %v3572 = vxor.u32 %v3559, 2147483648
  %v3573 = vxor.u32 %v3560, 2147483648
  %v3574 = vmul.f32 %v3570, 1.442695
  %v3575 = vpow.pop %v3574
  %v3576 = vmul.f32 %v3571, 1.442695
  %v3577 = vpow.pop %v3576
  %v3578 = vmul.f32 %v3572, 1.442695
  %v3579 = vpow.pop %v3578
  %v3580 = vmul.f32 %v3573, 1.442695
  %v3581 = vpow.pop %v3580
  %v3582 = vadd.f32 %v3575, 1.0
  %v3583 = vadd.f32 %v3577, 1.0
  %v3584 = vadd.f32 %v3579, 1.0
  %v3585 = vadd.f32 %v3581, 1.0
  %v3586 = vrcp.pop %v3582
  %v3587 = vmul.f32 1.0, %v3586
  %v3588 = vrcp.pop %v3583
  %v3589 = vmul.f32 1.0, %v3588
  %v3590 = vrcp.pop %v3584
  %v3591 = vmul.f32 1.0, %v3590
  %v3592 = vrcp.pop %v3585
  %v3593 = vmul.f32 1.0, %v3592
  %v3594 = vsel %vm3565, %v3566, %v3587
  %v3595 = vsel %vm3565, %v3567, %v3589
  %v3596 = vsel %vm3565, %v3568, %v3591
  %v3597 = vsel %vm3565, %v3569, %v3593
  %v3598 = vmul.f32 %v3594, 0.0
  %v3599 = vmul.f32 %v3595, 0.0
  %v3600 = vmul.f32 %v3596, 0.0
  %v3601 = vmul.f32 %v3597, 0.0
  %3606 = vrot.lane.b32.xlu0 %v3594, 64
  %v3607 = vpop.permute.xlu0 %3606
  %3608 = vrot.lane.b32.xlu0 %v3595, 64
  %v3609 = vpop.permute.xlu0 %3608
  %3610 = vrot.lane.b32.xlu0 %v3596, 64
  %v3611 = vpop.permute.xlu0 %3610
  %3612 = vrot.lane.b32.xlu0 %v3597, 64
  %v3613 = vpop.permute.xlu0 %3612
  %v3618 = vmul.f32 %v3594, %v3607
  %v3619 = vmul.f32 %v3595, %v3609
  %v3620 = vmul.f32 %v3596, %v3611
  %v3621 = vmul.f32 %v3597, %v3613
  %3626 = vrot.lane.b32.xlu0 %v3618, 32
  %v3627 = vpop.permute.xlu0 %3626
  %3628 = vrot.lane.b32.xlu0 %v3619, 32
  %v3629 = vpop.permute.xlu0 %3628
  %3630 = vrot.lane.b32.xlu0 %v3620, 32
  %v3631 = vpop.permute.xlu0 %3630
  %3632 = vrot.lane.b32.xlu0 %v3621, 32
  %v3633 = vpop.permute.xlu0 %3632
  %v3638 = vadd.f32 %v3598, %v3627
  %v3639 = vadd.f32 %v3599, %v3629
  %v3640 = vadd.f32 %v3600, %v3631
  %v3641 = vadd.f32 %v3601, %v3633
  %v3642 = vtanh.pop %v3638
  %v3643 = vtanh.pop %v3639
  %v3644 = vtanh.pop %v3640
  %v3645 = vtanh.pop %v3641
  %3650 = vrot.lane.b32.xlu0 %v3642, 64
  %v3651 = vpop.permute.xlu0 %3650
  %3652 = vrot.lane.b32.xlu0 %v3643, 64
  %v3653 = vpop.permute.xlu0 %3652
  %3654 = vrot.lane.b32.xlu0 %v3644, 64
  %v3655 = vpop.permute.xlu0 %3654
  %3656 = vrot.lane.b32.xlu0 %v3645, 64
  %v3657 = vpop.permute.xlu0 %3656
  %v3662 = vmul.f32 %v3594, %v3651
  %v3663 = vmul.f32 %v3595, %v3653
  %v3664 = vmul.f32 %v3596, %v3655
  %v3665 = vmul.f32 %v3597, %v3657
  %3670 = vrot.lane.b32.xlu0 %v3662, 32
  %v3671 = vpop.permute.xlu0 %3670
  %3672 = vrot.lane.b32.xlu0 %v3663, 32
  %v3673 = vpop.permute.xlu0 %3672
  %3674 = vrot.lane.b32.xlu0 %v3664, 32
  %v3675 = vpop.permute.xlu0 %3674
  %3676 = vrot.lane.b32.xlu0 %v3665, 32
  %v3677 = vpop.permute.xlu0 %3676
  %v3678 = vsel %vm1799, %v3671, 0
  %v3680 = vsel %vm1799, %v3673, 0
  %v3682 = vsel %vm1799, %v3675, 0
  %v3684 = vsel %vm1799, %v3677, 0
  %3686 = vmatprep.subr.mxu0 0.0
  %3687 = vmatpush1.msra.mxu0 0.0
  %3688 = vmatprep.subr.mxu0 0.0
  %3689 = vmatpush1.msra.mxu0 0.0
  %3690 = vmatprep.subr.mxu0 0.0
  %3691 = vmatpush1.msra.mxu0 0.0
  %3692 = vmatprep.subr.mxu0 0.0
  %3693 = vmatpush1.msra.mxu0 0.0
  %3694 = vmatprep.subr.mxu0 0.0
  %3695 = vmatpush1.msra.mxu0 0.0
  %3696 = vmatprep.subr.mxu0 0.0
  %3697 = vmatpush1.msra.mxu0 0.0
  %3698 = vmatprep.subr.mxu0 0.0
  %3699 = vmatpush1.msra.mxu0 0.0
  %3700 = vmatprep.subr.mxu0 0.0
  %3701 = vmatpush1.msra.mxu0 0.0
  %3702 = vmatprep.subr.mxu0 0.0
  %3703 = vmatpush1.msra.mxu0 0.0
  %3704 = vmatprep.subr.mxu0 0.0
  %3705 = vmatpush1.msra.mxu0 0.0
  %3706 = vmatprep.subr.mxu0 0.0
  %3707 = vmatpush1.msra.mxu0 0.0
  %3708 = vmatprep.subr.mxu0 0.0
  %3709 = vmatpush1.msra.mxu0 0.0
  %3710 = vmatprep.subr.mxu0 0.0
  %3711 = vmatpush1.msra.mxu0 %v3364
  %3712 = vmatprep.subr.mxu0 0.0
  %3713 = vmatpush1.msra.mxu0 %v3363
  %3714 = vmatprep.subr.mxu0 0.0
  %3715 = vmatpush1.msra.mxu0 %v3362
  %3716 = vmatprep.subr.mxu0 0.0
  %3717 = vmatpush1.msra.mxu0 %v3361
  %3718 = vmatprep.subr.mxu0 0.0
  %3719 = vmatpush2.msra.mxu0 0.0
  %3720 = vmatprep.subr.mxu0 0.0
  %3721 = vmatpush2.msra.mxu0 0.0
  %3722 = vmatprep.subr.mxu0 0.0
  %3723 = vmatpush2.msra.mxu0 0.0
  %3724 = vmatprep.subr.mxu0 0.0
  %3725 = vmatpush2.msra.mxu0 0.0
  %3726 = vmatprep.subr.mxu0 0.0
  %3727 = vmatpush2.msra.mxu0 0.0
  %3728 = vmatprep.subr.mxu0 0.0
  %3729 = vmatpush2.msra.mxu0 0.0
  %3730 = vmatprep.subr.mxu0 0.0
  %3731 = vmatpush2.msra.mxu0 0.0
  %3732 = vmatprep.subr.mxu0 0.0
  %3733 = vmatpush2.msra.mxu0 0.0
  %3734 = vmatprep.subr.mxu0 0.0
  %3735 = vmatpush2.msra.mxu0 0.0
  %3736 = vmatprep.subr.mxu0 0.0
  %3737 = vmatpush2.msra.mxu0 0.0
  %3738 = vmatprep.subr.mxu0 0.0
  %3739 = vmatpush2.msra.mxu0 0.0
  %3740 = vmatprep.subr.mxu0 0.0
  %3741 = vmatpush2.msra.mxu0 0.0
  %3742 = vmatprep.subr.mxu0 0.0
  %3743 = vmatpush2.msra.mxu0 0.0
  %3744 = vmatprep.subr.mxu0 0.0
  %3745 = vmatpush2.msra.mxu0 0.0
  %3746 = vmatprep.subr.mxu0 0.0
  %3747 = vmatpush2.msra.mxu0 0.0
  %3748 = vmatprep.subr.mxu0 0.0
  %3749 = vmatpush2.msra.mxu0 0.0
  %3750 = vmatprep.mubr.f32.mxu0 0.0
  %3751 = vmatmul.mubr.f32.gmra.mxu0 %v3678
  %v3752 = vpop.f32.mrf.mxu0
  %v3753 = vadd.f32 0.0, %v3752
  %v3754 = vpop.f32.mrf.mxu0
  %3755 = vmatprep.mubr.f32.mxu0 0.0
  %3756 = vmatmul.mubr.f32.gmra.mxu0 %v3680
  %v3757 = vpop.f32.mrf.mxu0
  %v3758 = vadd.f32 0.0, %v3757
  %v3759 = vpop.f32.mrf.mxu0
  %3760 = vmatprep.mubr.f32.mxu0 0.0
  %3761 = vmatmul.mubr.f32.gmra.mxu0 %v3682
  %v3762 = vpop.f32.mrf.mxu0
  %v3763 = vadd.f32 0.0, %v3762
  %v3764 = vpop.f32.mrf.mxu0
  %3765 = vmatprep.mubr.f32.mxu0 0.0
  %3766 = vmatmul.mubr.f32.gmra.mxu0 %v3684
  %v3767 = vpop.f32.mrf.mxu0
  %v3768 = vadd.f32 0.0, %v3767
  %v3769 = vpop.f32.mrf.mxu0
  %3770 = vdwg.mxu0
  %v3772 = vsel %vm427, %v3331, 0
  %v3775 = vsel %vm427, %v3332, 0
  %v3778 = vsel %vm427, %v3333, 0
  %v3781 = vsel %vm427, %v3334, 0
  %3783 = vmatprep.subr.mxu0 0.0
  %3784 = vmatpush1.msra.mxu0 0.0
  %3785 = vmatprep.subr.mxu0 0.0
  %3786 = vmatpush1.msra.mxu0 0.0
  %3787 = vmatprep.subr.mxu0 0.0
  %3788 = vmatpush1.msra.mxu0 0.0
  %3789 = vmatprep.subr.mxu0 0.0
  %3790 = vmatpush1.msra.mxu0 0.0
  %3791 = vmatprep.subr.mxu0 0.0
  %3792 = vmatpush1.msra.mxu0 0.0
  %3793 = vmatprep.subr.mxu0 0.0
  %3794 = vmatpush1.msra.mxu0 0.0
  %3795 = vmatprep.subr.mxu0 0.0
  %3796 = vmatpush1.msra.mxu0 0.0
  %3797 = vmatprep.subr.mxu0 0.0
  %3798 = vmatpush1.msra.mxu0 0.0
  %3799 = vmatprep.subr.mxu0 0.0
  %3800 = vmatpush1.msra.mxu0 0.0
  %3801 = vmatprep.subr.mxu0 0.0
  %3802 = vmatpush1.msra.mxu0 0.0
  %3803 = vmatprep.subr.mxu0 0.0
  %3804 = vmatpush1.msra.mxu0 0.0
  %3805 = vmatprep.subr.mxu0 0.0
  %3806 = vmatpush1.msra.mxu0 0.0
  %3807 = vmatprep.subr.mxu0 0.0
  %3808 = vmatpush1.msra.mxu0 0.0
  %3809 = vmatprep.subr.mxu0 0.0
  %3810 = vmatpush1.msra.mxu0 0.0
  %3811 = vmatprep.subr.mxu0 0.0
  %3812 = vmatpush1.msra.mxu0 %v3360
  %3813 = vmatprep.subr.mxu0 0.0
  %3814 = vmatpush1.msra.mxu0 %v3359
  %3815 = vmatprep.subr.mxu0 0.0
  %3816 = vmatpush2.msra.mxu0 0.0
  %3817 = vmatprep.subr.mxu0 0.0
  %3818 = vmatpush2.msra.mxu0 0.0
  %3819 = vmatprep.subr.mxu0 0.0
  %3820 = vmatpush2.msra.mxu0 0.0
  %3821 = vmatprep.subr.mxu0 0.0
  %3822 = vmatpush2.msra.mxu0 0.0
  %3823 = vmatprep.subr.mxu0 0.0
  %3824 = vmatpush2.msra.mxu0 0.0
  %3825 = vmatprep.subr.mxu0 0.0
  %3826 = vmatpush2.msra.mxu0 0.0
  %3827 = vmatprep.subr.mxu0 0.0
  %3828 = vmatpush2.msra.mxu0 0.0
  %3829 = vmatprep.subr.mxu0 0.0
  %3830 = vmatpush2.msra.mxu0 0.0
  %3831 = vmatprep.subr.mxu0 0.0
  %3832 = vmatpush2.msra.mxu0 0.0
  %3833 = vmatprep.subr.mxu0 0.0
  %3834 = vmatpush2.msra.mxu0 0.0
  %3835 = vmatprep.subr.mxu0 0.0
  %3836 = vmatpush2.msra.mxu0 0.0
  %3837 = vmatprep.subr.mxu0 0.0
  %3838 = vmatpush2.msra.mxu0 0.0
  %3839 = vmatprep.subr.mxu0 0.0
  %3840 = vmatpush2.msra.mxu0 0.0
  %3841 = vmatprep.subr.mxu0 0.0
  %3842 = vmatpush2.msra.mxu0 0.0
  %3843 = vmatprep.subr.mxu0 0.0
  %3844 = vmatpush2.msra.mxu0 0.0
  %3845 = vmatprep.subr.mxu0 0.0
  %3846 = vmatpush2.msra.mxu0 0.0
  %3847 = vmatprep.mubr.f32.mxu0 0.0
  %3848 = vmatmul.mubr.f32.gmra.mxu0 %v3772
  %v3849 = vpop.f32.mrf.mxu0
  %v3850 = vadd.f32 %v3753, %v3849
  %v3851 = vpop.f32.mrf.mxu0
  %3852 = vmatprep.mubr.f32.mxu0 0.0
  %3853 = vmatmul.mubr.f32.gmra.mxu0 %v3775
  %v3854 = vpop.f32.mrf.mxu0
  %v3855 = vadd.f32 %v3758, %v3854
  %v3856 = vpop.f32.mrf.mxu0
  %3857 = vmatprep.mubr.f32.mxu0 0.0
  %3858 = vmatmul.mubr.f32.gmra.mxu0 %v3778
  %v3859 = vpop.f32.mrf.mxu0
  %v3860 = vadd.f32 %v3763, %v3859
  %v3861 = vpop.f32.mrf.mxu0
  %3862 = vmatprep.mubr.f32.mxu0 0.0
  %3863 = vmatmul.mubr.f32.gmra.mxu0 %v3781
  %v3864 = vpop.f32.mrf.mxu0
  %v3865 = vadd.f32 %v3768, %v3864
  %v3866 = vpop.f32.mrf.mxu0
  %3867 = vdwg.mxu0
  %v3868 = vadd.f32 %v3850, %v3555
  %v3869 = vadd.f32 %v3855, %v3555
  %v3870 = vadd.f32 %v3860, %v3555
  %v3871 = vadd.f32 %v3865, %v3555
  %v3872 = vtanh.pop %v3868
  %v3873 = vtanh.pop %v3869
  %v3874 = vtanh.pop %v3870
  %v3875 = vtanh.pop %v3871
  %v3876 = vxor.u32 %v3868, 2147483648
  %v3877 = vxor.u32 %v3869, 2147483648
  %v3878 = vxor.u32 %v3870, 2147483648
  %v3879 = vxor.u32 %v3871, 2147483648
  %v3880 = vmul.f32 %v3876, 1.442695
  %v3881 = vpow.pop %v3880
  %v3882 = vmul.f32 %v3877, 1.442695
  %v3883 = vpow.pop %v3882
  %v3884 = vmul.f32 %v3878, 1.442695
  %v3885 = vpow.pop %v3884
  %v3886 = vmul.f32 %v3879, 1.442695
  %v3887 = vpow.pop %v3886
  %v3888 = vadd.f32 %v3881, 1.0
  %v3889 = vadd.f32 %v3883, 1.0
  %v3890 = vadd.f32 %v3885, 1.0
  %v3891 = vadd.f32 %v3887, 1.0
  %v3892 = vrcp.pop %v3888
  %v3893 = vmul.f32 1.0, %v3892
  %v3894 = vrcp.pop %v3889
  %v3895 = vmul.f32 1.0, %v3894
  %v3896 = vrcp.pop %v3890
  %v3897 = vmul.f32 1.0, %v3896
  %v3898 = vrcp.pop %v3891
  %v3899 = vmul.f32 1.0, %v3898
  %v3900 = vsel %vm3565, %v3872, %v3893
  %v3901 = vsel %vm3565, %v3873, %v3895
  %v3902 = vsel %vm3565, %v3874, %v3897
  %v3903 = vsel %vm3565, %v3875, %v3899
  %v3904 = vmul.f32 %v3900, %v3638
  %v3905 = vmul.f32 %v3901, %v3639
  %v3906 = vmul.f32 %v3902, %v3640
  %v3907 = vmul.f32 %v3903, %v3641
  %3912 = vrot.lane.b32.xlu0 %v3900, 64
  %v3913 = vpop.permute.xlu0 %3912
  %3914 = vrot.lane.b32.xlu0 %v3901, 64
  %v3915 = vpop.permute.xlu0 %3914
  %3916 = vrot.lane.b32.xlu0 %v3902, 64
  %v3917 = vpop.permute.xlu0 %3916
  %3918 = vrot.lane.b32.xlu0 %v3903, 64
  %v3919 = vpop.permute.xlu0 %3918
  %v3924 = vmul.f32 %v3900, %v3913
  %v3925 = vmul.f32 %v3901, %v3915
  %v3926 = vmul.f32 %v3902, %v3917
  %v3927 = vmul.f32 %v3903, %v3919
  %3932 = vrot.lane.b32.xlu0 %v3924, 32
  %v3933 = vpop.permute.xlu0 %3932
  %3934 = vrot.lane.b32.xlu0 %v3925, 32
  %v3935 = vpop.permute.xlu0 %3934
  %3936 = vrot.lane.b32.xlu0 %v3926, 32
  %v3937 = vpop.permute.xlu0 %3936
  %3938 = vrot.lane.b32.xlu0 %v3927, 32
  %v3939 = vpop.permute.xlu0 %3938
  %v3944 = vadd.f32 %v3904, %v3933
  %v3945 = vadd.f32 %v3905, %v3935
  %v3946 = vadd.f32 %v3906, %v3937
  %v3947 = vadd.f32 %v3907, %v3939
  %v3948 = vtanh.pop %v3944
  %v3949 = vtanh.pop %v3945
  %v3950 = vtanh.pop %v3946
  %v3951 = vtanh.pop %v3947
  %3956 = vrot.lane.b32.xlu0 %v3948, 64
  %v3957 = vpop.permute.xlu0 %3956
  %3958 = vrot.lane.b32.xlu0 %v3949, 64
  %v3959 = vpop.permute.xlu0 %3958
  %3960 = vrot.lane.b32.xlu0 %v3950, 64
  %v3961 = vpop.permute.xlu0 %3960
  %3962 = vrot.lane.b32.xlu0 %v3951, 64
  %v3963 = vpop.permute.xlu0 %3962
  %v3968 = vmul.f32 %v3900, %v3957
  %v3969 = vmul.f32 %v3901, %v3959
  %v3970 = vmul.f32 %v3902, %v3961
  %v3971 = vmul.f32 %v3903, %v3963
  %3976 = vrot.lane.b32.xlu0 %v3968, 32
  %v3977 = vpop.permute.xlu0 %3976
  %3978 = vrot.lane.b32.xlu0 %v3969, 32
  %v3979 = vpop.permute.xlu0 %3978
  %3980 = vrot.lane.b32.xlu0 %v3970, 32
  %v3981 = vpop.permute.xlu0 %3980
  %3982 = vrot.lane.b32.xlu0 %v3971, 32
  %v3983 = vpop.permute.xlu0 %3982
  %v3984 = vsel %vm1799, %v3977, 0
  %v3986 = vsel %vm1799, %v3979, 0
  %v3988 = vsel %vm1799, %v3981, 0
  %v3990 = vsel %vm1799, %v3983, 0
  %3992 = vmatprep.subr.mxu0 0.0
  %3993 = vmatpush1.msra.mxu0 0.0
  %3994 = vmatprep.subr.mxu0 0.0
  %3995 = vmatpush1.msra.mxu0 0.0
  %3996 = vmatprep.subr.mxu0 0.0
  %3997 = vmatpush1.msra.mxu0 0.0
  %3998 = vmatprep.subr.mxu0 0.0
  %3999 = vmatpush1.msra.mxu0 0.0
  %4000 = vmatprep.subr.mxu0 0.0
  %4001 = vmatpush1.msra.mxu0 0.0
  %4002 = vmatprep.subr.mxu0 0.0
  %4003 = vmatpush1.msra.mxu0 0.0
  %4004 = vmatprep.subr.mxu0 0.0
  %4005 = vmatpush1.msra.mxu0 0.0
  %4006 = vmatprep.subr.mxu0 0.0
  %4007 = vmatpush1.msra.mxu0 0.0
  %4008 = vmatprep.subr.mxu0 0.0
  %4009 = vmatpush1.msra.mxu0 0.0
  %4010 = vmatprep.subr.mxu0 0.0
  %4011 = vmatpush1.msra.mxu0 0.0
  %4012 = vmatprep.subr.mxu0 0.0
  %4013 = vmatpush1.msra.mxu0 0.0
  %4014 = vmatprep.subr.mxu0 0.0
  %4015 = vmatpush1.msra.mxu0 0.0
  %4016 = vmatprep.subr.mxu0 0.0
  %4017 = vmatpush1.msra.mxu0 %v3364
  %4018 = vmatprep.subr.mxu0 0.0
  %4019 = vmatpush1.msra.mxu0 %v3363
  %4020 = vmatprep.subr.mxu0 0.0
  %4021 = vmatpush1.msra.mxu0 %v3362
  %4022 = vmatprep.subr.mxu0 0.0
  %4023 = vmatpush1.msra.mxu0 %v3361
  %4024 = vmatprep.subr.mxu0 0.0
  %4025 = vmatpush2.msra.mxu0 0.0
  %4026 = vmatprep.subr.mxu0 0.0
  %4027 = vmatpush2.msra.mxu0 0.0
  %4028 = vmatprep.subr.mxu0 0.0
  %4029 = vmatpush2.msra.mxu0 0.0
  %4030 = vmatprep.subr.mxu0 0.0
  %4031 = vmatpush2.msra.mxu0 0.0
  %4032 = vmatprep.subr.mxu0 0.0
  %4033 = vmatpush2.msra.mxu0 0.0
  %4034 = vmatprep.subr.mxu0 0.0
  %4035 = vmatpush2.msra.mxu0 0.0
  %4036 = vmatprep.subr.mxu0 0.0
  %4037 = vmatpush2.msra.mxu0 0.0
  %4038 = vmatprep.subr.mxu0 0.0
  %4039 = vmatpush2.msra.mxu0 0.0
  %4040 = vmatprep.subr.mxu0 0.0
  %4041 = vmatpush2.msra.mxu0 0.0
  %4042 = vmatprep.subr.mxu0 0.0
  %4043 = vmatpush2.msra.mxu0 0.0
  %4044 = vmatprep.subr.mxu0 0.0
  %4045 = vmatpush2.msra.mxu0 0.0
  %4046 = vmatprep.subr.mxu0 0.0
  %4047 = vmatpush2.msra.mxu0 0.0
  %4048 = vmatprep.subr.mxu0 0.0
  %4049 = vmatpush2.msra.mxu0 0.0
  %4050 = vmatprep.subr.mxu0 0.0
  %4051 = vmatpush2.msra.mxu0 0.0
  %4052 = vmatprep.subr.mxu0 0.0
  %4053 = vmatpush2.msra.mxu0 0.0
  %4054 = vmatprep.subr.mxu0 0.0
  %4055 = vmatpush2.msra.mxu0 0.0
  %4056 = vmatprep.mubr.f32.mxu0 0.0
  %4057 = vmatmul.mubr.f32.gmra.mxu0 %v3984
  %v4058 = vpop.f32.mrf.mxu0
  %v4059 = vadd.f32 0.0, %v4058
  %v4060 = vpop.f32.mrf.mxu0
  %4061 = vmatprep.mubr.f32.mxu0 0.0
  %4062 = vmatmul.mubr.f32.gmra.mxu0 %v3986
  %v4063 = vpop.f32.mrf.mxu0
  %v4064 = vadd.f32 0.0, %v4063
  %v4065 = vpop.f32.mrf.mxu0
  %4066 = vmatprep.mubr.f32.mxu0 0.0
  %4067 = vmatmul.mubr.f32.gmra.mxu0 %v3988
  %v4068 = vpop.f32.mrf.mxu0
  %v4069 = vadd.f32 0.0, %v4068
  %v4070 = vpop.f32.mrf.mxu0
  %4071 = vmatprep.mubr.f32.mxu0 0.0
  %4072 = vmatmul.mubr.f32.gmra.mxu0 %v3990
  %v4073 = vpop.f32.mrf.mxu0
  %v4074 = vadd.f32 0.0, %v4073
  %v4075 = vpop.f32.mrf.mxu0
  %4076 = vdwg.mxu0
  %v4078 = vsel %vm427, %v3335, 0
  %v4081 = vsel %vm427, %v3336, 0
  %v4084 = vsel %vm427, %v3337, 0
  %v4087 = vsel %vm427, %v3338, 0
  %4089 = vmatprep.subr.mxu0 0.0
  %4090 = vmatpush1.msra.mxu0 0.0
  %4091 = vmatprep.subr.mxu0 0.0
  %4092 = vmatpush1.msra.mxu0 0.0
  %4093 = vmatprep.subr.mxu0 0.0
  %4094 = vmatpush1.msra.mxu0 0.0
  %4095 = vmatprep.subr.mxu0 0.0
  %4096 = vmatpush1.msra.mxu0 0.0
  %4097 = vmatprep.subr.mxu0 0.0
  %4098 = vmatpush1.msra.mxu0 0.0
  %4099 = vmatprep.subr.mxu0 0.0
  %4100 = vmatpush1.msra.mxu0 0.0
  %4101 = vmatprep.subr.mxu0 0.0
  %4102 = vmatpush1.msra.mxu0 0.0
  %4103 = vmatprep.subr.mxu0 0.0
  %4104 = vmatpush1.msra.mxu0 0.0
  %4105 = vmatprep.subr.mxu0 0.0
  %4106 = vmatpush1.msra.mxu0 0.0
  %4107 = vmatprep.subr.mxu0 0.0
  %4108 = vmatpush1.msra.mxu0 0.0
  %4109 = vmatprep.subr.mxu0 0.0
  %4110 = vmatpush1.msra.mxu0 0.0
  %4111 = vmatprep.subr.mxu0 0.0
  %4112 = vmatpush1.msra.mxu0 0.0
  %4113 = vmatprep.subr.mxu0 0.0
  %4114 = vmatpush1.msra.mxu0 0.0
  %4115 = vmatprep.subr.mxu0 0.0
  %4116 = vmatpush1.msra.mxu0 0.0
  %4117 = vmatprep.subr.mxu0 0.0
  %4118 = vmatpush1.msra.mxu0 %v3360
  %4119 = vmatprep.subr.mxu0 0.0
  %4120 = vmatpush1.msra.mxu0 %v3359
  %4121 = vmatprep.subr.mxu0 0.0
  %4122 = vmatpush2.msra.mxu0 0.0
  %4123 = vmatprep.subr.mxu0 0.0
  %4124 = vmatpush2.msra.mxu0 0.0
  %4125 = vmatprep.subr.mxu0 0.0
  %4126 = vmatpush2.msra.mxu0 0.0
  %4127 = vmatprep.subr.mxu0 0.0
  %4128 = vmatpush2.msra.mxu0 0.0
  %4129 = vmatprep.subr.mxu0 0.0
  %4130 = vmatpush2.msra.mxu0 0.0
  %4131 = vmatprep.subr.mxu0 0.0
  %4132 = vmatpush2.msra.mxu0 0.0
  %4133 = vmatprep.subr.mxu0 0.0
  %4134 = vmatpush2.msra.mxu0 0.0
  %4135 = vmatprep.subr.mxu0 0.0
  %4136 = vmatpush2.msra.mxu0 0.0
  %4137 = vmatprep.subr.mxu0 0.0
  %4138 = vmatpush2.msra.mxu0 0.0
  %4139 = vmatprep.subr.mxu0 0.0
  %4140 = vmatpush2.msra.mxu0 0.0
  %4141 = vmatprep.subr.mxu0 0.0
  %4142 = vmatpush2.msra.mxu0 0.0
  %4143 = vmatprep.subr.mxu0 0.0
  %4144 = vmatpush2.msra.mxu0 0.0
  %4145 = vmatprep.subr.mxu0 0.0
  %4146 = vmatpush2.msra.mxu0 0.0
  %4147 = vmatprep.subr.mxu0 0.0
  %4148 = vmatpush2.msra.mxu0 0.0
  %4149 = vmatprep.subr.mxu0 0.0
  %4150 = vmatpush2.msra.mxu0 0.0
  %4151 = vmatprep.subr.mxu0 0.0
  %4152 = vmatpush2.msra.mxu0 0.0
  %4153 = vmatprep.mubr.f32.mxu0 0.0
  %4154 = vmatmul.mubr.f32.gmra.mxu0 %v4078
  %v4155 = vpop.f32.mrf.mxu0
  %v4156 = vadd.f32 %v4059, %v4155
  %v4157 = vpop.f32.mrf.mxu0
  %4158 = vmatprep.mubr.f32.mxu0 0.0
  %4159 = vmatmul.mubr.f32.gmra.mxu0 %v4081
  %v4160 = vpop.f32.mrf.mxu0
  %v4161 = vadd.f32 %v4064, %v4160
  %v4162 = vpop.f32.mrf.mxu0
  %4163 = vmatprep.mubr.f32.mxu0 0.0
  %4164 = vmatmul.mubr.f32.gmra.mxu0 %v4084
  %v4165 = vpop.f32.mrf.mxu0
  %v4166 = vadd.f32 %v4069, %v4165
  %v4167 = vpop.f32.mrf.mxu0
  %4168 = vmatprep.mubr.f32.mxu0 0.0
  %4169 = vmatmul.mubr.f32.gmra.mxu0 %v4087
  %v4170 = vpop.f32.mrf.mxu0
  %v4171 = vadd.f32 %v4074, %v4170
  %v4172 = vpop.f32.mrf.mxu0
  %4173 = vdwg.mxu0
  %v4174 = vadd.f32 %v4156, %v3555
  %v4175 = vadd.f32 %v4161, %v3555
  %v4176 = vadd.f32 %v4166, %v3555
  %v4177 = vadd.f32 %v4171, %v3555
  %v4178 = vtanh.pop %v4174
  %v4179 = vtanh.pop %v4175
  %v4180 = vtanh.pop %v4176
  %v4181 = vtanh.pop %v4177
  %v4182 = vxor.u32 %v4174, 2147483648
  %v4183 = vxor.u32 %v4175, 2147483648
  %v4184 = vxor.u32 %v4176, 2147483648
  %v4185 = vxor.u32 %v4177, 2147483648
  %v4186 = vmul.f32 %v4182, 1.442695
  %v4187 = vpow.pop %v4186
  %v4188 = vmul.f32 %v4183, 1.442695
  %v4189 = vpow.pop %v4188
  %v4190 = vmul.f32 %v4184, 1.442695
  %v4191 = vpow.pop %v4190
  %v4192 = vmul.f32 %v4185, 1.442695
  %v4193 = vpow.pop %v4192
  %v4194 = vadd.f32 %v4187, 1.0
  %v4195 = vadd.f32 %v4189, 1.0
  %v4196 = vadd.f32 %v4191, 1.0
  %v4197 = vadd.f32 %v4193, 1.0
  %v4198 = vrcp.pop %v4194
  %v4199 = vmul.f32 1.0, %v4198
  %v4200 = vrcp.pop %v4195
  %v4201 = vmul.f32 1.0, %v4200
  %v4202 = vrcp.pop %v4196
  %v4203 = vmul.f32 1.0, %v4202
  %v4204 = vrcp.pop %v4197
  %v4205 = vmul.f32 1.0, %v4204
  %v4206 = vsel %vm3565, %v4178, %v4199
  %v4207 = vsel %vm3565, %v4179, %v4201
  %v4208 = vsel %vm3565, %v4180, %v4203
  %v4209 = vsel %vm3565, %v4181, %v4205
  %v4210 = vmul.f32 %v4206, %v3944
  %v4211 = vmul.f32 %v4207, %v3945
  %v4212 = vmul.f32 %v4208, %v3946
  %v4213 = vmul.f32 %v4209, %v3947
  %4218 = vrot.lane.b32.xlu0 %v4206, 64
  %v4219 = vpop.permute.xlu0 %4218
  %4220 = vrot.lane.b32.xlu0 %v4207, 64
  %v4221 = vpop.permute.xlu0 %4220
  %4222 = vrot.lane.b32.xlu0 %v4208, 64
  %v4223 = vpop.permute.xlu0 %4222
  %4224 = vrot.lane.b32.xlu0 %v4209, 64
  %v4225 = vpop.permute.xlu0 %4224
  %v4230 = vmul.f32 %v4206, %v4219
  %v4231 = vmul.f32 %v4207, %v4221
  %v4232 = vmul.f32 %v4208, %v4223
  %v4233 = vmul.f32 %v4209, %v4225
  %4238 = vrot.lane.b32.xlu0 %v4230, 32
  %v4239 = vpop.permute.xlu0 %4238
  %4240 = vrot.lane.b32.xlu0 %v4231, 32
  %v4241 = vpop.permute.xlu0 %4240
  %4242 = vrot.lane.b32.xlu0 %v4232, 32
  %v4243 = vpop.permute.xlu0 %4242
  %4244 = vrot.lane.b32.xlu0 %v4233, 32
  %v4245 = vpop.permute.xlu0 %4244
  %v4250 = vadd.f32 %v4210, %v4239
  %v4251 = vadd.f32 %v4211, %v4241
  %v4252 = vadd.f32 %v4212, %v4243
  %v4253 = vadd.f32 %v4213, %v4245
  %v4254 = vtanh.pop %v4250
  %v4255 = vtanh.pop %v4251
  %v4256 = vtanh.pop %v4252
  %v4257 = vtanh.pop %v4253
  %4262 = vrot.lane.b32.xlu0 %v4254, 64
  %v4263 = vpop.permute.xlu0 %4262
  %4264 = vrot.lane.b32.xlu0 %v4255, 64
  %v4265 = vpop.permute.xlu0 %4264
  %4266 = vrot.lane.b32.xlu0 %v4256, 64
  %v4267 = vpop.permute.xlu0 %4266
  %4268 = vrot.lane.b32.xlu0 %v4257, 64
  %v4269 = vpop.permute.xlu0 %4268
  %v4274 = vmul.f32 %v4206, %v4263
  %v4275 = vmul.f32 %v4207, %v4265
  %v4276 = vmul.f32 %v4208, %v4267
  %v4277 = vmul.f32 %v4209, %v4269
  %4282 = vrot.lane.b32.xlu0 %v4274, 32
  %v4283 = vpop.permute.xlu0 %4282
  %4284 = vrot.lane.b32.xlu0 %v4275, 32
  %v4285 = vpop.permute.xlu0 %4284
  %4286 = vrot.lane.b32.xlu0 %v4276, 32
  %v4287 = vpop.permute.xlu0 %4286
  %4288 = vrot.lane.b32.xlu0 %v4277, 32
  %v4289 = vpop.permute.xlu0 %4288
  %v4290 = vsel %vm1799, %v4283, 0
  %v4292 = vsel %vm1799, %v4285, 0
  %v4294 = vsel %vm1799, %v4287, 0
  %v4296 = vsel %vm1799, %v4289, 0
  %4298 = vmatprep.subr.mxu0 0.0
  %4299 = vmatpush1.msra.mxu0 0.0
  %4300 = vmatprep.subr.mxu0 0.0
  %4301 = vmatpush1.msra.mxu0 0.0
  %4302 = vmatprep.subr.mxu0 0.0
  %4303 = vmatpush1.msra.mxu0 0.0
  %4304 = vmatprep.subr.mxu0 0.0
  %4305 = vmatpush1.msra.mxu0 0.0
  %4306 = vmatprep.subr.mxu0 0.0
  %4307 = vmatpush1.msra.mxu0 0.0
  %4308 = vmatprep.subr.mxu0 0.0
  %4309 = vmatpush1.msra.mxu0 0.0
  %4310 = vmatprep.subr.mxu0 0.0
  %4311 = vmatpush1.msra.mxu0 0.0
  %4312 = vmatprep.subr.mxu0 0.0
  %4313 = vmatpush1.msra.mxu0 0.0
  %4314 = vmatprep.subr.mxu0 0.0
  %4315 = vmatpush1.msra.mxu0 0.0
  %4316 = vmatprep.subr.mxu0 0.0
  %4317 = vmatpush1.msra.mxu0 0.0
  %4318 = vmatprep.subr.mxu0 0.0
  %4319 = vmatpush1.msra.mxu0 0.0
  %4320 = vmatprep.subr.mxu0 0.0
  %4321 = vmatpush1.msra.mxu0 0.0
  %4322 = vmatprep.subr.mxu0 0.0
  %4323 = vmatpush1.msra.mxu0 %v3364
  %4324 = vmatprep.subr.mxu0 0.0
  %4325 = vmatpush1.msra.mxu0 %v3363
  %4326 = vmatprep.subr.mxu0 0.0
  %4327 = vmatpush1.msra.mxu0 %v3362
  %4328 = vmatprep.subr.mxu0 0.0
  %4329 = vmatpush1.msra.mxu0 %v3361
  %4330 = vmatprep.subr.mxu0 0.0
  %4331 = vmatpush2.msra.mxu0 0.0
  %4332 = vmatprep.subr.mxu0 0.0
  %4333 = vmatpush2.msra.mxu0 0.0
  %4334 = vmatprep.subr.mxu0 0.0
  %4335 = vmatpush2.msra.mxu0 0.0
  %4336 = vmatprep.subr.mxu0 0.0
  %4337 = vmatpush2.msra.mxu0 0.0
  %4338 = vmatprep.subr.mxu0 0.0
  %4339 = vmatpush2.msra.mxu0 0.0
  %4340 = vmatprep.subr.mxu0 0.0
  %4341 = vmatpush2.msra.mxu0 0.0
  %4342 = vmatprep.subr.mxu0 0.0
  %4343 = vmatpush2.msra.mxu0 0.0
  %4344 = vmatprep.subr.mxu0 0.0
  %4345 = vmatpush2.msra.mxu0 0.0
  %4346 = vmatprep.subr.mxu0 0.0
  %4347 = vmatpush2.msra.mxu0 0.0
  %4348 = vmatprep.subr.mxu0 0.0
  %4349 = vmatpush2.msra.mxu0 0.0
  %4350 = vmatprep.subr.mxu0 0.0
  %4351 = vmatpush2.msra.mxu0 0.0
  %4352 = vmatprep.subr.mxu0 0.0
  %4353 = vmatpush2.msra.mxu0 0.0
  %4354 = vmatprep.subr.mxu0 0.0
  %4355 = vmatpush2.msra.mxu0 0.0
  %4356 = vmatprep.subr.mxu0 0.0
  %4357 = vmatpush2.msra.mxu0 0.0
  %4358 = vmatprep.subr.mxu0 0.0
  %4359 = vmatpush2.msra.mxu0 0.0
  %4360 = vmatprep.subr.mxu0 0.0
  %4361 = vmatpush2.msra.mxu0 0.0
  %4362 = vmatprep.mubr.f32.mxu0 0.0
  %4363 = vmatmul.mubr.f32.gmra.mxu0 %v4290
  %v4364 = vpop.f32.mrf.mxu0
  %v4365 = vadd.f32 0.0, %v4364
  %v4366 = vpop.f32.mrf.mxu0
  %4367 = vmatprep.mubr.f32.mxu0 0.0
  %4368 = vmatmul.mubr.f32.gmra.mxu0 %v4292
  %v4369 = vpop.f32.mrf.mxu0
  %v4370 = vadd.f32 0.0, %v4369
  %v4371 = vpop.f32.mrf.mxu0
  %4372 = vmatprep.mubr.f32.mxu0 0.0
  %4373 = vmatmul.mubr.f32.gmra.mxu0 %v4294
  %v4374 = vpop.f32.mrf.mxu0
  %v4375 = vadd.f32 0.0, %v4374
  %v4376 = vpop.f32.mrf.mxu0
  %4377 = vmatprep.mubr.f32.mxu0 0.0
  %4378 = vmatmul.mubr.f32.gmra.mxu0 %v4296
  %v4379 = vpop.f32.mrf.mxu0
  %v4380 = vadd.f32 0.0, %v4379
  %v4381 = vpop.f32.mrf.mxu0
  %4382 = vdwg.mxu0
  %v4384 = vsel %vm427, %v3339, 0
  %v4387 = vsel %vm427, %v3340, 0
  %v4390 = vsel %vm427, %v3341, 0
  %v4393 = vsel %vm427, %v3342, 0
  %4395 = vmatprep.subr.mxu0 0.0
  %4396 = vmatpush1.msra.mxu0 0.0
  %4397 = vmatprep.subr.mxu0 0.0
  %4398 = vmatpush1.msra.mxu0 0.0
  %4399 = vmatprep.subr.mxu0 0.0
  %4400 = vmatpush1.msra.mxu0 0.0
  %4401 = vmatprep.subr.mxu0 0.0
  %4402 = vmatpush1.msra.mxu0 0.0
  %4403 = vmatprep.subr.mxu0 0.0
  %4404 = vmatpush1.msra.mxu0 0.0
  %4405 = vmatprep.subr.mxu0 0.0
  %4406 = vmatpush1.msra.mxu0 0.0
  %4407 = vmatprep.subr.mxu0 0.0
  %4408 = vmatpush1.msra.mxu0 0.0
  %4409 = vmatprep.subr.mxu0 0.0
  %4410 = vmatpush1.msra.mxu0 0.0
  %4411 = vmatprep.subr.mxu0 0.0
  %4412 = vmatpush1.msra.mxu0 0.0
  %4413 = vmatprep.subr.mxu0 0.0
  %4414 = vmatpush1.msra.mxu0 0.0
  %4415 = vmatprep.subr.mxu0 0.0
  %4416 = vmatpush1.msra.mxu0 0.0
  %4417 = vmatprep.subr.mxu0 0.0
  %4418 = vmatpush1.msra.mxu0 0.0
  %4419 = vmatprep.subr.mxu0 0.0
  %4420 = vmatpush1.msra.mxu0 0.0
  %4421 = vmatprep.subr.mxu0 0.0
  %4422 = vmatpush1.msra.mxu0 0.0
  %4423 = vmatprep.subr.mxu0 0.0
  %4424 = vmatpush1.msra.mxu0 %v3360
  %4425 = vmatprep.subr.mxu0 0.0
  %4426 = vmatpush1.msra.mxu0 %v3359
  %4427 = vmatprep.subr.mxu0 0.0
  %4428 = vmatpush2.msra.mxu0 0.0
  %4429 = vmatprep.subr.mxu0 0.0
  %4430 = vmatpush2.msra.mxu0 0.0
  %4431 = vmatprep.subr.mxu0 0.0
  %4432 = vmatpush2.msra.mxu0 0.0
  %4433 = vmatprep.subr.mxu0 0.0
  %4434 = vmatpush2.msra.mxu0 0.0
  %4435 = vmatprep.subr.mxu0 0.0
  %4436 = vmatpush2.msra.mxu0 0.0
  %4437 = vmatprep.subr.mxu0 0.0
  %4438 = vmatpush2.msra.mxu0 0.0
  %4439 = vmatprep.subr.mxu0 0.0
  %4440 = vmatpush2.msra.mxu0 0.0
  %4441 = vmatprep.subr.mxu0 0.0
  %4442 = vmatpush2.msra.mxu0 0.0
  %4443 = vmatprep.subr.mxu0 0.0
  %4444 = vmatpush2.msra.mxu0 0.0
  %4445 = vmatprep.subr.mxu0 0.0
  %4446 = vmatpush2.msra.mxu0 0.0
  %4447 = vmatprep.subr.mxu0 0.0
  %4448 = vmatpush2.msra.mxu0 0.0
  %4449 = vmatprep.subr.mxu0 0.0
  %4450 = vmatpush2.msra.mxu0 0.0
  %4451 = vmatprep.subr.mxu0 0.0
  %4452 = vmatpush2.msra.mxu0 0.0
  %4453 = vmatprep.subr.mxu0 0.0
  %4454 = vmatpush2.msra.mxu0 0.0
  %4455 = vmatprep.subr.mxu0 0.0
  %4456 = vmatpush2.msra.mxu0 0.0
  %4457 = vmatprep.subr.mxu0 0.0
  %4458 = vmatpush2.msra.mxu0 0.0
  %4459 = vmatprep.mubr.f32.mxu0 0.0
  %4460 = vmatmul.mubr.f32.gmra.mxu0 %v4384
  %v4461 = vpop.f32.mrf.mxu0
  %v4462 = vadd.f32 %v4365, %v4461
  %v4463 = vpop.f32.mrf.mxu0
  %4464 = vmatprep.mubr.f32.mxu0 0.0
  %4465 = vmatmul.mubr.f32.gmra.mxu0 %v4387
  %v4466 = vpop.f32.mrf.mxu0
  %v4467 = vadd.f32 %v4370, %v4466
  %v4468 = vpop.f32.mrf.mxu0
  %4469 = vmatprep.mubr.f32.mxu0 0.0
  %4470 = vmatmul.mubr.f32.gmra.mxu0 %v4390
  %v4471 = vpop.f32.mrf.mxu0
  %v4472 = vadd.f32 %v4375, %v4471
  %v4473 = vpop.f32.mrf.mxu0
  %4474 = vmatprep.mubr.f32.mxu0 0.0
  %4475 = vmatmul.mubr.f32.gmra.mxu0 %v4393
  %v4476 = vpop.f32.mrf.mxu0
  %v4477 = vadd.f32 %v4380, %v4476
  %v4478 = vpop.f32.mrf.mxu0
  %4479 = vdwg.mxu0
  %v4480 = vadd.f32 %v4462, %v3555
  %v4481 = vadd.f32 %v4467, %v3555
  %v4482 = vadd.f32 %v4472, %v3555
  %v4483 = vadd.f32 %v4477, %v3555
  %v4484 = vtanh.pop %v4480
  %v4485 = vtanh.pop %v4481
  %v4486 = vtanh.pop %v4482
  %v4487 = vtanh.pop %v4483
  %v4488 = vxor.u32 %v4480, 2147483648
  %v4489 = vxor.u32 %v4481, 2147483648
  %v4490 = vxor.u32 %v4482, 2147483648
  %v4491 = vxor.u32 %v4483, 2147483648
  %v4492 = vmul.f32 %v4488, 1.442695
  %v4493 = vpow.pop %v4492
  %v4494 = vmul.f32 %v4489, 1.442695
  %v4495 = vpow.pop %v4494
  %v4496 = vmul.f32 %v4490, 1.442695
  %v4497 = vpow.pop %v4496
  %v4498 = vmul.f32 %v4491, 1.442695
  %v4499 = vpow.pop %v4498
  %v4500 = vadd.f32 %v4493, 1.0
  %v4501 = vadd.f32 %v4495, 1.0
  %v4502 = vadd.f32 %v4497, 1.0
  %v4503 = vadd.f32 %v4499, 1.0
  %v4504 = vrcp.pop %v4500
  %v4505 = vmul.f32 1.0, %v4504
  %v4506 = vrcp.pop %v4501
  %v4507 = vmul.f32 1.0, %v4506
  %v4508 = vrcp.pop %v4502
  %v4509 = vmul.f32 1.0, %v4508
  %v4510 = vrcp.pop %v4503
  %v4511 = vmul.f32 1.0, %v4510
  %v4512 = vsel %vm3565, %v4484, %v4505
  %v4513 = vsel %vm3565, %v4485, %v4507
  %v4514 = vsel %vm3565, %v4486, %v4509
  %v4515 = vsel %vm3565, %v4487, %v4511
  %v4516 = vmul.f32 %v4512, %v4250
  %v4517 = vmul.f32 %v4513, %v4251
  %v4518 = vmul.f32 %v4514, %v4252
  %v4519 = vmul.f32 %v4515, %v4253
  %4524 = vrot.lane.b32.xlu0 %v4512, 64
  %v4525 = vpop.permute.xlu0 %4524
  %4526 = vrot.lane.b32.xlu0 %v4513, 64
  %v4527 = vpop.permute.xlu0 %4526
  %4528 = vrot.lane.b32.xlu0 %v4514, 64
  %v4529 = vpop.permute.xlu0 %4528
  %4530 = vrot.lane.b32.xlu0 %v4515, 64
  %v4531 = vpop.permute.xlu0 %4530
  %v4536 = vmul.f32 %v4512, %v4525
  %v4537 = vmul.f32 %v4513, %v4527
  %v4538 = vmul.f32 %v4514, %v4529
  %v4539 = vmul.f32 %v4515, %v4531
  %4544 = vrot.lane.b32.xlu0 %v4536, 32
  %v4545 = vpop.permute.xlu0 %4544
  %4546 = vrot.lane.b32.xlu0 %v4537, 32
  %v4547 = vpop.permute.xlu0 %4546
  %4548 = vrot.lane.b32.xlu0 %v4538, 32
  %v4549 = vpop.permute.xlu0 %4548
  %4550 = vrot.lane.b32.xlu0 %v4539, 32
  %v4551 = vpop.permute.xlu0 %4550
  %v4556 = vadd.f32 %v4516, %v4545
  %v4557 = vadd.f32 %v4517, %v4547
  %v4558 = vadd.f32 %v4518, %v4549
  %v4559 = vadd.f32 %v4519, %v4551
  %v4560 = vtanh.pop %v4556
  %v4561 = vtanh.pop %v4557
  %v4562 = vtanh.pop %v4558
  %v4563 = vtanh.pop %v4559
  %4568 = vrot.lane.b32.xlu0 %v4560, 64
  %v4569 = vpop.permute.xlu0 %4568
  %4570 = vrot.lane.b32.xlu0 %v4561, 64
  %v4571 = vpop.permute.xlu0 %4570
  %4572 = vrot.lane.b32.xlu0 %v4562, 64
  %v4573 = vpop.permute.xlu0 %4572
  %4574 = vrot.lane.b32.xlu0 %v4563, 64
  %v4575 = vpop.permute.xlu0 %4574
  %v4580 = vmul.f32 %v4512, %v4569
  %v4581 = vmul.f32 %v4513, %v4571
  %v4582 = vmul.f32 %v4514, %v4573
  %v4583 = vmul.f32 %v4515, %v4575
  %4588 = vrot.lane.b32.xlu0 %v4580, 32
  %v4589 = vpop.permute.xlu0 %4588
  %4590 = vrot.lane.b32.xlu0 %v4581, 32
  %v4591 = vpop.permute.xlu0 %4590
  %4592 = vrot.lane.b32.xlu0 %v4582, 32
  %v4593 = vpop.permute.xlu0 %4592
  %4594 = vrot.lane.b32.xlu0 %v4583, 32
  %v4595 = vpop.permute.xlu0 %4594
  %v4596 = vsel %vm1799, %v4589, 0
  %v4598 = vsel %vm1799, %v4591, 0
  %v4600 = vsel %vm1799, %v4593, 0
  %v4602 = vsel %vm1799, %v4595, 0
  %4604 = vmatprep.subr.mxu0 0.0
  %4605 = vmatpush1.msra.mxu0 0.0
  %4606 = vmatprep.subr.mxu0 0.0
  %4607 = vmatpush1.msra.mxu0 0.0
  %4608 = vmatprep.subr.mxu0 0.0
  %4609 = vmatpush1.msra.mxu0 0.0
  %4610 = vmatprep.subr.mxu0 0.0
  %4611 = vmatpush1.msra.mxu0 0.0
  %4612 = vmatprep.subr.mxu0 0.0
  %4613 = vmatpush1.msra.mxu0 0.0
  %4614 = vmatprep.subr.mxu0 0.0
  %4615 = vmatpush1.msra.mxu0 0.0
  %4616 = vmatprep.subr.mxu0 0.0
  %4617 = vmatpush1.msra.mxu0 0.0
  %4618 = vmatprep.subr.mxu0 0.0
  %4619 = vmatpush1.msra.mxu0 0.0
  %4620 = vmatprep.subr.mxu0 0.0
  %4621 = vmatpush1.msra.mxu0 0.0
  %4622 = vmatprep.subr.mxu0 0.0
  %4623 = vmatpush1.msra.mxu0 0.0
  %4624 = vmatprep.subr.mxu0 0.0
  %4625 = vmatpush1.msra.mxu0 0.0
  %4626 = vmatprep.subr.mxu0 0.0
  %4627 = vmatpush1.msra.mxu0 0.0
  %4628 = vmatprep.subr.mxu0 0.0
  %4629 = vmatpush1.msra.mxu0 %v3364
  %4630 = vmatprep.subr.mxu0 0.0
  %4631 = vmatpush1.msra.mxu0 %v3363
  %4632 = vmatprep.subr.mxu0 0.0
  %4633 = vmatpush1.msra.mxu0 %v3362
  %4634 = vmatprep.subr.mxu0 0.0
  %4635 = vmatpush1.msra.mxu0 %v3361
  %4636 = vmatprep.subr.mxu0 0.0
  %4637 = vmatpush2.msra.mxu0 0.0
  %4638 = vmatprep.subr.mxu0 0.0
  %4639 = vmatpush2.msra.mxu0 0.0
  %4640 = vmatprep.subr.mxu0 0.0
  %4641 = vmatpush2.msra.mxu0 0.0
  %4642 = vmatprep.subr.mxu0 0.0
  %4643 = vmatpush2.msra.mxu0 0.0
  %4644 = vmatprep.subr.mxu0 0.0
  %4645 = vmatpush2.msra.mxu0 0.0
  %4646 = vmatprep.subr.mxu0 0.0
  %4647 = vmatpush2.msra.mxu0 0.0
  %4648 = vmatprep.subr.mxu0 0.0
  %4649 = vmatpush2.msra.mxu0 0.0
  %4650 = vmatprep.subr.mxu0 0.0
  %4651 = vmatpush2.msra.mxu0 0.0
  %4652 = vmatprep.subr.mxu0 0.0
  %4653 = vmatpush2.msra.mxu0 0.0
  %4654 = vmatprep.subr.mxu0 0.0
  %4655 = vmatpush2.msra.mxu0 0.0
  %4656 = vmatprep.subr.mxu0 0.0
  %4657 = vmatpush2.msra.mxu0 0.0
  %4658 = vmatprep.subr.mxu0 0.0
  %4659 = vmatpush2.msra.mxu0 0.0
  %4660 = vmatprep.subr.mxu0 0.0
  %4661 = vmatpush2.msra.mxu0 0.0
  %4662 = vmatprep.subr.mxu0 0.0
  %4663 = vmatpush2.msra.mxu0 0.0
  %4664 = vmatprep.subr.mxu0 0.0
  %4665 = vmatpush2.msra.mxu0 0.0
  %4666 = vmatprep.subr.mxu0 0.0
  %4667 = vmatpush2.msra.mxu0 0.0
  %4668 = vmatprep.mubr.f32.mxu0 0.0
  %4669 = vmatmul.mubr.f32.gmra.mxu0 %v4596
  %v4670 = vpop.f32.mrf.mxu0
  %v4671 = vadd.f32 0.0, %v4670
  %v4672 = vpop.f32.mrf.mxu0
  %4673 = vmatprep.mubr.f32.mxu0 0.0
  %4674 = vmatmul.mubr.f32.gmra.mxu0 %v4598
  %v4675 = vpop.f32.mrf.mxu0
  %v4676 = vadd.f32 0.0, %v4675
  %v4677 = vpop.f32.mrf.mxu0
  %4678 = vmatprep.mubr.f32.mxu0 0.0
  %4679 = vmatmul.mubr.f32.gmra.mxu0 %v4600
  %v4680 = vpop.f32.mrf.mxu0
  %v4681 = vadd.f32 0.0, %v4680
  %v4682 = vpop.f32.mrf.mxu0
  %4683 = vmatprep.mubr.f32.mxu0 0.0
  %4684 = vmatmul.mubr.f32.gmra.mxu0 %v4602
  %v4685 = vpop.f32.mrf.mxu0
  %v4686 = vadd.f32 0.0, %v4685
  %v4687 = vpop.f32.mrf.mxu0
  %4688 = vdwg.mxu0
  %v4690 = vsel %vm427, %v3343, 0
  %v4693 = vsel %vm427, %v3344, 0
  %v4696 = vsel %vm427, %v3345, 0
  %v4699 = vsel %vm427, %v3346, 0
  %4701 = vmatprep.subr.mxu0 0.0
  %4702 = vmatpush1.msra.mxu0 0.0
  %4703 = vmatprep.subr.mxu0 0.0
  %4704 = vmatpush1.msra.mxu0 0.0
  %4705 = vmatprep.subr.mxu0 0.0
  %4706 = vmatpush1.msra.mxu0 0.0
  %4707 = vmatprep.subr.mxu0 0.0
  %4708 = vmatpush1.msra.mxu0 0.0
  %4709 = vmatprep.subr.mxu0 0.0
  %4710 = vmatpush1.msra.mxu0 0.0
  %4711 = vmatprep.subr.mxu0 0.0
  %4712 = vmatpush1.msra.mxu0 0.0
  %4713 = vmatprep.subr.mxu0 0.0
  %4714 = vmatpush1.msra.mxu0 0.0
  %4715 = vmatprep.subr.mxu0 0.0
  %4716 = vmatpush1.msra.mxu0 0.0
  %4717 = vmatprep.subr.mxu0 0.0
  %4718 = vmatpush1.msra.mxu0 0.0
  %4719 = vmatprep.subr.mxu0 0.0
  %4720 = vmatpush1.msra.mxu0 0.0
  %4721 = vmatprep.subr.mxu0 0.0
  %4722 = vmatpush1.msra.mxu0 0.0
  %4723 = vmatprep.subr.mxu0 0.0
  %4724 = vmatpush1.msra.mxu0 0.0
  %4725 = vmatprep.subr.mxu0 0.0
  %4726 = vmatpush1.msra.mxu0 0.0
  %4727 = vmatprep.subr.mxu0 0.0
  %4728 = vmatpush1.msra.mxu0 0.0
  %4729 = vmatprep.subr.mxu0 0.0
  %4730 = vmatpush1.msra.mxu0 %v3360
  %4731 = vmatprep.subr.mxu0 0.0
  %4732 = vmatpush1.msra.mxu0 %v3359
  %4733 = vmatprep.subr.mxu0 0.0
  %4734 = vmatpush2.msra.mxu0 0.0
  %4735 = vmatprep.subr.mxu0 0.0
  %4736 = vmatpush2.msra.mxu0 0.0
  %4737 = vmatprep.subr.mxu0 0.0
  %4738 = vmatpush2.msra.mxu0 0.0
  %4739 = vmatprep.subr.mxu0 0.0
  %4740 = vmatpush2.msra.mxu0 0.0
  %4741 = vmatprep.subr.mxu0 0.0
  %4742 = vmatpush2.msra.mxu0 0.0
  %4743 = vmatprep.subr.mxu0 0.0
  %4744 = vmatpush2.msra.mxu0 0.0
  %4745 = vmatprep.subr.mxu0 0.0
  %4746 = vmatpush2.msra.mxu0 0.0
  %4747 = vmatprep.subr.mxu0 0.0
  %4748 = vmatpush2.msra.mxu0 0.0
  %4749 = vmatprep.subr.mxu0 0.0
  %4750 = vmatpush2.msra.mxu0 0.0
  %4751 = vmatprep.subr.mxu0 0.0
  %4752 = vmatpush2.msra.mxu0 0.0
  %4753 = vmatprep.subr.mxu0 0.0
  %4754 = vmatpush2.msra.mxu0 0.0
  %4755 = vmatprep.subr.mxu0 0.0
  %4756 = vmatpush2.msra.mxu0 0.0
  %4757 = vmatprep.subr.mxu0 0.0
  %4758 = vmatpush2.msra.mxu0 0.0
  %4759 = vmatprep.subr.mxu0 0.0
  %4760 = vmatpush2.msra.mxu0 0.0
  %4761 = vmatprep.subr.mxu0 0.0
  %4762 = vmatpush2.msra.mxu0 0.0
  %4763 = vmatprep.subr.mxu0 0.0
  %4764 = vmatpush2.msra.mxu0 0.0
  %4765 = vmatprep.mubr.f32.mxu0 0.0
  %4766 = vmatmul.mubr.f32.gmra.mxu0 %v4690
  %v4767 = vpop.f32.mrf.mxu0
  %v4768 = vadd.f32 %v4671, %v4767
  %v4769 = vpop.f32.mrf.mxu0
  %4770 = vmatprep.mubr.f32.mxu0 0.0
  %4771 = vmatmul.mubr.f32.gmra.mxu0 %v4693
  %v4772 = vpop.f32.mrf.mxu0
  %v4773 = vadd.f32 %v4676, %v4772
  %v4774 = vpop.f32.mrf.mxu0
  %4775 = vmatprep.mubr.f32.mxu0 0.0
  %4776 = vmatmul.mubr.f32.gmra.mxu0 %v4696
  %v4777 = vpop.f32.mrf.mxu0
  %v4778 = vadd.f32 %v4681, %v4777
  %v4779 = vpop.f32.mrf.mxu0
  %4780 = vmatprep.mubr.f32.mxu0 0.0
  %4781 = vmatmul.mubr.f32.gmra.mxu0 %v4699
  %v4782 = vpop.f32.mrf.mxu0
  %v4783 = vadd.f32 %v4686, %v4782
  %v4784 = vpop.f32.mrf.mxu0
  %4785 = vdwg.mxu0
  %v4786 = vadd.f32 %v4768, %v3555
  %v4787 = vadd.f32 %v4773, %v3555
  %v4788 = vadd.f32 %v4778, %v3555
  %v4789 = vadd.f32 %v4783, %v3555
  %v4790 = vtanh.pop %v4786
  %v4791 = vtanh.pop %v4787
  %v4792 = vtanh.pop %v4788
  %v4793 = vtanh.pop %v4789
  %v4794 = vxor.u32 %v4786, 2147483648
  %v4795 = vxor.u32 %v4787, 2147483648
  %v4796 = vxor.u32 %v4788, 2147483648
  %v4797 = vxor.u32 %v4789, 2147483648
  %v4798 = vmul.f32 %v4794, 1.442695
  %v4799 = vpow.pop %v4798
  %v4800 = vmul.f32 %v4795, 1.442695
  %v4801 = vpow.pop %v4800
  %v4802 = vmul.f32 %v4796, 1.442695
  %v4803 = vpow.pop %v4802
  %v4804 = vmul.f32 %v4797, 1.442695
  %v4805 = vpow.pop %v4804
  %v4806 = vadd.f32 %v4799, 1.0
  %v4807 = vadd.f32 %v4801, 1.0
  %v4808 = vadd.f32 %v4803, 1.0
  %v4809 = vadd.f32 %v4805, 1.0
  %v4810 = vrcp.pop %v4806
  %v4811 = vmul.f32 1.0, %v4810
  %v4812 = vrcp.pop %v4807
  %v4813 = vmul.f32 1.0, %v4812
  %v4814 = vrcp.pop %v4808
  %v4815 = vmul.f32 1.0, %v4814
  %v4816 = vrcp.pop %v4809
  %v4817 = vmul.f32 1.0, %v4816
  %v4818 = vsel %vm3565, %v4790, %v4811
  %v4819 = vsel %vm3565, %v4791, %v4813
  %v4820 = vsel %vm3565, %v4792, %v4815
  %v4821 = vsel %vm3565, %v4793, %v4817
  %v4822 = vmul.f32 %v4818, %v4556
  %v4823 = vmul.f32 %v4819, %v4557
  %v4824 = vmul.f32 %v4820, %v4558
  %v4825 = vmul.f32 %v4821, %v4559
  %4830 = vrot.lane.b32.xlu0 %v4818, 64
  %v4831 = vpop.permute.xlu0 %4830
  %4832 = vrot.lane.b32.xlu0 %v4819, 64
  %v4833 = vpop.permute.xlu0 %4832
  %4834 = vrot.lane.b32.xlu0 %v4820, 64
  %v4835 = vpop.permute.xlu0 %4834
  %4836 = vrot.lane.b32.xlu0 %v4821, 64
  %v4837 = vpop.permute.xlu0 %4836
  %v4842 = vmul.f32 %v4818, %v4831
  %v4843 = vmul.f32 %v4819, %v4833
  %v4844 = vmul.f32 %v4820, %v4835
  %v4845 = vmul.f32 %v4821, %v4837
  %4850 = vrot.lane.b32.xlu0 %v4842, 32
  %v4851 = vpop.permute.xlu0 %4850
  %4852 = vrot.lane.b32.xlu0 %v4843, 32
  %v4853 = vpop.permute.xlu0 %4852
  %4854 = vrot.lane.b32.xlu0 %v4844, 32
  %v4855 = vpop.permute.xlu0 %4854
  %4856 = vrot.lane.b32.xlu0 %v4845, 32
  %v4857 = vpop.permute.xlu0 %4856
  %v4862 = vadd.f32 %v4822, %v4851
  %v4863 = vadd.f32 %v4823, %v4853
  %v4864 = vadd.f32 %v4824, %v4855
  %v4865 = vadd.f32 %v4825, %v4857
  %v4866 = vtanh.pop %v4862
  %v4867 = vtanh.pop %v4863
  %v4868 = vtanh.pop %v4864
  %v4869 = vtanh.pop %v4865
  %4874 = vrot.lane.b32.xlu0 %v4866, 64
  %v4875 = vpop.permute.xlu0 %4874
  %4876 = vrot.lane.b32.xlu0 %v4867, 64
  %v4877 = vpop.permute.xlu0 %4876
  %4878 = vrot.lane.b32.xlu0 %v4868, 64
  %v4879 = vpop.permute.xlu0 %4878
  %4880 = vrot.lane.b32.xlu0 %v4869, 64
  %v4881 = vpop.permute.xlu0 %4880
  %v4886 = vmul.f32 %v4818, %v4875
  %v4887 = vmul.f32 %v4819, %v4877
  %v4888 = vmul.f32 %v4820, %v4879
  %v4889 = vmul.f32 %v4821, %v4881
  %4894 = vrot.lane.b32.xlu0 %v4886, 32
  %v4895 = vpop.permute.xlu0 %4894
  %4896 = vrot.lane.b32.xlu0 %v4887, 32
  %v4897 = vpop.permute.xlu0 %4896
  %4898 = vrot.lane.b32.xlu0 %v4888, 32
  %v4899 = vpop.permute.xlu0 %4898
  %4900 = vrot.lane.b32.xlu0 %v4889, 32
  %v4901 = vpop.permute.xlu0 %4900
  %v4902 = vsel %vm1799, %v4895, 0
  %v4904 = vsel %vm1799, %v4897, 0
  %v4906 = vsel %vm1799, %v4899, 0
  %v4908 = vsel %vm1799, %v4901, 0
  %4910 = vmatprep.subr.mxu0 0.0
  %4911 = vmatpush1.msra.mxu0 0.0
  %4912 = vmatprep.subr.mxu0 0.0
  %4913 = vmatpush1.msra.mxu0 0.0
  %4914 = vmatprep.subr.mxu0 0.0
  %4915 = vmatpush1.msra.mxu0 0.0
  %4916 = vmatprep.subr.mxu0 0.0
  %4917 = vmatpush1.msra.mxu0 0.0
  %4918 = vmatprep.subr.mxu0 0.0
  %4919 = vmatpush1.msra.mxu0 0.0
  %4920 = vmatprep.subr.mxu0 0.0
  %4921 = vmatpush1.msra.mxu0 0.0
  %4922 = vmatprep.subr.mxu0 0.0
  %4923 = vmatpush1.msra.mxu0 0.0
  %4924 = vmatprep.subr.mxu0 0.0
  %4925 = vmatpush1.msra.mxu0 0.0
  %4926 = vmatprep.subr.mxu0 0.0
  %4927 = vmatpush1.msra.mxu0 0.0
  %4928 = vmatprep.subr.mxu0 0.0
  %4929 = vmatpush1.msra.mxu0 0.0
  %4930 = vmatprep.subr.mxu0 0.0
  %4931 = vmatpush1.msra.mxu0 0.0
  %4932 = vmatprep.subr.mxu0 0.0
  %4933 = vmatpush1.msra.mxu0 0.0
  %4934 = vmatprep.subr.mxu0 0.0
  %4935 = vmatpush1.msra.mxu0 %v3364
  %4936 = vmatprep.subr.mxu0 0.0
  %4937 = vmatpush1.msra.mxu0 %v3363
  %4938 = vmatprep.subr.mxu0 0.0
  %4939 = vmatpush1.msra.mxu0 %v3362
  %4940 = vmatprep.subr.mxu0 0.0
  %4941 = vmatpush1.msra.mxu0 %v3361
  %4942 = vmatprep.subr.mxu0 0.0
  %4943 = vmatpush2.msra.mxu0 0.0
  %4944 = vmatprep.subr.mxu0 0.0
  %4945 = vmatpush2.msra.mxu0 0.0
  %4946 = vmatprep.subr.mxu0 0.0
  %4947 = vmatpush2.msra.mxu0 0.0
  %4948 = vmatprep.subr.mxu0 0.0
  %4949 = vmatpush2.msra.mxu0 0.0
  %4950 = vmatprep.subr.mxu0 0.0
  %4951 = vmatpush2.msra.mxu0 0.0
  %4952 = vmatprep.subr.mxu0 0.0
  %4953 = vmatpush2.msra.mxu0 0.0
  %4954 = vmatprep.subr.mxu0 0.0
  %4955 = vmatpush2.msra.mxu0 0.0
  %4956 = vmatprep.subr.mxu0 0.0
  %4957 = vmatpush2.msra.mxu0 0.0
  %4958 = vmatprep.subr.mxu0 0.0
  %4959 = vmatpush2.msra.mxu0 0.0
  %4960 = vmatprep.subr.mxu0 0.0
  %4961 = vmatpush2.msra.mxu0 0.0
  %4962 = vmatprep.subr.mxu0 0.0
  %4963 = vmatpush2.msra.mxu0 0.0
  %4964 = vmatprep.subr.mxu0 0.0
  %4965 = vmatpush2.msra.mxu0 0.0
  %4966 = vmatprep.subr.mxu0 0.0
  %4967 = vmatpush2.msra.mxu0 0.0
  %4968 = vmatprep.subr.mxu0 0.0
  %4969 = vmatpush2.msra.mxu0 0.0
  %4970 = vmatprep.subr.mxu0 0.0
  %4971 = vmatpush2.msra.mxu0 0.0
  %4972 = vmatprep.subr.mxu0 0.0
  %4973 = vmatpush2.msra.mxu0 0.0
  %4974 = vmatprep.mubr.f32.mxu0 0.0
  %4975 = vmatmul.mubr.f32.gmra.mxu0 %v4902
  %v4976 = vpop.f32.mrf.mxu0
  %v4977 = vadd.f32 0.0, %v4976
  %v4978 = vpop.f32.mrf.mxu0
  %4979 = vmatprep.mubr.f32.mxu0 0.0
  %4980 = vmatmul.mubr.f32.gmra.mxu0 %v4904
  %v4981 = vpop.f32.mrf.mxu0
  %v4982 = vadd.f32 0.0, %v4981
  %v4983 = vpop.f32.mrf.mxu0
  %4984 = vmatprep.mubr.f32.mxu0 0.0
  %4985 = vmatmul.mubr.f32.gmra.mxu0 %v4906
  %v4986 = vpop.f32.mrf.mxu0
  %v4987 = vadd.f32 0.0, %v4986
  %v4988 = vpop.f32.mrf.mxu0
  %4989 = vmatprep.mubr.f32.mxu0 0.0
  %4990 = vmatmul.mubr.f32.gmra.mxu0 %v4908
  %v4991 = vpop.f32.mrf.mxu0
  %v4992 = vadd.f32 0.0, %v4991
  %v4993 = vpop.f32.mrf.mxu0
  %4994 = vdwg.mxu0
  %v4996 = vsel %vm427, %v3347, 0
  %v4999 = vsel %vm427, %v3348, 0
  %v5002 = vsel %vm427, %v3349, 0
  %v5005 = vsel %vm427, %v3350, 0
  %5007 = vmatprep.subr.mxu0 0.0
  %5008 = vmatpush1.msra.mxu0 0.0
  %5009 = vmatprep.subr.mxu0 0.0
  %5010 = vmatpush1.msra.mxu0 0.0
  %5011 = vmatprep.subr.mxu0 0.0
  %5012 = vmatpush1.msra.mxu0 0.0
  %5013 = vmatprep.subr.mxu0 0.0
  %5014 = vmatpush1.msra.mxu0 0.0
  %5015 = vmatprep.subr.mxu0 0.0
  %5016 = vmatpush1.msra.mxu0 0.0
  %5017 = vmatprep.subr.mxu0 0.0
  %5018 = vmatpush1.msra.mxu0 0.0
  %5019 = vmatprep.subr.mxu0 0.0
  %5020 = vmatpush1.msra.mxu0 0.0
  %5021 = vmatprep.subr.mxu0 0.0
  %5022 = vmatpush1.msra.mxu0 0.0
  %5023 = vmatprep.subr.mxu0 0.0
  %5024 = vmatpush1.msra.mxu0 0.0
  %5025 = vmatprep.subr.mxu0 0.0
  %5026 = vmatpush1.msra.mxu0 0.0
  %5027 = vmatprep.subr.mxu0 0.0
  %5028 = vmatpush1.msra.mxu0 0.0
  %5029 = vmatprep.subr.mxu0 0.0
  %5030 = vmatpush1.msra.mxu0 0.0
  %5031 = vmatprep.subr.mxu0 0.0
  %5032 = vmatpush1.msra.mxu0 0.0
  %5033 = vmatprep.subr.mxu0 0.0
  %5034 = vmatpush1.msra.mxu0 0.0
  %5035 = vmatprep.subr.mxu0 0.0
  %5036 = vmatpush1.msra.mxu0 %v3360
  %5037 = vmatprep.subr.mxu0 0.0
  %5038 = vmatpush1.msra.mxu0 %v3359
  %5039 = vmatprep.subr.mxu0 0.0
  %5040 = vmatpush2.msra.mxu0 0.0
  %5041 = vmatprep.subr.mxu0 0.0
  %5042 = vmatpush2.msra.mxu0 0.0
  %5043 = vmatprep.subr.mxu0 0.0
  %5044 = vmatpush2.msra.mxu0 0.0
  %5045 = vmatprep.subr.mxu0 0.0
  %5046 = vmatpush2.msra.mxu0 0.0
  %5047 = vmatprep.subr.mxu0 0.0
  %5048 = vmatpush2.msra.mxu0 0.0
  %5049 = vmatprep.subr.mxu0 0.0
  %5050 = vmatpush2.msra.mxu0 0.0
  %5051 = vmatprep.subr.mxu0 0.0
  %5052 = vmatpush2.msra.mxu0 0.0
  %5053 = vmatprep.subr.mxu0 0.0
  %5054 = vmatpush2.msra.mxu0 0.0
  %5055 = vmatprep.subr.mxu0 0.0
  %5056 = vmatpush2.msra.mxu0 0.0
  %5057 = vmatprep.subr.mxu0 0.0
  %5058 = vmatpush2.msra.mxu0 0.0
  %5059 = vmatprep.subr.mxu0 0.0
  %5060 = vmatpush2.msra.mxu0 0.0
  %5061 = vmatprep.subr.mxu0 0.0
  %5062 = vmatpush2.msra.mxu0 0.0
  %5063 = vmatprep.subr.mxu0 0.0
  %5064 = vmatpush2.msra.mxu0 0.0
  %5065 = vmatprep.subr.mxu0 0.0
  %5066 = vmatpush2.msra.mxu0 0.0
  %5067 = vmatprep.subr.mxu0 0.0
  %5068 = vmatpush2.msra.mxu0 0.0
  %5069 = vmatprep.subr.mxu0 0.0
  %5070 = vmatpush2.msra.mxu0 0.0
  %5071 = vmatprep.mubr.f32.mxu0 0.0
  %5072 = vmatmul.mubr.f32.gmra.mxu0 %v4996
  %v5073 = vpop.f32.mrf.mxu0
  %v5074 = vadd.f32 %v4977, %v5073
  %v5075 = vpop.f32.mrf.mxu0
  %5076 = vmatprep.mubr.f32.mxu0 0.0
  %5077 = vmatmul.mubr.f32.gmra.mxu0 %v4999
  %v5078 = vpop.f32.mrf.mxu0
  %v5079 = vadd.f32 %v4982, %v5078
  %v5080 = vpop.f32.mrf.mxu0
  %5081 = vmatprep.mubr.f32.mxu0 0.0
  %5082 = vmatmul.mubr.f32.gmra.mxu0 %v5002
  %v5083 = vpop.f32.mrf.mxu0
  %v5084 = vadd.f32 %v4987, %v5083
  %v5085 = vpop.f32.mrf.mxu0
  %5086 = vmatprep.mubr.f32.mxu0 0.0
  %5087 = vmatmul.mubr.f32.gmra.mxu0 %v5005
  %v5088 = vpop.f32.mrf.mxu0
  %v5089 = vadd.f32 %v4992, %v5088
  %v5090 = vpop.f32.mrf.mxu0
  %5091 = vdwg.mxu0
  %v5092 = vadd.f32 %v5074, %v3555
  %v5093 = vadd.f32 %v5079, %v3555
  %v5094 = vadd.f32 %v5084, %v3555
  %v5095 = vadd.f32 %v5089, %v3555
  %v5096 = vtanh.pop %v5092
  %v5097 = vtanh.pop %v5093
  %v5098 = vtanh.pop %v5094
  %v5099 = vtanh.pop %v5095
  %v5100 = vxor.u32 %v5092, 2147483648
  %v5101 = vxor.u32 %v5093, 2147483648
  %v5102 = vxor.u32 %v5094, 2147483648
  %v5103 = vxor.u32 %v5095, 2147483648
  %v5104 = vmul.f32 %v5100, 1.442695
  %v5105 = vpow.pop %v5104
  %v5106 = vmul.f32 %v5101, 1.442695
  %v5107 = vpow.pop %v5106
  %v5108 = vmul.f32 %v5102, 1.442695
  %v5109 = vpow.pop %v5108
  %v5110 = vmul.f32 %v5103, 1.442695
  %v5111 = vpow.pop %v5110
  %v5112 = vadd.f32 %v5105, 1.0
  %v5113 = vadd.f32 %v5107, 1.0
  %v5114 = vadd.f32 %v5109, 1.0
  %v5115 = vadd.f32 %v5111, 1.0
  %v5116 = vrcp.pop %v5112
  %v5117 = vmul.f32 1.0, %v5116
  %v5118 = vrcp.pop %v5113
  %v5119 = vmul.f32 1.0, %v5118
  %v5120 = vrcp.pop %v5114
  %v5121 = vmul.f32 1.0, %v5120
  %v5122 = vrcp.pop %v5115
  %v5123 = vmul.f32 1.0, %v5122
  %v5124 = vsel %vm3565, %v5096, %v5117
  %v5125 = vsel %vm3565, %v5097, %v5119
  %v5126 = vsel %vm3565, %v5098, %v5121
  %v5127 = vsel %vm3565, %v5099, %v5123
  %v5128 = vmul.f32 %v5124, %v4862
  %v5129 = vmul.f32 %v5125, %v4863
  %v5130 = vmul.f32 %v5126, %v4864
  %v5131 = vmul.f32 %v5127, %v4865
  %5136 = vrot.lane.b32.xlu0 %v5124, 64
  %v5137 = vpop.permute.xlu0 %5136
  %5138 = vrot.lane.b32.xlu0 %v5125, 64
  %v5139 = vpop.permute.xlu0 %5138
  %5140 = vrot.lane.b32.xlu0 %v5126, 64
  %v5141 = vpop.permute.xlu0 %5140
  %5142 = vrot.lane.b32.xlu0 %v5127, 64
  %v5143 = vpop.permute.xlu0 %5142
  %v5148 = vmul.f32 %v5124, %v5137
  %v5149 = vmul.f32 %v5125, %v5139
  %v5150 = vmul.f32 %v5126, %v5141
  %v5151 = vmul.f32 %v5127, %v5143
  %5156 = vrot.lane.b32.xlu0 %v5148, 32
  %v5157 = vpop.permute.xlu0 %5156
  %5158 = vrot.lane.b32.xlu0 %v5149, 32
  %v5159 = vpop.permute.xlu0 %5158
  %5160 = vrot.lane.b32.xlu0 %v5150, 32
  %v5161 = vpop.permute.xlu0 %5160
  %5162 = vrot.lane.b32.xlu0 %v5151, 32
  %v5163 = vpop.permute.xlu0 %5162
  %v5168 = vadd.f32 %v5128, %v5157
  %v5169 = vadd.f32 %v5129, %v5159
  %v5170 = vadd.f32 %v5130, %v5161
  %v5171 = vadd.f32 %v5131, %v5163
  %v5172 = vtanh.pop %v5168
  %v5173 = vtanh.pop %v5169
  %v5174 = vtanh.pop %v5170
  %v5175 = vtanh.pop %v5171
  %5180 = vrot.lane.b32.xlu0 %v5172, 64
  %v5181 = vpop.permute.xlu0 %5180
  %5182 = vrot.lane.b32.xlu0 %v5173, 64
  %v5183 = vpop.permute.xlu0 %5182
  %5184 = vrot.lane.b32.xlu0 %v5174, 64
  %v5185 = vpop.permute.xlu0 %5184
  %5186 = vrot.lane.b32.xlu0 %v5175, 64
  %v5187 = vpop.permute.xlu0 %5186
  %v5192 = vmul.f32 %v5124, %v5181
  %v5193 = vmul.f32 %v5125, %v5183
  %v5194 = vmul.f32 %v5126, %v5185
  %v5195 = vmul.f32 %v5127, %v5187
  %5200 = vrot.lane.b32.xlu0 %v5192, 32
  %v5201 = vpop.permute.xlu0 %5200
  %5202 = vrot.lane.b32.xlu0 %v5193, 32
  %v5203 = vpop.permute.xlu0 %5202
  %5204 = vrot.lane.b32.xlu0 %v5194, 32
  %v5205 = vpop.permute.xlu0 %5204
  %5206 = vrot.lane.b32.xlu0 %v5195, 32
  %v5207 = vpop.permute.xlu0 %5206
  %v5208 = vsel %vm1799, %v5201, 0
  %v5210 = vsel %vm1799, %v5203, 0
  %v5212 = vsel %vm1799, %v5205, 0
  %v5214 = vsel %vm1799, %v5207, 0
  %5216 = vmatprep.subr.mxu0 0.0
  %5217 = vmatpush1.msra.mxu0 0.0
  %5218 = vmatprep.subr.mxu0 0.0
  %5219 = vmatpush1.msra.mxu0 0.0
  %5220 = vmatprep.subr.mxu0 0.0
  %5221 = vmatpush1.msra.mxu0 0.0
  %5222 = vmatprep.subr.mxu0 0.0
  %5223 = vmatpush1.msra.mxu0 0.0
  %5224 = vmatprep.subr.mxu0 0.0
  %5225 = vmatpush1.msra.mxu0 0.0
  %5226 = vmatprep.subr.mxu0 0.0
  %5227 = vmatpush1.msra.mxu0 0.0
  %5228 = vmatprep.subr.mxu0 0.0
  %5229 = vmatpush1.msra.mxu0 0.0
  %5230 = vmatprep.subr.mxu0 0.0
  %5231 = vmatpush1.msra.mxu0 0.0
  %5232 = vmatprep.subr.mxu0 0.0
  %5233 = vmatpush1.msra.mxu0 0.0
  %5234 = vmatprep.subr.mxu0 0.0
  %5235 = vmatpush1.msra.mxu0 0.0
  %5236 = vmatprep.subr.mxu0 0.0
  %5237 = vmatpush1.msra.mxu0 0.0
  %5238 = vmatprep.subr.mxu0 0.0
  %5239 = vmatpush1.msra.mxu0 0.0
  %5240 = vmatprep.subr.mxu0 0.0
  %5241 = vmatpush1.msra.mxu0 %v3364
  %5242 = vmatprep.subr.mxu0 0.0
  %5243 = vmatpush1.msra.mxu0 %v3363
  %5244 = vmatprep.subr.mxu0 0.0
  %5245 = vmatpush1.msra.mxu0 %v3362
  %5246 = vmatprep.subr.mxu0 0.0
  %5247 = vmatpush1.msra.mxu0 %v3361
  %5248 = vmatprep.subr.mxu0 0.0
  %5249 = vmatpush2.msra.mxu0 0.0
  %5250 = vmatprep.subr.mxu0 0.0
  %5251 = vmatpush2.msra.mxu0 0.0
  %5252 = vmatprep.subr.mxu0 0.0
  %5253 = vmatpush2.msra.mxu0 0.0
  %5254 = vmatprep.subr.mxu0 0.0
  %5255 = vmatpush2.msra.mxu0 0.0
  %5256 = vmatprep.subr.mxu0 0.0
  %5257 = vmatpush2.msra.mxu0 0.0
  %5258 = vmatprep.subr.mxu0 0.0
  %5259 = vmatpush2.msra.mxu0 0.0
  %5260 = vmatprep.subr.mxu0 0.0
  %5261 = vmatpush2.msra.mxu0 0.0
  %5262 = vmatprep.subr.mxu0 0.0
  %5263 = vmatpush2.msra.mxu0 0.0
  %5264 = vmatprep.subr.mxu0 0.0
  %5265 = vmatpush2.msra.mxu0 0.0
  %5266 = vmatprep.subr.mxu0 0.0
  %5267 = vmatpush2.msra.mxu0 0.0
  %5268 = vmatprep.subr.mxu0 0.0
  %5269 = vmatpush2.msra.mxu0 0.0
  %5270 = vmatprep.subr.mxu0 0.0
  %5271 = vmatpush2.msra.mxu0 0.0
  %5272 = vmatprep.subr.mxu0 0.0
  %5273 = vmatpush2.msra.mxu0 0.0
  %5274 = vmatprep.subr.mxu0 0.0
  %5275 = vmatpush2.msra.mxu0 0.0
  %5276 = vmatprep.subr.mxu0 0.0
  %5277 = vmatpush2.msra.mxu0 0.0
  %5278 = vmatprep.subr.mxu0 0.0
  %5279 = vmatpush2.msra.mxu0 0.0
  %5280 = vmatprep.mubr.f32.mxu0 0.0
  %5281 = vmatmul.mubr.f32.gmra.mxu0 %v5208
  %v5282 = vpop.f32.mrf.mxu0
  %v5283 = vadd.f32 0.0, %v5282
  %v5284 = vpop.f32.mrf.mxu0
  %5285 = vmatprep.mubr.f32.mxu0 0.0
  %5286 = vmatmul.mubr.f32.gmra.mxu0 %v5210
  %v5287 = vpop.f32.mrf.mxu0
  %v5288 = vadd.f32 0.0, %v5287
  %v5289 = vpop.f32.mrf.mxu0
  %5290 = vmatprep.mubr.f32.mxu0 0.0
  %5291 = vmatmul.mubr.f32.gmra.mxu0 %v5212
  %v5292 = vpop.f32.mrf.mxu0
  %v5293 = vadd.f32 0.0, %v5292
  %v5294 = vpop.f32.mrf.mxu0
  %5295 = vmatprep.mubr.f32.mxu0 0.0
  %5296 = vmatmul.mubr.f32.gmra.mxu0 %v5214
  %v5297 = vpop.f32.mrf.mxu0
  %v5298 = vadd.f32 0.0, %v5297
  %v5299 = vpop.f32.mrf.mxu0
  %5300 = vdwg.mxu0
  %v5302 = vsel %vm427, %v3351, 0
  %v5305 = vsel %vm427, %v3352, 0
  %v5308 = vsel %vm427, %v3353, 0
  %v5311 = vsel %vm427, %v3354, 0
  %5313 = vmatprep.subr.mxu0 0.0
  %5314 = vmatpush1.msra.mxu0 0.0
  %5315 = vmatprep.subr.mxu0 0.0
  %5316 = vmatpush1.msra.mxu0 0.0
  %5317 = vmatprep.subr.mxu0 0.0
  %5318 = vmatpush1.msra.mxu0 0.0
  %5319 = vmatprep.subr.mxu0 0.0
  %5320 = vmatpush1.msra.mxu0 0.0
  %5321 = vmatprep.subr.mxu0 0.0
  %5322 = vmatpush1.msra.mxu0 0.0
  %5323 = vmatprep.subr.mxu0 0.0
  %5324 = vmatpush1.msra.mxu0 0.0
  %5325 = vmatprep.subr.mxu0 0.0
  %5326 = vmatpush1.msra.mxu0 0.0
  %5327 = vmatprep.subr.mxu0 0.0
  %5328 = vmatpush1.msra.mxu0 0.0
  %5329 = vmatprep.subr.mxu0 0.0
  %5330 = vmatpush1.msra.mxu0 0.0
  %5331 = vmatprep.subr.mxu0 0.0
  %5332 = vmatpush1.msra.mxu0 0.0
  %5333 = vmatprep.subr.mxu0 0.0
  %5334 = vmatpush1.msra.mxu0 0.0
  %5335 = vmatprep.subr.mxu0 0.0
  %5336 = vmatpush1.msra.mxu0 0.0
  %5337 = vmatprep.subr.mxu0 0.0
  %5338 = vmatpush1.msra.mxu0 0.0
  %5339 = vmatprep.subr.mxu0 0.0
  %5340 = vmatpush1.msra.mxu0 0.0
  %5341 = vmatprep.subr.mxu0 0.0
  %5342 = vmatpush1.msra.mxu0 %v3360
  %5343 = vmatprep.subr.mxu0 0.0
  %5344 = vmatpush1.msra.mxu0 %v3359
  %5345 = vmatprep.subr.mxu0 0.0
  %5346 = vmatpush2.msra.mxu0 0.0
  %5347 = vmatprep.subr.mxu0 0.0
  %5348 = vmatpush2.msra.mxu0 0.0
  %5349 = vmatprep.subr.mxu0 0.0
  %5350 = vmatpush2.msra.mxu0 0.0
  %5351 = vmatprep.subr.mxu0 0.0
  %5352 = vmatpush2.msra.mxu0 0.0
  %5353 = vmatprep.subr.mxu0 0.0
  %5354 = vmatpush2.msra.mxu0 0.0
  %5355 = vmatprep.subr.mxu0 0.0
  %5356 = vmatpush2.msra.mxu0 0.0
  %5357 = vmatprep.subr.mxu0 0.0
  %5358 = vmatpush2.msra.mxu0 0.0
  %5359 = vmatprep.subr.mxu0 0.0
  %5360 = vmatpush2.msra.mxu0 0.0
  %5361 = vmatprep.subr.mxu0 0.0
  %5362 = vmatpush2.msra.mxu0 0.0
  %5363 = vmatprep.subr.mxu0 0.0
  %5364 = vmatpush2.msra.mxu0 0.0
  %5365 = vmatprep.subr.mxu0 0.0
  %5366 = vmatpush2.msra.mxu0 0.0
  %5367 = vmatprep.subr.mxu0 0.0
  %5368 = vmatpush2.msra.mxu0 0.0
  %5369 = vmatprep.subr.mxu0 0.0
  %5370 = vmatpush2.msra.mxu0 0.0
  %5371 = vmatprep.subr.mxu0 0.0
  %5372 = vmatpush2.msra.mxu0 0.0
  %5373 = vmatprep.subr.mxu0 0.0
  %5374 = vmatpush2.msra.mxu0 0.0
  %5375 = vmatprep.subr.mxu0 0.0
  %5376 = vmatpush2.msra.mxu0 0.0
  %5377 = vmatprep.mubr.f32.mxu0 0.0
  %5378 = vmatmul.mubr.f32.gmra.mxu0 %v5302
  %v5379 = vpop.f32.mrf.mxu0
  %v5380 = vadd.f32 %v5283, %v5379
  %v5381 = vpop.f32.mrf.mxu0
  %5382 = vmatprep.mubr.f32.mxu0 0.0
  %5383 = vmatmul.mubr.f32.gmra.mxu0 %v5305
  %v5384 = vpop.f32.mrf.mxu0
  %v5385 = vadd.f32 %v5288, %v5384
  %v5386 = vpop.f32.mrf.mxu0
  %5387 = vmatprep.mubr.f32.mxu0 0.0
  %5388 = vmatmul.mubr.f32.gmra.mxu0 %v5308
  %v5389 = vpop.f32.mrf.mxu0
  %v5390 = vadd.f32 %v5293, %v5389
  %v5391 = vpop.f32.mrf.mxu0
  %5392 = vmatprep.mubr.f32.mxu0 0.0
  %5393 = vmatmul.mubr.f32.gmra.mxu0 %v5311
  %v5394 = vpop.f32.mrf.mxu0
  %v5395 = vadd.f32 %v5298, %v5394
  %v5396 = vpop.f32.mrf.mxu0
  %5397 = vdwg.mxu0
  %v5398 = vadd.f32 %v5380, %v3555
  %v5399 = vadd.f32 %v5385, %v3555
  %v5400 = vadd.f32 %v5390, %v3555
  %v5401 = vadd.f32 %v5395, %v3555
  %v5402 = vtanh.pop %v5398
  %v5403 = vtanh.pop %v5399
  %v5404 = vtanh.pop %v5400
  %v5405 = vtanh.pop %v5401
  %v5406 = vxor.u32 %v5398, 2147483648
  %v5407 = vxor.u32 %v5399, 2147483648
  %v5408 = vxor.u32 %v5400, 2147483648
  %v5409 = vxor.u32 %v5401, 2147483648
  %v5410 = vmul.f32 %v5406, 1.442695
  %v5411 = vpow.pop %v5410
  %v5412 = vmul.f32 %v5407, 1.442695
  %v5413 = vpow.pop %v5412
  %v5414 = vmul.f32 %v5408, 1.442695
  %v5415 = vpow.pop %v5414
  %v5416 = vmul.f32 %v5409, 1.442695
  %v5417 = vpow.pop %v5416
  %v5418 = vadd.f32 %v5411, 1.0
  %v5419 = vadd.f32 %v5413, 1.0
  %v5420 = vadd.f32 %v5415, 1.0
  %v5421 = vadd.f32 %v5417, 1.0
  %v5422 = vrcp.pop %v5418
  %v5423 = vmul.f32 1.0, %v5422
  %v5424 = vrcp.pop %v5419
  %v5425 = vmul.f32 1.0, %v5424
  %v5426 = vrcp.pop %v5420
  %v5427 = vmul.f32 1.0, %v5426
  %v5428 = vrcp.pop %v5421
  %v5429 = vmul.f32 1.0, %v5428
  %v5430 = vsel %vm3565, %v5402, %v5423
  %v5431 = vsel %vm3565, %v5403, %v5425
  %v5432 = vsel %vm3565, %v5404, %v5427
  %v5433 = vsel %vm3565, %v5405, %v5429
  %v5434 = vmul.f32 %v5430, %v5168
  %v5435 = vmul.f32 %v5431, %v5169
  %v5436 = vmul.f32 %v5432, %v5170
  %v5437 = vmul.f32 %v5433, %v5171
  %5442 = vrot.lane.b32.xlu0 %v5430, 64
  %v5443 = vpop.permute.xlu0 %5442
  %5444 = vrot.lane.b32.xlu0 %v5431, 64
  %v5445 = vpop.permute.xlu0 %5444
  %5446 = vrot.lane.b32.xlu0 %v5432, 64
  %v5447 = vpop.permute.xlu0 %5446
  %5448 = vrot.lane.b32.xlu0 %v5433, 64
  %v5449 = vpop.permute.xlu0 %5448
  %v5454 = vmul.f32 %v5430, %v5443
  %v5455 = vmul.f32 %v5431, %v5445
  %v5456 = vmul.f32 %v5432, %v5447
  %v5457 = vmul.f32 %v5433, %v5449
  %5462 = vrot.lane.b32.xlu0 %v5454, 32
  %v5463 = vpop.permute.xlu0 %5462
  %5464 = vrot.lane.b32.xlu0 %v5455, 32
  %v5465 = vpop.permute.xlu0 %5464
  %5466 = vrot.lane.b32.xlu0 %v5456, 32
  %v5467 = vpop.permute.xlu0 %5466
  %5468 = vrot.lane.b32.xlu0 %v5457, 32
  %v5469 = vpop.permute.xlu0 %5468
  %v5474 = vadd.f32 %v5434, %v5463
  %v5475 = vadd.f32 %v5435, %v5465
  %v5476 = vadd.f32 %v5436, %v5467
  %v5477 = vadd.f32 %v5437, %v5469
  %v5478 = vtanh.pop %v5474
  %v5479 = vtanh.pop %v5475
  %v5480 = vtanh.pop %v5476
  %v5481 = vtanh.pop %v5477
  %5486 = vrot.lane.b32.xlu0 %v5478, 64
  %v5487 = vpop.permute.xlu0 %5486
  %5488 = vrot.lane.b32.xlu0 %v5479, 64
  %v5489 = vpop.permute.xlu0 %5488
  %5490 = vrot.lane.b32.xlu0 %v5480, 64
  %v5491 = vpop.permute.xlu0 %5490
  %5492 = vrot.lane.b32.xlu0 %v5481, 64
  %v5493 = vpop.permute.xlu0 %5492
  %v5498 = vmul.f32 %v5430, %v5487
  %v5499 = vmul.f32 %v5431, %v5489
  %v5500 = vmul.f32 %v5432, %v5491
  %v5501 = vmul.f32 %v5433, %v5493
  %5506 = vrot.lane.b32.xlu0 %v5498, 32
  %v5507 = vpop.permute.xlu0 %5506
  %5508 = vrot.lane.b32.xlu0 %v5499, 32
  %v5509 = vpop.permute.xlu0 %5508
  %5510 = vrot.lane.b32.xlu0 %v5500, 32
  %v5511 = vpop.permute.xlu0 %5510
  %5512 = vrot.lane.b32.xlu0 %v5501, 32
  %v5513 = vpop.permute.xlu0 %5512
  %v5514 = vsel %vm1799, %v5507, 0
  %v5516 = vsel %vm1799, %v5509, 0
  %v5518 = vsel %vm1799, %v5511, 0
  %v5520 = vsel %vm1799, %v5513, 0
  %5522 = vmatprep.subr.mxu0 0.0
  %5523 = vmatpush1.msra.mxu0 0.0
  %5524 = vmatprep.subr.mxu0 0.0
  %5525 = vmatpush1.msra.mxu0 0.0
  %5526 = vmatprep.subr.mxu0 0.0
  %5527 = vmatpush1.msra.mxu0 0.0
  %5528 = vmatprep.subr.mxu0 0.0
  %5529 = vmatpush1.msra.mxu0 0.0
  %5530 = vmatprep.subr.mxu0 0.0
  %5531 = vmatpush1.msra.mxu0 0.0
  %5532 = vmatprep.subr.mxu0 0.0
  %5533 = vmatpush1.msra.mxu0 0.0
  %5534 = vmatprep.subr.mxu0 0.0
  %5535 = vmatpush1.msra.mxu0 0.0
  %5536 = vmatprep.subr.mxu0 0.0
  %5537 = vmatpush1.msra.mxu0 0.0
  %5538 = vmatprep.subr.mxu0 0.0
  %5539 = vmatpush1.msra.mxu0 0.0
  %5540 = vmatprep.subr.mxu0 0.0
  %5541 = vmatpush1.msra.mxu0 0.0
  %5542 = vmatprep.subr.mxu0 0.0
  %5543 = vmatpush1.msra.mxu0 0.0
  %5544 = vmatprep.subr.mxu0 0.0
  %5545 = vmatpush1.msra.mxu0 0.0
  %5546 = vmatprep.subr.mxu0 0.0
  %5547 = vmatpush1.msra.mxu0 %v3364
  %5548 = vmatprep.subr.mxu0 0.0
  %5549 = vmatpush1.msra.mxu0 %v3363
  %5550 = vmatprep.subr.mxu0 0.0
  %5551 = vmatpush1.msra.mxu0 %v3362
  %5552 = vmatprep.subr.mxu0 0.0
  %5553 = vmatpush1.msra.mxu0 %v3361
  %5554 = vmatprep.subr.mxu0 0.0
  %5555 = vmatpush2.msra.mxu0 0.0
  %5556 = vmatprep.subr.mxu0 0.0
  %5557 = vmatpush2.msra.mxu0 0.0
  %5558 = vmatprep.subr.mxu0 0.0
  %5559 = vmatpush2.msra.mxu0 0.0
  %5560 = vmatprep.subr.mxu0 0.0
  %5561 = vmatpush2.msra.mxu0 0.0
  %5562 = vmatprep.subr.mxu0 0.0
  %5563 = vmatpush2.msra.mxu0 0.0
  %5564 = vmatprep.subr.mxu0 0.0
  %5565 = vmatpush2.msra.mxu0 0.0
  %5566 = vmatprep.subr.mxu0 0.0
  %5567 = vmatpush2.msra.mxu0 0.0
  %5568 = vmatprep.subr.mxu0 0.0
  %5569 = vmatpush2.msra.mxu0 0.0
  %5570 = vmatprep.subr.mxu0 0.0
  %5571 = vmatpush2.msra.mxu0 0.0
  %5572 = vmatprep.subr.mxu0 0.0
  %5573 = vmatpush2.msra.mxu0 0.0
  %5574 = vmatprep.subr.mxu0 0.0
  %5575 = vmatpush2.msra.mxu0 0.0
  %5576 = vmatprep.subr.mxu0 0.0
  %5577 = vmatpush2.msra.mxu0 0.0
  %5578 = vmatprep.subr.mxu0 0.0
  %5579 = vmatpush2.msra.mxu0 0.0
  %5580 = vmatprep.subr.mxu0 0.0
  %5581 = vmatpush2.msra.mxu0 0.0
  %5582 = vmatprep.subr.mxu0 0.0
  %5583 = vmatpush2.msra.mxu0 0.0
  %5584 = vmatprep.subr.mxu0 0.0
  %5585 = vmatpush2.msra.mxu0 0.0
  %5586 = vmatprep.mubr.f32.mxu0 0.0
  %5587 = vmatmul.mubr.f32.gmra.mxu0 %v5514
  %v5588 = vpop.f32.mrf.mxu0
  %v5589 = vadd.f32 0.0, %v5588
  %v5590 = vpop.f32.mrf.mxu0
  %5591 = vmatprep.mubr.f32.mxu0 0.0
  %5592 = vmatmul.mubr.f32.gmra.mxu0 %v5516
  %v5593 = vpop.f32.mrf.mxu0
  %v5594 = vadd.f32 0.0, %v5593
  %v5595 = vpop.f32.mrf.mxu0
  %5596 = vmatprep.mubr.f32.mxu0 0.0
  %5597 = vmatmul.mubr.f32.gmra.mxu0 %v5518
  %v5598 = vpop.f32.mrf.mxu0
  %v5599 = vadd.f32 0.0, %v5598
  %v5600 = vpop.f32.mrf.mxu0
  %5601 = vmatprep.mubr.f32.mxu0 0.0
  %5602 = vmatmul.mubr.f32.gmra.mxu0 %v5520
  %v5603 = vpop.f32.mrf.mxu0
  %v5604 = vadd.f32 0.0, %v5603
  %v5605 = vpop.f32.mrf.mxu0
  %5606 = vdwg.mxu0
  %v5608 = vsel %vm427, %v3355, 0
  %v5611 = vsel %vm427, %v3356, 0
  %v5614 = vsel %vm427, %v3357, 0
  %v5617 = vsel %vm427, %v3358, 0
  %5619 = vmatprep.subr.mxu0 0.0
  %5620 = vmatpush1.msra.mxu0 0.0
  %5621 = vmatprep.subr.mxu0 0.0
  %5622 = vmatpush1.msra.mxu0 0.0
  %5623 = vmatprep.subr.mxu0 0.0
  %5624 = vmatpush1.msra.mxu0 0.0
  %5625 = vmatprep.subr.mxu0 0.0
  %5626 = vmatpush1.msra.mxu0 0.0
  %5627 = vmatprep.subr.mxu0 0.0
  %5628 = vmatpush1.msra.mxu0 0.0
  %5629 = vmatprep.subr.mxu0 0.0
  %5630 = vmatpush1.msra.mxu0 0.0
  %5631 = vmatprep.subr.mxu0 0.0
  %5632 = vmatpush1.msra.mxu0 0.0
  %5633 = vmatprep.subr.mxu0 0.0
  %5634 = vmatpush1.msra.mxu0 0.0
  %5635 = vmatprep.subr.mxu0 0.0
  %5636 = vmatpush1.msra.mxu0 0.0
  %5637 = vmatprep.subr.mxu0 0.0
  %5638 = vmatpush1.msra.mxu0 0.0
  %5639 = vmatprep.subr.mxu0 0.0
  %5640 = vmatpush1.msra.mxu0 0.0
  %5641 = vmatprep.subr.mxu0 0.0
  %5642 = vmatpush1.msra.mxu0 0.0
  %5643 = vmatprep.subr.mxu0 0.0
  %5644 = vmatpush1.msra.mxu0 0.0
  %5645 = vmatprep.subr.mxu0 0.0
  %5646 = vmatpush1.msra.mxu0 0.0
  %5647 = vmatprep.subr.mxu0 0.0
  %5648 = vmatpush1.msra.mxu0 %v3360
  %5649 = vmatprep.subr.mxu0 0.0
  %5650 = vmatpush1.msra.mxu0 %v3359
  %5651 = vmatprep.subr.mxu0 0.0
  %5652 = vmatpush2.msra.mxu0 0.0
  %5653 = vmatprep.subr.mxu0 0.0
  %5654 = vmatpush2.msra.mxu0 0.0
  %5655 = vmatprep.subr.mxu0 0.0
  %5656 = vmatpush2.msra.mxu0 0.0
  %5657 = vmatprep.subr.mxu0 0.0
  %5658 = vmatpush2.msra.mxu0 0.0
  %5659 = vmatprep.subr.mxu0 0.0
  %5660 = vmatpush2.msra.mxu0 0.0
  %5661 = vmatprep.subr.mxu0 0.0
  %5662 = vmatpush2.msra.mxu0 0.0
  %5663 = vmatprep.subr.mxu0 0.0
  %5664 = vmatpush2.msra.mxu0 0.0
  %5665 = vmatprep.subr.mxu0 0.0
  %5666 = vmatpush2.msra.mxu0 0.0
  %5667 = vmatprep.subr.mxu0 0.0
  %5668 = vmatpush2.msra.mxu0 0.0
  %5669 = vmatprep.subr.mxu0 0.0
  %5670 = vmatpush2.msra.mxu0 0.0
  %5671 = vmatprep.subr.mxu0 0.0
  %5672 = vmatpush2.msra.mxu0 0.0
  %5673 = vmatprep.subr.mxu0 0.0
  %5674 = vmatpush2.msra.mxu0 0.0
  %5675 = vmatprep.subr.mxu0 0.0
  %5676 = vmatpush2.msra.mxu0 0.0
  %5677 = vmatprep.subr.mxu0 0.0
  %5678 = vmatpush2.msra.mxu0 0.0
  %5679 = vmatprep.subr.mxu0 0.0
  %5680 = vmatpush2.msra.mxu0 0.0
  %5681 = vmatprep.subr.mxu0 0.0
  %5682 = vmatpush2.msra.mxu0 0.0
  %5683 = vmatprep.mubr.f32.mxu0 0.0
  %5684 = vmatmul.mubr.f32.gmra.mxu0 %v5608
  %v5685 = vpop.f32.mrf.mxu0
  %v5686 = vadd.f32 %v5589, %v5685
  %v5687 = vpop.f32.mrf.mxu0
  %5688 = vmatprep.mubr.f32.mxu0 0.0
  %5689 = vmatmul.mubr.f32.gmra.mxu0 %v5611
  %v5690 = vpop.f32.mrf.mxu0
  %v5691 = vadd.f32 %v5594, %v5690
  %v5692 = vpop.f32.mrf.mxu0
  %5693 = vmatprep.mubr.f32.mxu0 0.0
  %5694 = vmatmul.mubr.f32.gmra.mxu0 %v5614
  %v5695 = vpop.f32.mrf.mxu0
  %v5696 = vadd.f32 %v5599, %v5695
  %v5697 = vpop.f32.mrf.mxu0
  %5698 = vmatprep.mubr.f32.mxu0 0.0
  %5699 = vmatmul.mubr.f32.gmra.mxu0 %v5617
  %v5700 = vpop.f32.mrf.mxu0
  %v5701 = vadd.f32 %v5604, %v5700
  %v5702 = vpop.f32.mrf.mxu0
  %5703 = vdwg.mxu0
  %v5704 = vadd.f32 %v5686, %v3555
  %v5705 = vadd.f32 %v5691, %v3555
  %v5706 = vadd.f32 %v5696, %v3555
  %v5707 = vadd.f32 %v5701, %v3555
  %v5708 = vtanh.pop %v5704
  %v5709 = vtanh.pop %v5705
  %v5710 = vtanh.pop %v5706
  %v5711 = vtanh.pop %v5707
  %v5712 = vxor.u32 %v5704, 2147483648
  %v5713 = vxor.u32 %v5705, 2147483648
  %v5714 = vxor.u32 %v5706, 2147483648
  %v5715 = vxor.u32 %v5707, 2147483648
  %v5716 = vmul.f32 %v5712, 1.442695
  %v5717 = vpow.pop %v5716
  %v5718 = vmul.f32 %v5713, 1.442695
  %v5719 = vpow.pop %v5718
  %v5720 = vmul.f32 %v5714, 1.442695
  %v5721 = vpow.pop %v5720
  %v5722 = vmul.f32 %v5715, 1.442695
  %v5723 = vpow.pop %v5722
  %v5724 = vadd.f32 %v5717, 1.0
  %v5725 = vadd.f32 %v5719, 1.0
  %v5726 = vadd.f32 %v5721, 1.0
  %v5727 = vadd.f32 %v5723, 1.0
  %v5728 = vrcp.pop %v5724
  %v5729 = vmul.f32 1.0, %v5728
  %v5730 = vrcp.pop %v5725
  %v5731 = vmul.f32 1.0, %v5730
  %v5732 = vrcp.pop %v5726
  %v5733 = vmul.f32 1.0, %v5732
  %v5734 = vrcp.pop %v5727
  %v5735 = vmul.f32 1.0, %v5734
  %v5736 = vsel %vm3565, %v5708, %v5729
  %v5737 = vsel %vm3565, %v5709, %v5731
  %v5738 = vsel %vm3565, %v5710, %v5733
  %v5739 = vsel %vm3565, %v5711, %v5735
  %v5740 = vmul.f32 %v5736, %v5474
  %v5741 = vmul.f32 %v5737, %v5475
  %v5742 = vmul.f32 %v5738, %v5476
  %v5743 = vmul.f32 %v5739, %v5477
  %5748 = vrot.lane.b32.xlu0 %v5736, 64
  %v5749 = vpop.permute.xlu0 %5748
  %5750 = vrot.lane.b32.xlu0 %v5737, 64
  %v5751 = vpop.permute.xlu0 %5750
  %5752 = vrot.lane.b32.xlu0 %v5738, 64
  %v5753 = vpop.permute.xlu0 %5752
  %5754 = vrot.lane.b32.xlu0 %v5739, 64
  %v5755 = vpop.permute.xlu0 %5754
  %v5760 = vmul.f32 %v5736, %v5749
  %v5761 = vmul.f32 %v5737, %v5751
  %v5762 = vmul.f32 %v5738, %v5753
  %v5763 = vmul.f32 %v5739, %v5755
  %5768 = vrot.lane.b32.xlu0 %v5760, 32
  %v5769 = vpop.permute.xlu0 %5768
  %5770 = vrot.lane.b32.xlu0 %v5761, 32
  %v5771 = vpop.permute.xlu0 %5770
  %5772 = vrot.lane.b32.xlu0 %v5762, 32
  %v5773 = vpop.permute.xlu0 %5772
  %5774 = vrot.lane.b32.xlu0 %v5763, 32
  %v5775 = vpop.permute.xlu0 %5774
  %v5780 = vadd.f32 %v5740, %v5769
  %v5781 = vadd.f32 %v5741, %v5771
  %v5782 = vadd.f32 %v5742, %v5773
  %v5783 = vadd.f32 %v5743, %v5775
  %v5784 = vtanh.pop %v5780
  %v5785 = vtanh.pop %v5781
  %v5786 = vtanh.pop %v5782
  %v5787 = vtanh.pop %v5783
  %5792 = vrot.lane.b32.xlu0 %v5784, 64
  %v5793 = vpop.permute.xlu0 %5792
  %5794 = vrot.lane.b32.xlu0 %v5785, 64
  %v5795 = vpop.permute.xlu0 %5794
  %5796 = vrot.lane.b32.xlu0 %v5786, 64
  %v5797 = vpop.permute.xlu0 %5796
  %5798 = vrot.lane.b32.xlu0 %v5787, 64
  %v5799 = vpop.permute.xlu0 %5798
  %v5804 = vmul.f32 %v5736, %v5793
  %v5805 = vmul.f32 %v5737, %v5795
  %v5806 = vmul.f32 %v5738, %v5797
  %v5807 = vmul.f32 %v5739, %v5799
  %v5808 = vld [vmem:[%s8] sm:$0xff]
  %v5809 = vld [vmem:[%s8 + $0x8] sm:$0xff]
  %v5810 = vld [vmem:[%s8 + $0x10] sm:$0xff]
  %v5811 = vld [vmem:[%s8 + $0x18] sm:$0xff]
  %v5812 = vld [vmem:[%s8 + $0x20] sm:$0xff]
  %v5813 = vld [vmem:[%s8 + $0x28] sm:$0xff]
  %v5814 = vld [vmem:[%s8 + $0x30] sm:$0xff]
  %v5815 = vld [vmem:[%s8 + $0x38] sm:$0xff]
  %5818 = vrot.lane.b32.xlu0 %v5806, 32
  %v5819 = vpop.permute.xlu0 %5818
  %5820 = vrot.lane.b32.xlu0 %v5807, 32
  %v5821 = vpop.permute.xlu0 %5820
  %v5822 = vsel %vm1799, %v5819, 0
  %v5824 = vsel %vm1799, %v5821, 0
  %5826 = vmatprep.subr.mxu0 0.0
  %5827 = vmatpush1.msra.mxu0 0.0
  %5828 = vmatprep.subr.mxu0 0.0
  %5829 = vmatpush1.msra.mxu0 0.0
  %5830 = vmatprep.subr.mxu0 0.0
  %5831 = vmatpush1.msra.mxu0 0.0
  %5832 = vmatprep.subr.mxu0 0.0
  %5833 = vmatpush1.msra.mxu0 0.0
  %5834 = vmatprep.subr.mxu0 0.0
  %5835 = vmatpush1.msra.mxu0 0.0
  %5836 = vmatprep.subr.mxu0 0.0
  %5837 = vmatpush1.msra.mxu0 0.0
  %5838 = vmatprep.subr.mxu0 0.0
  %5839 = vmatpush1.msra.mxu0 0.0
  %5840 = vmatprep.subr.mxu0 0.0
  %5841 = vmatpush1.msra.mxu0 0.0
  %5842 = vmatprep.subr.mxu0 0.0
  %5843 = vmatpush1.msra.mxu0 0.0
  %5844 = vmatprep.subr.mxu0 0.0
  %5845 = vmatpush1.msra.mxu0 0.0
  %5846 = vmatprep.subr.mxu0 0.0
  %5847 = vmatpush1.msra.mxu0 0.0
  %5848 = vmatprep.subr.mxu0 0.0
  %5849 = vmatpush1.msra.mxu0 0.0
  %5850 = vmatprep.subr.mxu0 0.0
  %5851 = vmatpush1.msra.mxu0 %v5815
  %5852 = vmatprep.subr.mxu0 0.0
  %5853 = vmatpush1.msra.mxu0 %v5814
  %5854 = vmatprep.subr.mxu0 0.0
  %5855 = vmatpush1.msra.mxu0 %v5813
  %5856 = vmatprep.subr.mxu0 0.0
  %5857 = vmatpush1.msra.mxu0 %v5812
  %5858 = vmatprep.subr.mxu0 0.0
  %5859 = vmatpush2.msra.mxu0 0.0
  %5860 = vmatprep.subr.mxu0 0.0
  %5861 = vmatpush2.msra.mxu0 0.0
  %5862 = vmatprep.subr.mxu0 0.0
  %5863 = vmatpush2.msra.mxu0 0.0
  %5864 = vmatprep.subr.mxu0 0.0
  %5865 = vmatpush2.msra.mxu0 0.0
  %5866 = vmatprep.subr.mxu0 0.0
  %5867 = vmatpush2.msra.mxu0 0.0
  %5868 = vmatprep.subr.mxu0 0.0
  %5869 = vmatpush2.msra.mxu0 0.0
  %5870 = vmatprep.subr.mxu0 0.0
  %5871 = vmatpush2.msra.mxu0 0.0
  %5872 = vmatprep.subr.mxu0 0.0
  %5873 = vmatpush2.msra.mxu0 0.0
  %5874 = vmatprep.subr.mxu0 0.0
  %5875 = vmatpush2.msra.mxu0 0.0
  %5876 = vmatprep.subr.mxu0 0.0
  %5877 = vmatpush2.msra.mxu0 0.0
  %5878 = vmatprep.subr.mxu0 0.0
  %5879 = vmatpush2.msra.mxu0 0.0
  %5880 = vmatprep.subr.mxu0 0.0
  %5881 = vmatpush2.msra.mxu0 0.0
  %5882 = vmatprep.subr.mxu0 0.0
  %5883 = vmatpush2.msra.mxu0 0.0
  %5884 = vmatprep.subr.mxu0 0.0
  %5885 = vmatpush2.msra.mxu0 0.0
  %5886 = vmatprep.subr.mxu0 0.0
  %5887 = vmatpush2.msra.mxu0 0.0
  %5888 = vmatprep.subr.mxu0 0.0
  %5889 = vmatpush2.msra.mxu0 0.0
  %5890 = vmatprep.mubr.f32.mxu0 0.0
  %5891 = vmatmul.mubr.f32.gmra.mxu0 %v5822
  %v5892 = vpop.f32.mrf.mxu0
  %v5893 = vadd.f32 0.0, %v5892
  %v5894 = vpop.f32.mrf.mxu0
  %5895 = vmatprep.mubr.f32.mxu0 0.0
  %5896 = vmatmul.mubr.f32.gmra.mxu0 %v5824
  %v5897 = vpop.f32.mrf.mxu0
  %v5898 = vadd.f32 0.0, %v5897
  %v5899 = vpop.f32.mrf.mxu0
  %5900 = vdwg.mxu0
  %5903 = vrot.lane.b32.xlu0 %v5804, 32
  %v5904 = vpop.permute.xlu0 %5903
  %5905 = vrot.lane.b32.xlu0 %v5805, 32
  %v5906 = vpop.permute.xlu0 %5905
  %v5907 = vsel %vm1799, %v5904, 0
  %v5909 = vsel %vm1799, %v5906, 0
  %5911 = vmatprep.subr.mxu0 0.0
  %5912 = vmatpush1.msra.mxu0 0.0
  %5913 = vmatprep.subr.mxu0 0.0
  %5914 = vmatpush1.msra.mxu0 0.0
  %5915 = vmatprep.subr.mxu0 0.0
  %5916 = vmatpush1.msra.mxu0 0.0
  %5917 = vmatprep.subr.mxu0 0.0
  %5918 = vmatpush1.msra.mxu0 0.0
  %5919 = vmatprep.subr.mxu0 0.0
  %5920 = vmatpush1.msra.mxu0 0.0
  %5921 = vmatprep.subr.mxu0 0.0
  %5922 = vmatpush1.msra.mxu0 0.0
  %5923 = vmatprep.subr.mxu0 0.0
  %5924 = vmatpush1.msra.mxu0 0.0
  %5925 = vmatprep.subr.mxu0 0.0
  %5926 = vmatpush1.msra.mxu0 0.0
  %5927 = vmatprep.subr.mxu0 0.0
  %5928 = vmatpush1.msra.mxu0 0.0
  %5929 = vmatprep.subr.mxu0 0.0
  %5930 = vmatpush1.msra.mxu0 0.0
  %5931 = vmatprep.subr.mxu0 0.0
  %5932 = vmatpush1.msra.mxu0 0.0
  %5933 = vmatprep.subr.mxu0 0.0
  %5934 = vmatpush1.msra.mxu0 0.0
  %5935 = vmatprep.subr.mxu0 0.0
  %5936 = vmatpush1.msra.mxu0 %v5811
  %5937 = vmatprep.subr.mxu0 0.0
  %5938 = vmatpush1.msra.mxu0 %v5810
  %5939 = vmatprep.subr.mxu0 0.0
  %5940 = vmatpush1.msra.mxu0 %v5809
  %5941 = vmatprep.subr.mxu0 0.0
  %5942 = vmatpush1.msra.mxu0 %v5808
  %5943 = vmatprep.subr.mxu0 0.0
  %5944 = vmatpush2.msra.mxu0 0.0
  %5945 = vmatprep.subr.mxu0 0.0
  %5946 = vmatpush2.msra.mxu0 0.0
  %5947 = vmatprep.subr.mxu0 0.0
  %5948 = vmatpush2.msra.mxu0 0.0
  %5949 = vmatprep.subr.mxu0 0.0
  %5950 = vmatpush2.msra.mxu0 0.0
  %5951 = vmatprep.subr.mxu0 0.0
  %5952 = vmatpush2.msra.mxu0 0.0
  %5953 = vmatprep.subr.mxu0 0.0
  %5954 = vmatpush2.msra.mxu0 0.0
  %5955 = vmatprep.subr.mxu0 0.0
  %5956 = vmatpush2.msra.mxu0 0.0
  %5957 = vmatprep.subr.mxu0 0.0
  %5958 = vmatpush2.msra.mxu0 0.0
  %5959 = vmatprep.subr.mxu0 0.0
  %5960 = vmatpush2.msra.mxu0 0.0
  %5961 = vmatprep.subr.mxu0 0.0
  %5962 = vmatpush2.msra.mxu0 0.0
  %5963 = vmatprep.subr.mxu0 0.0
  %5964 = vmatpush2.msra.mxu0 0.0
  %5965 = vmatprep.subr.mxu0 0.0
  %5966 = vmatpush2.msra.mxu0 0.0
  %5967 = vmatprep.subr.mxu0 0.0
  %5968 = vmatpush2.msra.mxu0 0.0
  %5969 = vmatprep.subr.mxu0 0.0
  %5970 = vmatpush2.msra.mxu0 0.0
  %5971 = vmatprep.subr.mxu0 0.0
  %5972 = vmatpush2.msra.mxu0 0.0
  %5973 = vmatprep.subr.mxu0 0.0
  %5974 = vmatpush2.msra.mxu0 0.0
  %5975 = vmatprep.mubr.f32.mxu0 0.0
  %5976 = vmatmul.mubr.f32.gmra.mxu0 %v5907
  %v5977 = vpop.f32.mrf.mxu0
  %v5978 = vadd.f32 %v5893, %v5977
  %v5979 = vpop.f32.mrf.mxu0
  %5980 = vmatprep.mubr.f32.mxu0 0.0
  %5981 = vmatmul.mubr.f32.gmra.mxu0 %v5909
  %v5982 = vpop.f32.mrf.mxu0
  %v5983 = vadd.f32 %v5898, %v5982
  %v5984 = vpop.f32.mrf.mxu0
  %5985 = vdwg.mxu0
  %v5986 = vld [vmem:[%s9] sm:$0x1]
  %v5988 = vlaneseq
  %v5989 = vshrl.u32 %v5988, 7
  %v5990 = vsub.s32 0, %v5989
  %v5991 = vrot.slane %v5986, %v5990
  %v5993 = vadd.f32 %v5978, %v5991
  %v5994 = vadd.f32 %v5983, %v5991
  %vm5995 = vcmask 64512
  %5996 = vst.msk [vmem:[%s10] sm:$0xff] %vm5995, %v5993
  %5997 = vst.msk [vmem:[%s10 + $0x8] sm:$0xff] %vm5995, %v5994
  // Predicated region
  $region42: #{lstm_baseline_forward.1} parent=0 // pred_check
    _
  $region43: #{lstm_baseline_forward.1} parent=0 // pred_check_branch
    %5999 = sbr.rel (0) target = $region45
  $region44: #{lstm_baseline_forward.1} parent=0 // pred_region
    _
  $region45: #{lstm_baseline_forward.1} parent=0 // pred_fallthru
    _
  // Predicated region
  $region46: #{lstm_baseline_forward.1} parent=0 // pred_check
    _
  $region47: #{lstm_baseline_forward.1} parent=0 // pred_check_branch
    %6001 = sbr.rel (0) target = $region49
  $region48: #{lstm_baseline_forward.1} parent=0 // pred_region
    _
  $region49: #{lstm_baseline_forward.1} parent=0 // pred_fallthru
    _

</llo_original>
